<compile_context>
chip_gen: v5e
topology: v5e:2x2
jax: 0.10.0
libtpu: 0.0.40
codegen_flags: <defaults>
</compile_context>

<pallas_src>
import math
from functools import partial

import jax
import jax.numpy as jnp
from jax.experimental import pallas as pl
from jax.experimental.pallas import tpu as pltpu

# ---- model dims (MAEModel defaults: input_dim=7, d_model=64, n_heads=8, ff=256, layers=2) ----
INPUT_DIM = 7
D_MODEL = 64
N_HEADS = 8
HEAD_DIM = D_MODEL // N_HEADS
NUM_LAYERS = 2
DIM_FF = 256
LN_EPS = 1e-5
MAX_LEN = 64          # pos_embedding table length (module uses 5000; only [:S+1] is read)
DIN_PAD = 8           # input feature dim padded 7 -> 8 (contiguous 32 B DMA rows)
OUT_PAD = 8           # decoder output padded 7 -> 8 (small f32 HBM writeback)
VEC_W = 256           # packed bias/LN slab width (>= 3*D_MODEL and >= DIM_FF)
NEG_INF = -1e30
APPROX_RECIP = True   # approx softmax denominator on the EUP (~1e-4 rel err vs exact division)


def _layer_norm(x, gamma, beta):
    # E[x^2] - E[x]^2 form: the two cross-lane reductions are independent (can overlap)
    mu = jnp.mean(x, axis=-1, keepdims=True)
    ms = jnp.mean(x * x, axis=-1, keepdims=True)
    var = jnp.maximum(ms - mu * mu, 0.0)
    return (x - mu) * jax.lax.rsqrt(var + LN_EPS) * gamma + beta


def mae_kernel(x_ref, pos_ref, wp_ref, wqkv_ref, wo_ref, w1_ref, w2_ref,
               vec_ref, wd_ref, bd_ref, out_ref, *, cls_pos):
    TB, S1P, DIN = x_ref.shape
    R = TB * S1P
    BH = N_HEADS * TB

    x3 = x_ref[...]                                          # (TB, S1P, DIN_PAD) f32

    # key-padding bias (layer independent, computed once):
    #   all-zero token rows are masked, the CLS row (col == cls_pos) never is,
    #   all-zero sequence-padding rows are masked too.
    rowmax = jnp.max(jnp.abs(x3), axis=-1)                   # (TB, S1P)
    col = jax.lax.broadcasted_iota(jnp.int32, (TB, S1P), 1)
    key_bias = jnp.where((rowmax == 0.0) & (col != cls_pos), NEG_INF, 0.0)
    key_bias = jnp.broadcast_to(key_bias[None, :, None, :],
                                (N_HEADS, TB, 1, S1P)).reshape(BH, 1, S1P)

    # input projection + positional encoding (projection bias folded into pos by wrapper)
    x2 = x3.reshape(R, DIN).astype(jnp.bfloat16)
    h = jnp.dot(x2, wp_ref[...], preferred_element_type=jnp.float32)     # (R, D) f32
    h = (h.reshape(TB, S1P, D_MODEL) + pos_ref[...]).reshape(R, D_MODEL)
    hb = h.astype(jnp.bfloat16)                              # single bf16 shadow of h

    def to_heads(t2):   # (R, D) bf16 -> (N_HEADS*TB, S1P, HEAD_DIM), head-major batch dim
        parts = [t2[:, hh * HEAD_DIM:(hh + 1) * HEAD_DIM].reshape(TB, S1P, HEAD_DIM)
                 for hh in range(N_HEADS)]
        return jnp.stack(parts, axis=0).reshape(BH, S1P, HEAD_DIM)

    for l in range(NUM_LAYERS):
        vec = vec_ref[l]                                     # (8, VEC_W) f32 packed slab
        bq = vec[0:1, 0 * D_MODEL:1 * D_MODEL]               # pre-scaled by 1/sqrt(hd)
        bk = vec[0:1, 1 * D_MODEL:2 * D_MODEL]
        bv = vec[0:1, 2 * D_MODEL:3 * D_MODEL]
        bo = vec[1:2, :D_MODEL]
        g1 = vec[2:3, :D_MODEL]
        be1 = vec[3:4, :D_MODEL]
        b1 = vec[4:5, :DIM_FF]
        b2 = vec[5:6, :D_MODEL]
        g2 = vec[6:7, :D_MODEL]
        be2 = vec[7:8, :D_MODEL]

        # ---- multi-head self-attention (post-LN; dropout = identity in eval) ----
        q = jnp.dot(hb, wqkv_ref[3 * l + 0], preferred_element_type=jnp.float32) + bq
        k = jnp.dot(hb, wqkv_ref[3 * l + 1], preferred_element_type=jnp.float32) + bk
        v = jnp.dot(hb, wqkv_ref[3 * l + 2], preferred_element_type=jnp.float32) + bv

        qh = to_heads(q.astype(jnp.bfloat16))
        kh = to_heads(k.astype(jnp.bfloat16))
        vh = to_heads(v.astype(jnp.bfloat16))

        # batched over (head, batch): bf16 MXU matmuls with f32 accumulation
        s = jnp.einsum('bqd,bkd->bqk', qh, kh,
                       preferred_element_type=jnp.float32)   # (BH, S1P, S1P)
        s = s + key_bias
        s = s - jnp.max(s, axis=-1, keepdims=True)
        p = jnp.exp(s)
        denom = jnp.sum(p, axis=-1, keepdims=True)
        p = p * (pl.reciprocal(denom, approx=True) if APPROX_RECIP else 1.0 / denom)
        ctx = jnp.einsum('bqk,bkd->bqd', p.astype(jnp.bfloat16), vh,
                         preferred_element_type=jnp.float32)  # (BH, S1P, HEAD_DIM)

        ctx4 = ctx.reshape(N_HEADS, TB, S1P, HEAD_DIM)
        ctx2 = jnp.concatenate([ctx4[hh] for hh in range(N_HEADS)],
                               axis=-1).reshape(R, D_MODEL)

        attn = jnp.dot(ctx2.astype(jnp.bfloat16), wo_ref[l],
                       preferred_element_type=jnp.float32) + bo
        h = _layer_norm(h + attn, g1, be1)
        hb = h.astype(jnp.bfloat16)

        # ---- position-wise feed-forward (ReLU) ----
        ff = jnp.dot(hb, w1_ref[l], preferred_element_type=jnp.float32) + b1
        ff = jnp.maximum(ff, 0.0)
        ff = jnp.dot(ff.astype(jnp.bfloat16), w2_ref[l],
                     preferred_element_type=jnp.float32) + b2
        h = _layer_norm(h + ff, g2, be2)
        hb = h.astype(jnp.bfloat16)

    # decoder over every row (CLS / seq-padding rows are sliced off in the wrapper)
    rec = jnp.dot(hb, wd_ref[...], preferred_element_type=jnp.float32) + bd_ref[...]
    out_ref[...] = rec.reshape(TB, S1P, OUT_PAD)


def init_params(key):
    ks = jax.random.split(key, 16)

    def n(k, shape, scale=0.1):
        return (scale * jax.random.normal(k, shape)).astype(jnp.float32)

    return {
        "cls": n(ks[0], (1, 1, INPUT_DIM), 1.0),                       # nn.Parameter cls_token
        "wp": n(ks[1], (INPUT_DIM, D_MODEL)),                          # input_projection
        "bp": n(ks[2], (1, D_MODEL)),
        "pos": n(ks[3], (MAX_LEN, D_MODEL), 1.0),                      # pos_embedding
        "wqkv": n(ks[4], (NUM_LAYERS, D_MODEL, 3 * D_MODEL)),          # in_proj (q|k|v)
        "bqkv": n(ks[5], (NUM_LAYERS, 1, 3 * D_MODEL)),
        "wo": n(ks[6], (NUM_LAYERS, D_MODEL, D_MODEL)),                # attn out_proj
        "bo": n(ks[7], (NUM_LAYERS, 1, D_MODEL)),
        "g1": jnp.ones((NUM_LAYERS, 1, D_MODEL), jnp.float32),         # norm1
        "be1": jnp.zeros((NUM_LAYERS, 1, D_MODEL), jnp.float32),
        "w1": n(ks[8], (NUM_LAYERS, D_MODEL, DIM_FF)),                 # linear1
        "b1": n(ks[9], (NUM_LAYERS, 1, DIM_FF)),
        "w2": n(ks[10], (NUM_LAYERS, DIM_FF, D_MODEL)),                # linear2
        "b2": n(ks[11], (NUM_LAYERS, 1, D_MODEL)),
        "g2": jnp.ones((NUM_LAYERS, 1, D_MODEL), jnp.float32),         # norm2
        "be2": jnp.zeros((NUM_LAYERS, 1, D_MODEL), jnp.float32),
        "wd": n(ks[12], (D_MODEL, INPUT_DIM)),                         # decoder Linear
        "bd": n(ks[13], (1, INPUT_DIM)),
    }


def _pick_batch_tile(B, S1P):
    # rough lane-padded VMEM bytes per batch row of the attention working set
    lane = 128
    per_row = (2 * N_HEADS * S1P * max(S1P, lane) * 4            # scores + probs (f32)
               + 4 * N_HEADS * S1P * lane * 2                    # q/k/v/ctx head stacks (bf16)
               + S1P * (3 * D_MODEL + DIM_FF + 4 * D_MODEL) * 4)  # row slabs (f32)
    budget = 20 * 1024 * 1024
    tb = max(1, min(B, 64, budget // per_row))
    if B > 1:
        tb = min(tb, -(-B // 2))   # >= 2 grid steps so both v7x TensorCores get work
    return int(tb)


def mae_forward(params, x, mask=None):
    # `mask` is accepted for parity with MAEModel.forward(x, mask) but is unused there.
    B, S, Din = x.shape
    assert Din == INPUT_DIM
    S1 = S + 1
    assert S1 <= MAX_LEN, f"positional table holds {MAX_LEN} positions, need {S1}"
    S1P = ((S1 + 7) // 8) * 8            # pad sequence(+CLS) to a sublane multiple
    TB = _pick_batch_tile(B, S1P)
    NB = -(-B // TB)
    B_pad = NB * TB

    bf16 = lambda a: a.astype(jnp.bfloat16)
    scale = 1.0 / math.sqrt(HEAD_DIM)

    # ---- glue (cheap XLA on tiny arrays): CLS appended at the END; zero-pad seq/batch/feat ----
    xf = x.astype(jnp.float32)
    cls = jnp.broadcast_to(params["cls"].astype(jnp.float32), (B, 1, Din))
    x_cat = jnp.concatenate([xf, cls], axis=1)                              # (B, S1, Din)
    x_cat = jnp.pad(x_cat, ((0, B_pad - B), (0, S1P - S1), (0, DIN_PAD - Din)))

    # positional table reordered for [tokens..., CLS]; projection bias folded in
    pos_r = jnp.concatenate([params["pos"][1:S1], params["pos"][0:1]], axis=0)
    pos_r = jnp.pad(pos_r + params["bp"], ((0, S1P - S1), (0, 0)))          # (S1P, D)

    wp = bf16(jnp.pad(params["wp"], ((0, DIN_PAD - INPUT_DIM), (0, 0))))

    # per-layer QKV weights split & stacked (L*3, D, D); Q weight/bias pre-scaled by 1/sqrt(hd)
    wq = params["wqkv"][:, :, 0 * D_MODEL:1 * D_MODEL] * scale
    wk = params["wqkv"][:, :, 1 * D_MODEL:2 * D_MODEL]
    wv = params["wqkv"][:, :, 2 * D_MODEL:3 * D_MODEL]
    wqkv = bf16(jnp.stack([wq, wk, wv], axis=1).reshape(NUM_LAYERS * 3, D_MODEL, D_MODEL))
    wo = bf16(params["wo"])
    w1 = bf16(params["w1"])
    w2 = bf16(params["w2"])
    wd = bf16(jnp.pad(params["wd"], ((0, 0), (0, OUT_PAD - INPUT_DIM))))
    bd = jnp.pad(params["bd"], ((0, 0), (0, OUT_PAD - INPUT_DIM)))

    bqkv = jnp.concatenate([params["bqkv"][:, :, :D_MODEL] * scale,
                            params["bqkv"][:, :, D_MODEL:]], axis=-1)

    def padw(a):
        return jnp.pad(a, ((0, 0), (0, 0), (0, VEC_W - a.shape[-1])))
    vec = jnp.concatenate(
        [padw(a) for a in (bqkv, params["bo"], params["g1"], params["be1"],
                           params["b1"], params["b2"], params["g2"], params["be2"])],
        axis=1)                                                              # (L, 8, VEC_W)

    def full_spec(a):
        nd = a.ndim
        return pl.BlockSpec(a.shape, lambda b, nd=nd: (0,) * nd)

    out = pl.pallas_call(
        partial(mae_kernel, cls_pos=S),
        out_shape=jax.ShapeDtypeStruct((B_pad, S1P, OUT_PAD), jnp.float32),
        grid=(NB,),
        in_specs=[
            pl.BlockSpec((TB, S1P, DIN_PAD), lambda b: (b, 0, 0)),
            full_spec(pos_r), full_spec(wp), full_spec(wqkv), full_spec(wo),
            full_spec(w1), full_spec(w2), full_spec(vec), full_spec(wd), full_spec(bd),
        ],
        out_specs=pl.BlockSpec((TB, S1P, OUT_PAD), lambda b: (b, 0, 0)),
        compiler_params=pltpu.CompilerParams(
            dimension_semantics=("parallel",),
            vmem_limit_bytes=64 * 1024 * 1024),
    )(x_cat, pos_r, wp, wqkv, wo, w1, w2, vec, wd, bd)

    # drop batch padding (padded rows attend only to their CLS column -> garbage-but-finite,
    # intentionally sliced off here), the CLS/sequence-padding rows, and the lane padding.
    return out[:B, :S, :Din]


if __name__ == "__main__":
    key = jax.random.PRNGKey(0)
    pkey, xkey = jax.random.split(key)
    params = init_params(pkey)

    B, S = 2, 8
    x = jax.random.normal(xkey, (B, S, INPUT_DIM), dtype=jnp.float32)
    x = x.at[:, -1, :].set(0.0)                  # all-zero timestep -> exercises key padding mask
    mask = jnp.zeros((B, S), dtype=jnp.float32)  # unused by MAEModel.forward (API parity)

    out = jax.block_until_ready(mae_forward(params, x, mask))
    assert out.shape == (B, S, INPUT_DIM), out.shape
    assert bool(jnp.all(jnp.isfinite(out)))
    print("KERNEL_OK")
</pallas_src>

<mosaic_0001>
module attributes {stable_mosaic.version = 11 : i64} {
  func.func @mae_kernel(%arg0: i32, %arg1: memref<1x16x8xf32, #tpu.memory_space<vmem>>, %arg2: memref<16x64xf32, #tpu.memory_space<vmem>>, %arg3: memref<8x64xbf16, #tpu.memory_space<vmem>>, %arg4: memref<6x64x64xbf16, #tpu.memory_space<vmem>>, %arg5: memref<2x64x64xbf16, #tpu.memory_space<vmem>>, %arg6: memref<2x64x256xbf16, #tpu.memory_space<vmem>>, %arg7: memref<2x256x64xbf16, #tpu.memory_space<vmem>>, %arg8: memref<2x8x256xf32, #tpu.memory_space<vmem>>, %arg9: memref<64x8xbf16, #tpu.memory_space<vmem>>, %arg10: memref<1x8xf32, #tpu.memory_space<vmem>>, %arg11: memref<1x16x8xf32, #tpu.memory_space<vmem>>) attributes {dimension_semantics = [#tpu.dimension_semantics<parallel>], iteration_bounds = array<i64: 2>, scalar_prefetch = 0 : i64, scratch_operands = 0 : i64, tpu.core_type = #tpu.core_type<tc>, window_params = [{transform_indices = @transform_0, window_bounds = array<i64: 1, 16, 8>}, {pipeline_mode = #tpu.pipeline_mode<synchronous>, transform_indices = @transform_1, window_bounds = array<i64: 16, 64>}, {pipeline_mode = #tpu.pipeline_mode<synchronous>, transform_indices = @transform_2, window_bounds = array<i64: 8, 64>}, {pipeline_mode = #tpu.pipeline_mode<synchronous>, transform_indices = @transform_3, window_bounds = array<i64: 6, 64, 64>}, {pipeline_mode = #tpu.pipeline_mode<synchronous>, transform_indices = @transform_4, window_bounds = array<i64: 2, 64, 64>}, {pipeline_mode = #tpu.pipeline_mode<synchronous>, transform_indices = @transform_5, window_bounds = array<i64: 2, 64, 256>}, {pipeline_mode = #tpu.pipeline_mode<synchronous>, transform_indices = @transform_6, window_bounds = array<i64: 2, 256, 64>}, {pipeline_mode = #tpu.pipeline_mode<synchronous>, transform_indices = @transform_7, window_bounds = array<i64: 2, 8, 256>}, {pipeline_mode = #tpu.pipeline_mode<synchronous>, transform_indices = @transform_8, window_bounds = array<i64: 64, 8>}, {pipeline_mode = #tpu.pipeline_mode<synchronous>, transform_indices = @transform_9, window_bounds = array<i64: 1, 8>}, {transform_indices = @transform_10, window_bounds = array<i64: 1, 16, 8>}]} {
    %c0 = arith.constant 0 : index
    %c0_0 = arith.constant 0 : index
    %c0_1 = arith.constant 0 : index
    %0 = vector.load %arg1[%c0, %c0_0, %c0_1] : memref<1x16x8xf32, #tpu.memory_space<vmem>>, vector<1x16x8xf32>
    %1 = math.absf %0 : vector<1x16x8xf32>
    %cst = arith.constant dense<0xFF800000> : vector<1x16xf32>
    %2 = vector.multi_reduction <maximumf>, %1, %cst [2] : vector<1x16x8xf32> to vector<1x16xf32>
    %3 = tpu.iota {dimensions = array<i32: 1>} : vector<1x16xi32>
    %cst_2 = arith.constant 0.000000e+00 : f32
    %4 = vector.broadcast %cst_2 : f32 to vector<1x16xf32>
    %5 = arith.cmpf oeq, %2, %4 : vector<1x16xf32>
    %c8_i32 = arith.constant 8 : i32
    %6 = vector.broadcast %c8_i32 : i32 to vector<1x16xi32>
    %7 = arith.cmpi ne, %3, %6 : vector<1x16xi32>
    %8 = arith.andi %5, %7 : vector<1x16xi1>
    %cst_3 = arith.constant -1.000000e+30 : f32
    %cst_4 = arith.constant 0.000000e+00 : f32
    %9 = vector.broadcast %cst_3 : f32 to vector<1x16xf32>
    %10 = vector.broadcast %cst_4 : f32 to vector<1x16xf32>
    %11 = arith.select %8, %9, %10 : vector<1x16xi1>, vector<1x16xf32>
    %12 = vector.shape_cast %11 : vector<1x16xf32> to vector<1x1x1x16xf32>
    %13 = vector.shape_cast %12 : vector<1x1x1x16xf32> to vector<1x1x1x16xf32>
    %14 = vector.broadcast %13 : vector<1x1x1x16xf32> to vector<8x1x1x16xf32>
    %15 = vector.shape_cast %14 : vector<8x1x1x16xf32> to vector<8x1x16xf32>
    %16 = vector.shape_cast %0 : vector<1x16x8xf32> to vector<16x8xf32>
    %17 = arith.truncf %16 : vector<16x8xf32> to vector<16x8xbf16>
    %c0_5 = arith.constant 0 : index
    %c0_6 = arith.constant 0 : index
    %18 = vector.load %arg3[%c0_5, %c0_6] : memref<8x64xbf16, #tpu.memory_space<vmem>>, vector<8x64xbf16>
    %cst_7 = arith.constant dense<0.000000e+00> : vector<16x64xf32>
    %19 = tpu.matmul %17, %18, %cst_7 {dimension_numbers = #tpu.dot_dimension_numbers<[1], [0], [0], [1], [0, 0, 1, 1], [], []>} : vector<16x8xbf16>, vector<8x64xbf16>, vector<16x64xf32> -> vector<16x64xf32>
    %20 = vector.shape_cast %19 : vector<16x64xf32> to vector<1x16x64xf32>
    %c0_8 = arith.constant 0 : index
    %c0_9 = arith.constant 0 : index
    %21 = vector.load %arg2[%c0_8, %c0_9] : memref<16x64xf32, #tpu.memory_space<vmem>>, vector<16x64xf32>
    %22 = vector.shape_cast %21 : vector<16x64xf32> to vector<1x16x64xf32>
    %23 = arith.addf %20, %22 : vector<1x16x64xf32>
    %24 = vector.shape_cast %23 : vector<1x16x64xf32> to vector<16x64xf32>
    %25 = arith.truncf %24 : vector<16x64xf32> to vector<16x64xbf16>
    %c0_10 = arith.constant 0 : index
    %c0_11 = arith.constant 0 : index
    %c0_12 = arith.constant 0 : index
    %26 = vector.load %arg8[%c0_10, %c0_11, %c0_12] : memref<2x8x256xf32, #tpu.memory_space<vmem>>, vector<1x8x256xf32>
    %27 = vector.shape_cast %26 : vector<1x8x256xf32> to vector<8x256xf32>
    %28 = vector.extract_strided_slice %27 {offsets = [0, 0], sizes = [1, 64], strides = [1, 1]} : vector<8x256xf32> to vector<1x64xf32>
    %29 = vector.extract_strided_slice %27 {offsets = [0, 64], sizes = [1, 64], strides = [1, 1]} : vector<8x256xf32> to vector<1x64xf32>
    %30 = vector.extract_strided_slice %27 {offsets = [0, 128], sizes = [1, 64], strides = [1, 1]} : vector<8x256xf32> to vector<1x64xf32>
    %31 = vector.extract_strided_slice %27 {offsets = [1, 0], sizes = [1, 64], strides = [1, 1]} : vector<8x256xf32> to vector<1x64xf32>
    %32 = vector.extract_strided_slice %27 {offsets = [2, 0], sizes = [1, 64], strides = [1, 1]} : vector<8x256xf32> to vector<1x64xf32>
    %33 = vector.extract_strided_slice %27 {offsets = [3, 0], sizes = [1, 64], strides = [1, 1]} : vector<8x256xf32> to vector<1x64xf32>
    %34 = vector.extract_strided_slice %27 {offsets = [4, 0], sizes = [1, 256], strides = [1, 1]} : vector<8x256xf32> to vector<1x256xf32>
    %35 = vector.extract_strided_slice %27 {offsets = [5, 0], sizes = [1, 64], strides = [1, 1]} : vector<8x256xf32> to vector<1x64xf32>
    %36 = vector.extract_strided_slice %27 {offsets = [6, 0], sizes = [1, 64], strides = [1, 1]} : vector<8x256xf32> to vector<1x64xf32>
    %37 = vector.extract_strided_slice %27 {offsets = [7, 0], sizes = [1, 64], strides = [1, 1]} : vector<8x256xf32> to vector<1x64xf32>
    %c0_13 = arith.constant 0 : index
    %c0_14 = arith.constant 0 : index
    %c0_15 = arith.constant 0 : index
    %38 = vector.load %arg4[%c0_13, %c0_14, %c0_15] : memref<6x64x64xbf16, #tpu.memory_space<vmem>>, vector<1x64x64xbf16>
    %39 = vector.shape_cast %38 : vector<1x64x64xbf16> to vector<64x64xbf16>
    %cst_16 = arith.constant dense<0.000000e+00> : vector<16x64xf32>
    %40 = tpu.matmul %25, %39, %cst_16 {dimension_numbers = #tpu.dot_dimension_numbers<[1], [0], [0], [1], [0, 0, 1, 1], [], []>} : vector<16x64xbf16>, vector<64x64xbf16>, vector<16x64xf32> -> vector<16x64xf32>
    %41 = vector.broadcast %28 : vector<1x64xf32> to vector<16x64xf32>
    %42 = arith.addf %40, %41 : vector<16x64xf32>
    %c1 = arith.constant 1 : index
    %c0_17 = arith.constant 0 : index
    %c0_18 = arith.constant 0 : index
    %43 = vector.load %arg4[%c1, %c0_17, %c0_18] : memref<6x64x64xbf16, #tpu.memory_space<vmem>>, vector<1x64x64xbf16>
    %44 = vector.shape_cast %43 : vector<1x64x64xbf16> to vector<64x64xbf16>
    %cst_19 = arith.constant dense<0.000000e+00> : vector<16x64xf32>
    %45 = tpu.matmul %25, %44, %cst_19 {dimension_numbers = #tpu.dot_dimension_numbers<[1], [0], [0], [1], [0, 0, 1, 1], [], []>} : vector<16x64xbf16>, vector<64x64xbf16>, vector<16x64xf32> -> vector<16x64xf32>
    %46 = vector.broadcast %29 : vector<1x64xf32> to vector<16x64xf32>
    %47 = arith.addf %45, %46 : vector<16x64xf32>
    %c2 = arith.constant 2 : index
    %c0_20 = arith.constant 0 : index
    %c0_21 = arith.constant 0 : index
    %48 = vector.load %arg4[%c2, %c0_20, %c0_21] : memref<6x64x64xbf16, #tpu.memory_space<vmem>>, vector<1x64x64xbf16>
    %49 = vector.shape_cast %48 : vector<1x64x64xbf16> to vector<64x64xbf16>
    %cst_22 = arith.constant dense<0.000000e+00> : vector<16x64xf32>
    %50 = tpu.matmul %25, %49, %cst_22 {dimension_numbers = #tpu.dot_dimension_numbers<[1], [0], [0], [1], [0, 0, 1, 1], [], []>} : vector<16x64xbf16>, vector<64x64xbf16>, vector<16x64xf32> -> vector<16x64xf32>
    %51 = vector.broadcast %30 : vector<1x64xf32> to vector<16x64xf32>
    %52 = arith.addf %50, %51 : vector<16x64xf32>
    %53 = arith.truncf %42 : vector<16x64xf32> to vector<16x64xbf16>
    %54 = vector.extract_strided_slice %53 {offsets = [0, 0], sizes = [16, 8], strides = [1, 1]} : vector<16x64xbf16> to vector<16x8xbf16>
    %55 = vector.shape_cast %54 : vector<16x8xbf16> to vector<1x16x8xbf16>
    %56 = vector.extract_strided_slice %53 {offsets = [0, 8], sizes = [16, 8], strides = [1, 1]} : vector<16x64xbf16> to vector<16x8xbf16>
    %57 = vector.shape_cast %56 : vector<16x8xbf16> to vector<1x16x8xbf16>
    %58 = vector.extract_strided_slice %53 {offsets = [0, 16], sizes = [16, 8], strides = [1, 1]} : vector<16x64xbf16> to vector<16x8xbf16>
    %59 = vector.shape_cast %58 : vector<16x8xbf16> to vector<1x16x8xbf16>
    %60 = vector.extract_strided_slice %53 {offsets = [0, 24], sizes = [16, 8], strides = [1, 1]} : vector<16x64xbf16> to vector<16x8xbf16>
    %61 = vector.shape_cast %60 : vector<16x8xbf16> to vector<1x16x8xbf16>
    %62 = vector.extract_strided_slice %53 {offsets = [0, 32], sizes = [16, 8], strides = [1, 1]} : vector<16x64xbf16> to vector<16x8xbf16>
    %63 = vector.shape_cast %62 : vector<16x8xbf16> to vector<1x16x8xbf16>
    %64 = vector.extract_strided_slice %53 {offsets = [0, 40], sizes = [16, 8], strides = [1, 1]} : vector<16x64xbf16> to vector<16x8xbf16>
    %65 = vector.shape_cast %64 : vector<16x8xbf16> to vector<1x16x8xbf16>
    %66 = vector.extract_strided_slice %53 {offsets = [0, 48], sizes = [16, 8], strides = [1, 1]} : vector<16x64xbf16> to vector<16x8xbf16>
    %67 = vector.shape_cast %66 : vector<16x8xbf16> to vector<1x16x8xbf16>
    %68 = vector.extract_strided_slice %53 {offsets = [0, 56], sizes = [16, 8], strides = [1, 1]} : vector<16x64xbf16> to vector<16x8xbf16>
    %69 = vector.shape_cast %68 : vector<16x8xbf16> to vector<1x16x8xbf16>
    %70 = vector.shape_cast %55 : vector<1x16x8xbf16> to vector<1x1x16x8xbf16>
    %71 = vector.shape_cast %57 : vector<1x16x8xbf16> to vector<1x1x16x8xbf16>
    %72 = vector.shape_cast %59 : vector<1x16x8xbf16> to vector<1x1x16x8xbf16>
    %73 = vector.shape_cast %61 : vector<1x16x8xbf16> to vector<1x1x16x8xbf16>
    %74 = vector.shape_cast %63 : vector<1x16x8xbf16> to vector<1x1x16x8xbf16>
    %75 = vector.shape_cast %65 : vector<1x16x8xbf16> to vector<1x1x16x8xbf16>
    %76 = vector.shape_cast %67 : vector<1x16x8xbf16> to vector<1x1x16x8xbf16>
    %77 = vector.shape_cast %69 : vector<1x16x8xbf16> to vector<1x1x16x8xbf16>
    %78 = tpu.concatenate %70, %71, %72, %73, %74, %75, %76, %77 in 0 : vector<1x1x16x8xbf16>, vector<1x1x16x8xbf16>, vector<1x1x16x8xbf16>, vector<1x1x16x8xbf16>, vector<1x1x16x8xbf16>, vector<1x1x16x8xbf16>, vector<1x1x16x8xbf16>, vector<1x1x16x8xbf16> -> vector<8x1x16x8xbf16>
    %79 = vector.shape_cast %78 : vector<8x1x16x8xbf16> to vector<8x16x8xbf16>
    %80 = arith.truncf %47 : vector<16x64xf32> to vector<16x64xbf16>
    %81 = vector.extract_strided_slice %80 {offsets = [0, 0], sizes = [16, 8], strides = [1, 1]} : vector<16x64xbf16> to vector<16x8xbf16>
    %82 = vector.shape_cast %81 : vector<16x8xbf16> to vector<1x16x8xbf16>
    %83 = vector.extract_strided_slice %80 {offsets = [0, 8], sizes = [16, 8], strides = [1, 1]} : vector<16x64xbf16> to vector<16x8xbf16>
    %84 = vector.shape_cast %83 : vector<16x8xbf16> to vector<1x16x8xbf16>
    %85 = vector.extract_strided_slice %80 {offsets = [0, 16], sizes = [16, 8], strides = [1, 1]} : vector<16x64xbf16> to vector<16x8xbf16>
    %86 = vector.shape_cast %85 : vector<16x8xbf16> to vector<1x16x8xbf16>
    %87 = vector.extract_strided_slice %80 {offsets = [0, 24], sizes = [16, 8], strides = [1, 1]} : vector<16x64xbf16> to vector<16x8xbf16>
    %88 = vector.shape_cast %87 : vector<16x8xbf16> to vector<1x16x8xbf16>
    %89 = vector.extract_strided_slice %80 {offsets = [0, 32], sizes = [16, 8], strides = [1, 1]} : vector<16x64xbf16> to vector<16x8xbf16>
    %90 = vector.shape_cast %89 : vector<16x8xbf16> to vector<1x16x8xbf16>
    %91 = vector.extract_strided_slice %80 {offsets = [0, 40], sizes = [16, 8], strides = [1, 1]} : vector<16x64xbf16> to vector<16x8xbf16>
    %92 = vector.shape_cast %91 : vector<16x8xbf16> to vector<1x16x8xbf16>
    %93 = vector.extract_strided_slice %80 {offsets = [0, 48], sizes = [16, 8], strides = [1, 1]} : vector<16x64xbf16> to vector<16x8xbf16>
    %94 = vector.shape_cast %93 : vector<16x8xbf16> to vector<1x16x8xbf16>
    %95 = vector.extract_strided_slice %80 {offsets = [0, 56], sizes = [16, 8], strides = [1, 1]} : vector<16x64xbf16> to vector<16x8xbf16>
    %96 = vector.shape_cast %95 : vector<16x8xbf16> to vector<1x16x8xbf16>
    %97 = vector.shape_cast %82 : vector<1x16x8xbf16> to vector<1x1x16x8xbf16>
    %98 = vector.shape_cast %84 : vector<1x16x8xbf16> to vector<1x1x16x8xbf16>
    %99 = vector.shape_cast %86 : vector<1x16x8xbf16> to vector<1x1x16x8xbf16>
    %100 = vector.shape_cast %88 : vector<1x16x8xbf16> to vector<1x1x16x8xbf16>
    %101 = vector.shape_cast %90 : vector<1x16x8xbf16> to vector<1x1x16x8xbf16>
    %102 = vector.shape_cast %92 : vector<1x16x8xbf16> to vector<1x1x16x8xbf16>
    %103 = vector.shape_cast %94 : vector<1x16x8xbf16> to vector<1x1x16x8xbf16>
    %104 = vector.shape_cast %96 : vector<1x16x8xbf16> to vector<1x1x16x8xbf16>
    %105 = tpu.concatenate %97, %98, %99, %100, %101, %102, %103, %104 in 0 : vector<1x1x16x8xbf16>, vector<1x1x16x8xbf16>, vector<1x1x16x8xbf16>, vector<1x1x16x8xbf16>, vector<1x1x16x8xbf16>, vector<1x1x16x8xbf16>, vector<1x1x16x8xbf16>, vector<1x1x16x8xbf16> -> vector<8x1x16x8xbf16>
    %106 = vector.shape_cast %105 : vector<8x1x16x8xbf16> to vector<8x16x8xbf16>
    %107 = arith.truncf %52 : vector<16x64xf32> to vector<16x64xbf16>
    %108 = vector.extract_strided_slice %107 {offsets = [0, 0], sizes = [16, 8], strides = [1, 1]} : vector<16x64xbf16> to vector<16x8xbf16>
    %109 = vector.shape_cast %108 : vector<16x8xbf16> to vector<1x16x8xbf16>
    %110 = vector.extract_strided_slice %107 {offsets = [0, 8], sizes = [16, 8], strides = [1, 1]} : vector<16x64xbf16> to vector<16x8xbf16>
    %111 = vector.shape_cast %110 : vector<16x8xbf16> to vector<1x16x8xbf16>
    %112 = vector.extract_strided_slice %107 {offsets = [0, 16], sizes = [16, 8], strides = [1, 1]} : vector<16x64xbf16> to vector<16x8xbf16>
    %113 = vector.shape_cast %112 : vector<16x8xbf16> to vector<1x16x8xbf16>
    %114 = vector.extract_strided_slice %107 {offsets = [0, 24], sizes = [16, 8], strides = [1, 1]} : vector<16x64xbf16> to vector<16x8xbf16>
    %115 = vector.shape_cast %114 : vector<16x8xbf16> to vector<1x16x8xbf16>
    %116 = vector.extract_strided_slice %107 {offsets = [0, 32], sizes = [16, 8], strides = [1, 1]} : vector<16x64xbf16> to vector<16x8xbf16>
    %117 = vector.shape_cast %116 : vector<16x8xbf16> to vector<1x16x8xbf16>
    %118 = vector.extract_strided_slice %107 {offsets = [0, 40], sizes = [16, 8], strides = [1, 1]} : vector<16x64xbf16> to vector<16x8xbf16>
    %119 = vector.shape_cast %118 : vector<16x8xbf16> to vector<1x16x8xbf16>
    %120 = vector.extract_strided_slice %107 {offsets = [0, 48], sizes = [16, 8], strides = [1, 1]} : vector<16x64xbf16> to vector<16x8xbf16>
    %121 = vector.shape_cast %120 : vector<16x8xbf16> to vector<1x16x8xbf16>
    %122 = vector.extract_strided_slice %107 {offsets = [0, 56], sizes = [16, 8], strides = [1, 1]} : vector<16x64xbf16> to vector<16x8xbf16>
    %123 = vector.shape_cast %122 : vector<16x8xbf16> to vector<1x16x8xbf16>
    %124 = vector.shape_cast %109 : vector<1x16x8xbf16> to vector<1x1x16x8xbf16>
    %125 = vector.shape_cast %111 : vector<1x16x8xbf16> to vector<1x1x16x8xbf16>
    %126 = vector.shape_cast %113 : vector<1x16x8xbf16> to vector<1x1x16x8xbf16>
    %127 = vector.shape_cast %115 : vector<1x16x8xbf16> to vector<1x1x16x8xbf16>
    %128 = vector.shape_cast %117 : vector<1x16x8xbf16> to vector<1x1x16x8xbf16>
    %129 = vector.shape_cast %119 : vector<1x16x8xbf16> to vector<1x1x16x8xbf16>
    %130 = vector.shape_cast %121 : vector<1x16x8xbf16> to vector<1x1x16x8xbf16>
    %131 = vector.shape_cast %123 : vector<1x16x8xbf16> to vector<1x1x16x8xbf16>
    %132 = tpu.concatenate %124, %125, %126, %127, %128, %129, %130, %131 in 0 : vector<1x1x16x8xbf16>, vector<1x1x16x8xbf16>, vector<1x1x16x8xbf16>, vector<1x1x16x8xbf16>, vector<1x1x16x8xbf16>, vector<1x1x16x8xbf16>, vector<1x1x16x8xbf16>, vector<1x1x16x8xbf16> -> vector<8x1x16x8xbf16>
    %133 = vector.shape_cast %132 : vector<8x1x16x8xbf16> to vector<8x16x8xbf16>
    "tpu.trace_start"() <{level = 10 : i32, message = "bqd,bkd->bqk"}> : () -> ()
    %cst_23 = arith.constant dense<0.000000e+00> : vector<8x16x16xf32>
    %134 = tpu.matmul %79, %106, %cst_23 {dimension_numbers = #tpu.dot_dimension_numbers<[2], [2], [1], [1], [0, 0, 0, 1, 1, 1], [0], [0]>} : vector<8x16x8xbf16>, vector<8x16x8xbf16>, vector<8x16x16xf32> -> vector<8x16x16xf32>
    "tpu.trace_stop"() : () -> ()
    %135 = vector.broadcast %15 : vector<8x1x16xf32> to vector<8x16x16xf32>
    %136 = arith.addf %134, %135 : vector<8x16x16xf32>
    %cst_24 = arith.constant dense<0xFF800000> : vector<8x16xf32>
    %137 = vector.multi_reduction <maximumf>, %136, %cst_24 [2] : vector<8x16x16xf32> to vector<8x16xf32>
    %138 = vector.shape_cast %137 : vector<8x16xf32> to vector<8x16x1xf32>
    %139 = vector.broadcast %138 : vector<8x16x1xf32> to vector<8x16x16xf32>
    %140 = arith.subf %136, %139 : vector<8x16x16xf32>
    %141 = math.exp %140 : vector<8x16x16xf32>
    %cst_25 = arith.constant dense<0.000000e+00> : vector<8x16xf32>
    %142 = vector.multi_reduction <add>, %141, %cst_25 [2] : vector<8x16x16xf32> to vector<8x16xf32>
    %143 = vector.shape_cast %142 : vector<8x16xf32> to vector<8x16x1xf32>
    %144 = tpu.reciprocal %143 {approx = true} : vector<8x16x1xf32> -> vector<8x16x1xf32>
    %145 = vector.broadcast %144 : vector<8x16x1xf32> to vector<8x16x16xf32>
    %146 = arith.mulf %141, %145 : vector<8x16x16xf32>
    %147 = arith.truncf %146 : vector<8x16x16xf32> to vector<8x16x16xbf16>
    "tpu.trace_start"() <{level = 10 : i32, message = "bqk,bkd->bqd"}> : () -> ()
    %cst_26 = arith.constant dense<0.000000e+00> : vector<8x16x8xf32>
    %148 = tpu.matmul %147, %133, %cst_26 {dimension_numbers = #tpu.dot_dimension_numbers<[2], [1], [1], [2], [0, 0, 0, 1, 1, 2], [0], [0]>} : vector<8x16x16xbf16>, vector<8x16x8xbf16>, vector<8x16x8xf32> -> vector<8x16x8xf32>
    "tpu.trace_stop"() : () -> ()
    %149 = vector.shape_cast %148 : vector<8x16x8xf32> to vector<8x1x16x8xf32>
    %150 = vector.extract_strided_slice %149 {offsets = [0, 0, 0, 0], sizes = [1, 1, 16, 8], strides = [1, 1, 1, 1]} : vector<8x1x16x8xf32> to vector<1x1x16x8xf32>
    %151 = vector.shape_cast %150 : vector<1x1x16x8xf32> to vector<1x16x8xf32>
    %152 = vector.extract_strided_slice %149 {offsets = [1, 0, 0, 0], sizes = [1, 1, 16, 8], strides = [1, 1, 1, 1]} : vector<8x1x16x8xf32> to vector<1x1x16x8xf32>
    %153 = vector.shape_cast %152 : vector<1x1x16x8xf32> to vector<1x16x8xf32>
    %154 = vector.extract_strided_slice %149 {offsets = [2, 0, 0, 0], sizes = [1, 1, 16, 8], strides = [1, 1, 1, 1]} : vector<8x1x16x8xf32> to vector<1x1x16x8xf32>
    %155 = vector.shape_cast %154 : vector<1x1x16x8xf32> to vector<1x16x8xf32>
    %156 = vector.extract_strided_slice %149 {offsets = [3, 0, 0, 0], sizes = [1, 1, 16, 8], strides = [1, 1, 1, 1]} : vector<8x1x16x8xf32> to vector<1x1x16x8xf32>
    %157 = vector.shape_cast %156 : vector<1x1x16x8xf32> to vector<1x16x8xf32>
    %158 = vector.extract_strided_slice %149 {offsets = [4, 0, 0, 0], sizes = [1, 1, 16, 8], strides = [1, 1, 1, 1]} : vector<8x1x16x8xf32> to vector<1x1x16x8xf32>
    %159 = vector.shape_cast %158 : vector<1x1x16x8xf32> to vector<1x16x8xf32>
    %160 = vector.extract_strided_slice %149 {offsets = [5, 0, 0, 0], sizes = [1, 1, 16, 8], strides = [1, 1, 1, 1]} : vector<8x1x16x8xf32> to vector<1x1x16x8xf32>
    %161 = vector.shape_cast %160 : vector<1x1x16x8xf32> to vector<1x16x8xf32>
    %162 = vector.extract_strided_slice %149 {offsets = [6, 0, 0, 0], sizes = [1, 1, 16, 8], strides = [1, 1, 1, 1]} : vector<8x1x16x8xf32> to vector<1x1x16x8xf32>
    %163 = vector.shape_cast %162 : vector<1x1x16x8xf32> to vector<1x16x8xf32>
    %164 = vector.extract_strided_slice %149 {offsets = [7, 0, 0, 0], sizes = [1, 1, 16, 8], strides = [1, 1, 1, 1]} : vector<8x1x16x8xf32> to vector<1x1x16x8xf32>
    %165 = vector.shape_cast %164 : vector<1x1x16x8xf32> to vector<1x16x8xf32>
    %166 = tpu.concatenate %151, %153, %155, %157, %159, %161, %163, %165 in 2 : vector<1x16x8xf32>, vector<1x16x8xf32>, vector<1x16x8xf32>, vector<1x16x8xf32>, vector<1x16x8xf32>, vector<1x16x8xf32>, vector<1x16x8xf32>, vector<1x16x8xf32> -> vector<1x16x64xf32>
    %167 = vector.shape_cast %166 : vector<1x16x64xf32> to vector<16x64xf32>
    %168 = arith.truncf %167 : vector<16x64xf32> to vector<16x64xbf16>
    %c0_27 = arith.constant 0 : index
    %c0_28 = arith.constant 0 : index
    %c0_29 = arith.constant 0 : index
    %169 = vector.load %arg5[%c0_27, %c0_28, %c0_29] : memref<2x64x64xbf16, #tpu.memory_space<vmem>>, vector<1x64x64xbf16>
    %170 = vector.shape_cast %169 : vector<1x64x64xbf16> to vector<64x64xbf16>
    %cst_30 = arith.constant dense<0.000000e+00> : vector<16x64xf32>
    %171 = tpu.matmul %168, %170, %cst_30 {dimension_numbers = #tpu.dot_dimension_numbers<[1], [0], [0], [1], [0, 0, 1, 1], [], []>} : vector<16x64xbf16>, vector<64x64xbf16>, vector<16x64xf32> -> vector<16x64xf32>
    %172 = vector.broadcast %31 : vector<1x64xf32> to vector<16x64xf32>
    %173 = arith.addf %171, %172 : vector<16x64xf32>
    %174 = arith.addf %24, %173 : vector<16x64xf32>
    %cst_31 = arith.constant dense<0.000000e+00> : vector<16xf32>
    %175 = vector.multi_reduction <add>, %174, %cst_31 [1] : vector<16x64xf32> to vector<16xf32>
    %176 = vector.shape_cast %175 : vector<16xf32> to vector<16x1xf32>
    %cst_32 = arith.constant 6.400000e+01 : f32
    %177 = vector.broadcast %cst_32 : f32 to vector<16x1xf32>
    %178 = arith.divf %176, %177 : vector<16x1xf32>
    %179 = arith.mulf %174, %174 : vector<16x64xf32>
    %cst_33 = arith.constant dense<0.000000e+00> : vector<16xf32>
    %180 = vector.multi_reduction <add>, %179, %cst_33 [1] : vector<16x64xf32> to vector<16xf32>
    %181 = vector.shape_cast %180 : vector<16xf32> to vector<16x1xf32>
    %cst_34 = arith.constant 6.400000e+01 : f32
    %182 = vector.broadcast %cst_34 : f32 to vector<16x1xf32>
    %183 = arith.divf %181, %182 : vector<16x1xf32>
    %184 = arith.mulf %178, %178 : vector<16x1xf32>
    %185 = arith.subf %183, %184 : vector<16x1xf32>
    %cst_35 = arith.constant 0.000000e+00 : f32
    %186 = vector.broadcast %cst_35 : f32 to vector<16x1xf32>
    %187 = arith.maximumf %185, %186 : vector<16x1xf32>
    %188 = vector.broadcast %178 : vector<16x1xf32> to vector<16x64xf32>
    %189 = arith.subf %174, %188 : vector<16x64xf32>
    %cst_36 = arith.constant 9.99999974E-6 : f32
    %190 = vector.broadcast %cst_36 : f32 to vector<16x1xf32>
    %191 = arith.addf %187, %190 : vector<16x1xf32>
    %192 = math.rsqrt %191 : vector<16x1xf32>
    %193 = vector.broadcast %192 : vector<16x1xf32> to vector<16x64xf32>
    %194 = arith.mulf %189, %193 : vector<16x64xf32>
    %195 = vector.broadcast %32 : vector<1x64xf32> to vector<16x64xf32>
    %196 = arith.mulf %194, %195 : vector<16x64xf32>
    %197 = vector.broadcast %33 : vector<1x64xf32> to vector<16x64xf32>
    %198 = arith.addf %196, %197 : vector<16x64xf32>
    %199 = arith.truncf %198 : vector<16x64xf32> to vector<16x64xbf16>
    %c0_37 = arith.constant 0 : index
    %c0_38 = arith.constant 0 : index
    %c0_39 = arith.constant 0 : index
    %200 = vector.load %arg6[%c0_37, %c0_38, %c0_39] : memref<2x64x256xbf16, #tpu.memory_space<vmem>>, vector<1x64x256xbf16>
    %201 = vector.shape_cast %200 : vector<1x64x256xbf16> to vector<64x256xbf16>
    %cst_40 = arith.constant dense<0.000000e+00> : vector<16x256xf32>
    %202 = tpu.matmul %199, %201, %cst_40 {dimension_numbers = #tpu.dot_dimension_numbers<[1], [0], [0], [1], [0, 0, 1, 1], [], []>} : vector<16x64xbf16>, vector<64x256xbf16>, vector<16x256xf32> -> vector<16x256xf32>
    %203 = vector.broadcast %34 : vector<1x256xf32> to vector<16x256xf32>
    %204 = arith.addf %202, %203 : vector<16x256xf32>
    %cst_41 = arith.constant 0.000000e+00 : f32
    %205 = vector.broadcast %cst_41 : f32 to vector<16x256xf32>
    %206 = arith.maximumf %204, %205 : vector<16x256xf32>
    %207 = arith.truncf %206 : vector<16x256xf32> to vector<16x256xbf16>
    %c0_42 = arith.constant 0 : index
    %c0_43 = arith.constant 0 : index
    %c0_44 = arith.constant 0 : index
    %208 = vector.load %arg7[%c0_42, %c0_43, %c0_44] : memref<2x256x64xbf16, #tpu.memory_space<vmem>>, vector<1x256x64xbf16>
    %209 = vector.shape_cast %208 : vector<1x256x64xbf16> to vector<256x64xbf16>
    %cst_45 = arith.constant dense<0.000000e+00> : vector<16x64xf32>
    %210 = tpu.matmul %207, %209, %cst_45 {dimension_numbers = #tpu.dot_dimension_numbers<[1], [0], [0], [1], [0, 0, 1, 1], [], []>} : vector<16x256xbf16>, vector<256x64xbf16>, vector<16x64xf32> -> vector<16x64xf32>
    %211 = vector.broadcast %35 : vector<1x64xf32> to vector<16x64xf32>
    %212 = arith.addf %210, %211 : vector<16x64xf32>
    %213 = arith.addf %198, %212 : vector<16x64xf32>
    %cst_46 = arith.constant dense<0.000000e+00> : vector<16xf32>
    %214 = vector.multi_reduction <add>, %213, %cst_46 [1] : vector<16x64xf32> to vector<16xf32>
    %215 = vector.shape_cast %214 : vector<16xf32> to vector<16x1xf32>
    %cst_47 = arith.constant 6.400000e+01 : f32
    %216 = vector.broadcast %cst_47 : f32 to vector<16x1xf32>
    %217 = arith.divf %215, %216 : vector<16x1xf32>
    %218 = arith.mulf %213, %213 : vector<16x64xf32>
    %cst_48 = arith.constant dense<0.000000e+00> : vector<16xf32>
    %219 = vector.multi_reduction <add>, %218, %cst_48 [1] : vector<16x64xf32> to vector<16xf32>
    %220 = vector.shape_cast %219 : vector<16xf32> to vector<16x1xf32>
    %cst_49 = arith.constant 6.400000e+01 : f32
    %221 = vector.broadcast %cst_49 : f32 to vector<16x1xf32>
    %222 = arith.divf %220, %221 : vector<16x1xf32>
    %223 = arith.mulf %217, %217 : vector<16x1xf32>
    %224 = arith.subf %222, %223 : vector<16x1xf32>
    %cst_50 = arith.constant 0.000000e+00 : f32
    %225 = vector.broadcast %cst_50 : f32 to vector<16x1xf32>
    %226 = arith.maximumf %224, %225 : vector<16x1xf32>
    %227 = vector.broadcast %217 : vector<16x1xf32> to vector<16x64xf32>
    %228 = arith.subf %213, %227 : vector<16x64xf32>
    %cst_51 = arith.constant 9.99999974E-6 : f32
    %229 = vector.broadcast %cst_51 : f32 to vector<16x1xf32>
    %230 = arith.addf %226, %229 : vector<16x1xf32>
    %231 = math.rsqrt %230 : vector<16x1xf32>
    %232 = vector.broadcast %231 : vector<16x1xf32> to vector<16x64xf32>
    %233 = arith.mulf %228, %232 : vector<16x64xf32>
    %234 = vector.broadcast %36 : vector<1x64xf32> to vector<16x64xf32>
    %235 = arith.mulf %233, %234 : vector<16x64xf32>
    %236 = vector.broadcast %37 : vector<1x64xf32> to vector<16x64xf32>
    %237 = arith.addf %235, %236 : vector<16x64xf32>
    %238 = arith.truncf %237 : vector<16x64xf32> to vector<16x64xbf16>
    %c1_52 = arith.constant 1 : index
    %c0_53 = arith.constant 0 : index
    %c0_54 = arith.constant 0 : index
    %239 = vector.load %arg8[%c1_52, %c0_53, %c0_54] : memref<2x8x256xf32, #tpu.memory_space<vmem>>, vector<1x8x256xf32>
    %240 = vector.shape_cast %239 : vector<1x8x256xf32> to vector<8x256xf32>
    %241 = vector.extract_strided_slice %240 {offsets = [0, 0], sizes = [1, 64], strides = [1, 1]} : vector<8x256xf32> to vector<1x64xf32>
    %242 = vector.extract_strided_slice %240 {offsets = [0, 64], sizes = [1, 64], strides = [1, 1]} : vector<8x256xf32> to vector<1x64xf32>
    %243 = vector.extract_strided_slice %240 {offsets = [0, 128], sizes = [1, 64], strides = [1, 1]} : vector<8x256xf32> to vector<1x64xf32>
    %244 = vector.extract_strided_slice %240 {offsets = [1, 0], sizes = [1, 64], strides = [1, 1]} : vector<8x256xf32> to vector<1x64xf32>
    %245 = vector.extract_strided_slice %240 {offsets = [2, 0], sizes = [1, 64], strides = [1, 1]} : vector<8x256xf32> to vector<1x64xf32>
    %246 = vector.extract_strided_slice %240 {offsets = [3, 0], sizes = [1, 64], strides = [1, 1]} : vector<8x256xf32> to vector<1x64xf32>
    %247 = vector.extract_strided_slice %240 {offsets = [4, 0], sizes = [1, 256], strides = [1, 1]} : vector<8x256xf32> to vector<1x256xf32>
    %248 = vector.extract_strided_slice %240 {offsets = [5, 0], sizes = [1, 64], strides = [1, 1]} : vector<8x256xf32> to vector<1x64xf32>
    %249 = vector.extract_strided_slice %240 {offsets = [6, 0], sizes = [1, 64], strides = [1, 1]} : vector<8x256xf32> to vector<1x64xf32>
    %250 = vector.extract_strided_slice %240 {offsets = [7, 0], sizes = [1, 64], strides = [1, 1]} : vector<8x256xf32> to vector<1x64xf32>
    %c3 = arith.constant 3 : index
    %c0_55 = arith.constant 0 : index
    %c0_56 = arith.constant 0 : index
    %251 = vector.load %arg4[%c3, %c0_55, %c0_56] : memref<6x64x64xbf16, #tpu.memory_space<vmem>>, vector<1x64x64xbf16>
    %252 = vector.shape_cast %251 : vector<1x64x64xbf16> to vector<64x64xbf16>
    %cst_57 = arith.constant dense<0.000000e+00> : vector<16x64xf32>
    %253 = tpu.matmul %238, %252, %cst_57 {dimension_numbers = #tpu.dot_dimension_numbers<[1], [0], [0], [1], [0, 0, 1, 1], [], []>} : vector<16x64xbf16>, vector<64x64xbf16>, vector<16x64xf32> -> vector<16x64xf32>
    %254 = vector.broadcast %241 : vector<1x64xf32> to vector<16x64xf32>
    %255 = arith.addf %253, %254 : vector<16x64xf32>
    %c4 = arith.constant 4 : index
    %c0_58 = arith.constant 0 : index
    %c0_59 = arith.constant 0 : index
    %256 = vector.load %arg4[%c4, %c0_58, %c0_59] : memref<6x64x64xbf16, #tpu.memory_space<vmem>>, vector<1x64x64xbf16>
    %257 = vector.shape_cast %256 : vector<1x64x64xbf16> to vector<64x64xbf16>
    %cst_60 = arith.constant dense<0.000000e+00> : vector<16x64xf32>
    %258 = tpu.matmul %238, %257, %cst_60 {dimension_numbers = #tpu.dot_dimension_numbers<[1], [0], [0], [1], [0, 0, 1, 1], [], []>} : vector<16x64xbf16>, vector<64x64xbf16>, vector<16x64xf32> -> vector<16x64xf32>
    %259 = vector.broadcast %242 : vector<1x64xf32> to vector<16x64xf32>
    %260 = arith.addf %258, %259 : vector<16x64xf32>
    %c5 = arith.constant 5 : index
    %c0_61 = arith.constant 0 : index
    %c0_62 = arith.constant 0 : index
    %261 = vector.load %arg4[%c5, %c0_61, %c0_62] : memref<6x64x64xbf16, #tpu.memory_space<vmem>>, vector<1x64x64xbf16>
    %262 = vector.shape_cast %261 : vector<1x64x64xbf16> to vector<64x64xbf16>
    %cst_63 = arith.constant dense<0.000000e+00> : vector<16x64xf32>
    %263 = tpu.matmul %238, %262, %cst_63 {dimension_numbers = #tpu.dot_dimension_numbers<[1], [0], [0], [1], [0, 0, 1, 1], [], []>} : vector<16x64xbf16>, vector<64x64xbf16>, vector<16x64xf32> -> vector<16x64xf32>
    %264 = vector.broadcast %243 : vector<1x64xf32> to vector<16x64xf32>
    %265 = arith.addf %263, %264 : vector<16x64xf32>
    %266 = arith.truncf %255 : vector<16x64xf32> to vector<16x64xbf16>
    %267 = vector.extract_strided_slice %266 {offsets = [0, 0], sizes = [16, 8], strides = [1, 1]} : vector<16x64xbf16> to vector<16x8xbf16>
    %268 = vector.shape_cast %267 : vector<16x8xbf16> to vector<1x16x8xbf16>
    %269 = vector.extract_strided_slice %266 {offsets = [0, 8], sizes = [16, 8], strides = [1, 1]} : vector<16x64xbf16> to vector<16x8xbf16>
    %270 = vector.shape_cast %269 : vector<16x8xbf16> to vector<1x16x8xbf16>
    %271 = vector.extract_strided_slice %266 {offsets = [0, 16], sizes = [16, 8], strides = [1, 1]} : vector<16x64xbf16> to vector<16x8xbf16>
    %272 = vector.shape_cast %271 : vector<16x8xbf16> to vector<1x16x8xbf16>
    %273 = vector.extract_strided_slice %266 {offsets = [0, 24], sizes = [16, 8], strides = [1, 1]} : vector<16x64xbf16> to vector<16x8xbf16>
    %274 = vector.shape_cast %273 : vector<16x8xbf16> to vector<1x16x8xbf16>
    %275 = vector.extract_strided_slice %266 {offsets = [0, 32], sizes = [16, 8], strides = [1, 1]} : vector<16x64xbf16> to vector<16x8xbf16>
    %276 = vector.shape_cast %275 : vector<16x8xbf16> to vector<1x16x8xbf16>
    %277 = vector.extract_strided_slice %266 {offsets = [0, 40], sizes = [16, 8], strides = [1, 1]} : vector<16x64xbf16> to vector<16x8xbf16>
    %278 = vector.shape_cast %277 : vector<16x8xbf16> to vector<1x16x8xbf16>
    %279 = vector.extract_strided_slice %266 {offsets = [0, 48], sizes = [16, 8], strides = [1, 1]} : vector<16x64xbf16> to vector<16x8xbf16>
    %280 = vector.shape_cast %279 : vector<16x8xbf16> to vector<1x16x8xbf16>
    %281 = vector.extract_strided_slice %266 {offsets = [0, 56], sizes = [16, 8], strides = [1, 1]} : vector<16x64xbf16> to vector<16x8xbf16>
    %282 = vector.shape_cast %281 : vector<16x8xbf16> to vector<1x16x8xbf16>
    %283 = vector.shape_cast %268 : vector<1x16x8xbf16> to vector<1x1x16x8xbf16>
    %284 = vector.shape_cast %270 : vector<1x16x8xbf16> to vector<1x1x16x8xbf16>
    %285 = vector.shape_cast %272 : vector<1x16x8xbf16> to vector<1x1x16x8xbf16>
    %286 = vector.shape_cast %274 : vector<1x16x8xbf16> to vector<1x1x16x8xbf16>
    %287 = vector.shape_cast %276 : vector<1x16x8xbf16> to vector<1x1x16x8xbf16>
    %288 = vector.shape_cast %278 : vector<1x16x8xbf16> to vector<1x1x16x8xbf16>
    %289 = vector.shape_cast %280 : vector<1x16x8xbf16> to vector<1x1x16x8xbf16>
    %290 = vector.shape_cast %282 : vector<1x16x8xbf16> to vector<1x1x16x8xbf16>
    %291 = tpu.concatenate %283, %284, %285, %286, %287, %288, %289, %290 in 0 : vector<1x1x16x8xbf16>, vector<1x1x16x8xbf16>, vector<1x1x16x8xbf16>, vector<1x1x16x8xbf16>, vector<1x1x16x8xbf16>, vector<1x1x16x8xbf16>, vector<1x1x16x8xbf16>, vector<1x1x16x8xbf16> -> vector<8x1x16x8xbf16>
    %292 = vector.shape_cast %291 : vector<8x1x16x8xbf16> to vector<8x16x8xbf16>
    %293 = arith.truncf %260 : vector<16x64xf32> to vector<16x64xbf16>
    %294 = vector.extract_strided_slice %293 {offsets = [0, 0], sizes = [16, 8], strides = [1, 1]} : vector<16x64xbf16> to vector<16x8xbf16>
    %295 = vector.shape_cast %294 : vector<16x8xbf16> to vector<1x16x8xbf16>
    %296 = vector.extract_strided_slice %293 {offsets = [0, 8], sizes = [16, 8], strides = [1, 1]} : vector<16x64xbf16> to vector<16x8xbf16>
    %297 = vector.shape_cast %296 : vector<16x8xbf16> to vector<1x16x8xbf16>
    %298 = vector.extract_strided_slice %293 {offsets = [0, 16], sizes = [16, 8], strides = [1, 1]} : vector<16x64xbf16> to vector<16x8xbf16>
    %299 = vector.shape_cast %298 : vector<16x8xbf16> to vector<1x16x8xbf16>
    %300 = vector.extract_strided_slice %293 {offsets = [0, 24], sizes = [16, 8], strides = [1, 1]} : vector<16x64xbf16> to vector<16x8xbf16>
    %301 = vector.shape_cast %300 : vector<16x8xbf16> to vector<1x16x8xbf16>
    %302 = vector.extract_strided_slice %293 {offsets = [0, 32], sizes = [16, 8], strides = [1, 1]} : vector<16x64xbf16> to vector<16x8xbf16>
    %303 = vector.shape_cast %302 : vector<16x8xbf16> to vector<1x16x8xbf16>
    %304 = vector.extract_strided_slice %293 {offsets = [0, 40], sizes = [16, 8], strides = [1, 1]} : vector<16x64xbf16> to vector<16x8xbf16>
    %305 = vector.shape_cast %304 : vector<16x8xbf16> to vector<1x16x8xbf16>
    %306 = vector.extract_strided_slice %293 {offsets = [0, 48], sizes = [16, 8], strides = [1, 1]} : vector<16x64xbf16> to vector<16x8xbf16>
    %307 = vector.shape_cast %306 : vector<16x8xbf16> to vector<1x16x8xbf16>
    %308 = vector.extract_strided_slice %293 {offsets = [0, 56], sizes = [16, 8], strides = [1, 1]} : vector<16x64xbf16> to vector<16x8xbf16>
    %309 = vector.shape_cast %308 : vector<16x8xbf16> to vector<1x16x8xbf16>
    %310 = vector.shape_cast %295 : vector<1x16x8xbf16> to vector<1x1x16x8xbf16>
    %311 = vector.shape_cast %297 : vector<1x16x8xbf16> to vector<1x1x16x8xbf16>
    %312 = vector.shape_cast %299 : vector<1x16x8xbf16> to vector<1x1x16x8xbf16>
    %313 = vector.shape_cast %301 : vector<1x16x8xbf16> to vector<1x1x16x8xbf16>
    %314 = vector.shape_cast %303 : vector<1x16x8xbf16> to vector<1x1x16x8xbf16>
    %315 = vector.shape_cast %305 : vector<1x16x8xbf16> to vector<1x1x16x8xbf16>
    %316 = vector.shape_cast %307 : vector<1x16x8xbf16> to vector<1x1x16x8xbf16>
    %317 = vector.shape_cast %309 : vector<1x16x8xbf16> to vector<1x1x16x8xbf16>
    %318 = tpu.concatenate %310, %311, %312, %313, %314, %315, %316, %317 in 0 : vector<1x1x16x8xbf16>, vector<1x1x16x8xbf16>, vector<1x1x16x8xbf16>, vector<1x1x16x8xbf16>, vector<1x1x16x8xbf16>, vector<1x1x16x8xbf16>, vector<1x1x16x8xbf16>, vector<1x1x16x8xbf16> -> vector<8x1x16x8xbf16>
    %319 = vector.shape_cast %318 : vector<8x1x16x8xbf16> to vector<8x16x8xbf16>
    %320 = arith.truncf %265 : vector<16x64xf32> to vector<16x64xbf16>
    %321 = vector.extract_strided_slice %320 {offsets = [0, 0], sizes = [16, 8], strides = [1, 1]} : vector<16x64xbf16> to vector<16x8xbf16>
    %322 = vector.shape_cast %321 : vector<16x8xbf16> to vector<1x16x8xbf16>
    %323 = vector.extract_strided_slice %320 {offsets = [0, 8], sizes = [16, 8], strides = [1, 1]} : vector<16x64xbf16> to vector<16x8xbf16>
    %324 = vector.shape_cast %323 : vector<16x8xbf16> to vector<1x16x8xbf16>
    %325 = vector.extract_strided_slice %320 {offsets = [0, 16], sizes = [16, 8], strides = [1, 1]} : vector<16x64xbf16> to vector<16x8xbf16>
    %326 = vector.shape_cast %325 : vector<16x8xbf16> to vector<1x16x8xbf16>
    %327 = vector.extract_strided_slice %320 {offsets = [0, 24], sizes = [16, 8], strides = [1, 1]} : vector<16x64xbf16> to vector<16x8xbf16>
    %328 = vector.shape_cast %327 : vector<16x8xbf16> to vector<1x16x8xbf16>
    %329 = vector.extract_strided_slice %320 {offsets = [0, 32], sizes = [16, 8], strides = [1, 1]} : vector<16x64xbf16> to vector<16x8xbf16>
    %330 = vector.shape_cast %329 : vector<16x8xbf16> to vector<1x16x8xbf16>
    %331 = vector.extract_strided_slice %320 {offsets = [0, 40], sizes = [16, 8], strides = [1, 1]} : vector<16x64xbf16> to vector<16x8xbf16>
    %332 = vector.shape_cast %331 : vector<16x8xbf16> to vector<1x16x8xbf16>
    %333 = vector.extract_strided_slice %320 {offsets = [0, 48], sizes = [16, 8], strides = [1, 1]} : vector<16x64xbf16> to vector<16x8xbf16>
    %334 = vector.shape_cast %333 : vector<16x8xbf16> to vector<1x16x8xbf16>
    %335 = vector.extract_strided_slice %320 {offsets = [0, 56], sizes = [16, 8], strides = [1, 1]} : vector<16x64xbf16> to vector<16x8xbf16>
    %336 = vector.shape_cast %335 : vector<16x8xbf16> to vector<1x16x8xbf16>
    %337 = vector.shape_cast %322 : vector<1x16x8xbf16> to vector<1x1x16x8xbf16>
    %338 = vector.shape_cast %324 : vector<1x16x8xbf16> to vector<1x1x16x8xbf16>
    %339 = vector.shape_cast %326 : vector<1x16x8xbf16> to vector<1x1x16x8xbf16>
    %340 = vector.shape_cast %328 : vector<1x16x8xbf16> to vector<1x1x16x8xbf16>
    %341 = vector.shape_cast %330 : vector<1x16x8xbf16> to vector<1x1x16x8xbf16>
    %342 = vector.shape_cast %332 : vector<1x16x8xbf16> to vector<1x1x16x8xbf16>
    %343 = vector.shape_cast %334 : vector<1x16x8xbf16> to vector<1x1x16x8xbf16>
    %344 = vector.shape_cast %336 : vector<1x16x8xbf16> to vector<1x1x16x8xbf16>
    %345 = tpu.concatenate %337, %338, %339, %340, %341, %342, %343, %344 in 0 : vector<1x1x16x8xbf16>, vector<1x1x16x8xbf16>, vector<1x1x16x8xbf16>, vector<1x1x16x8xbf16>, vector<1x1x16x8xbf16>, vector<1x1x16x8xbf16>, vector<1x1x16x8xbf16>, vector<1x1x16x8xbf16> -> vector<8x1x16x8xbf16>
    %346 = vector.shape_cast %345 : vector<8x1x16x8xbf16> to vector<8x16x8xbf16>
    "tpu.trace_start"() <{level = 10 : i32, message = "bqd,bkd->bqk"}> : () -> ()
    %cst_64 = arith.constant dense<0.000000e+00> : vector<8x16x16xf32>
    %347 = tpu.matmul %292, %319, %cst_64 {dimension_numbers = #tpu.dot_dimension_numbers<[2], [2], [1], [1], [0, 0, 0, 1, 1, 1], [0], [0]>} : vector<8x16x8xbf16>, vector<8x16x8xbf16>, vector<8x16x16xf32> -> vector<8x16x16xf32>
    "tpu.trace_stop"() : () -> ()
    %348 = vector.broadcast %15 : vector<8x1x16xf32> to vector<8x16x16xf32>
    %349 = arith.addf %347, %348 : vector<8x16x16xf32>
    %cst_65 = arith.constant dense<0xFF800000> : vector<8x16xf32>
    %350 = vector.multi_reduction <maximumf>, %349, %cst_65 [2] : vector<8x16x16xf32> to vector<8x16xf32>
    %351 = vector.shape_cast %350 : vector<8x16xf32> to vector<8x16x1xf32>
    %352 = vector.broadcast %351 : vector<8x16x1xf32> to vector<8x16x16xf32>
    %353 = arith.subf %349, %352 : vector<8x16x16xf32>
    %354 = math.exp %353 : vector<8x16x16xf32>
    %cst_66 = arith.constant dense<0.000000e+00> : vector<8x16xf32>
    %355 = vector.multi_reduction <add>, %354, %cst_66 [2] : vector<8x16x16xf32> to vector<8x16xf32>
    %356 = vector.shape_cast %355 : vector<8x16xf32> to vector<8x16x1xf32>
    %357 = tpu.reciprocal %356 {approx = true} : vector<8x16x1xf32> -> vector<8x16x1xf32>
    %358 = vector.broadcast %357 : vector<8x16x1xf32> to vector<8x16x16xf32>
    %359 = arith.mulf %354, %358 : vector<8x16x16xf32>
    %360 = arith.truncf %359 : vector<8x16x16xf32> to vector<8x16x16xbf16>
    "tpu.trace_start"() <{level = 10 : i32, message = "bqk,bkd->bqd"}> : () -> ()
    %cst_67 = arith.constant dense<0.000000e+00> : vector<8x16x8xf32>
    %361 = tpu.matmul %360, %346, %cst_67 {dimension_numbers = #tpu.dot_dimension_numbers<[2], [1], [1], [2], [0, 0, 0, 1, 1, 2], [0], [0]>} : vector<8x16x16xbf16>, vector<8x16x8xbf16>, vector<8x16x8xf32> -> vector<8x16x8xf32>
    "tpu.trace_stop"() : () -> ()
    %362 = vector.shape_cast %361 : vector<8x16x8xf32> to vector<8x1x16x8xf32>
    %363 = vector.extract_strided_slice %362 {offsets = [0, 0, 0, 0], sizes = [1, 1, 16, 8], strides = [1, 1, 1, 1]} : vector<8x1x16x8xf32> to vector<1x1x16x8xf32>
    %364 = vector.shape_cast %363 : vector<1x1x16x8xf32> to vector<1x16x8xf32>
    %365 = vector.extract_strided_slice %362 {offsets = [1, 0, 0, 0], sizes = [1, 1, 16, 8], strides = [1, 1, 1, 1]} : vector<8x1x16x8xf32> to vector<1x1x16x8xf32>
    %366 = vector.shape_cast %365 : vector<1x1x16x8xf32> to vector<1x16x8xf32>
    %367 = vector.extract_strided_slice %362 {offsets = [2, 0, 0, 0], sizes = [1, 1, 16, 8], strides = [1, 1, 1, 1]} : vector<8x1x16x8xf32> to vector<1x1x16x8xf32>
    %368 = vector.shape_cast %367 : vector<1x1x16x8xf32> to vector<1x16x8xf32>
    %369 = vector.extract_strided_slice %362 {offsets = [3, 0, 0, 0], sizes = [1, 1, 16, 8], strides = [1, 1, 1, 1]} : vector<8x1x16x8xf32> to vector<1x1x16x8xf32>
    %370 = vector.shape_cast %369 : vector<1x1x16x8xf32> to vector<1x16x8xf32>
    %371 = vector.extract_strided_slice %362 {offsets = [4, 0, 0, 0], sizes = [1, 1, 16, 8], strides = [1, 1, 1, 1]} : vector<8x1x16x8xf32> to vector<1x1x16x8xf32>
    %372 = vector.shape_cast %371 : vector<1x1x16x8xf32> to vector<1x16x8xf32>
    %373 = vector.extract_strided_slice %362 {offsets = [5, 0, 0, 0], sizes = [1, 1, 16, 8], strides = [1, 1, 1, 1]} : vector<8x1x16x8xf32> to vector<1x1x16x8xf32>
    %374 = vector.shape_cast %373 : vector<1x1x16x8xf32> to vector<1x16x8xf32>
    %375 = vector.extract_strided_slice %362 {offsets = [6, 0, 0, 0], sizes = [1, 1, 16, 8], strides = [1, 1, 1, 1]} : vector<8x1x16x8xf32> to vector<1x1x16x8xf32>
    %376 = vector.shape_cast %375 : vector<1x1x16x8xf32> to vector<1x16x8xf32>
    %377 = vector.extract_strided_slice %362 {offsets = [7, 0, 0, 0], sizes = [1, 1, 16, 8], strides = [1, 1, 1, 1]} : vector<8x1x16x8xf32> to vector<1x1x16x8xf32>
    %378 = vector.shape_cast %377 : vector<1x1x16x8xf32> to vector<1x16x8xf32>
    %379 = tpu.concatenate %364, %366, %368, %370, %372, %374, %376, %378 in 2 : vector<1x16x8xf32>, vector<1x16x8xf32>, vector<1x16x8xf32>, vector<1x16x8xf32>, vector<1x16x8xf32>, vector<1x16x8xf32>, vector<1x16x8xf32>, vector<1x16x8xf32> -> vector<1x16x64xf32>
    %380 = vector.shape_cast %379 : vector<1x16x64xf32> to vector<16x64xf32>
    %381 = arith.truncf %380 : vector<16x64xf32> to vector<16x64xbf16>
    %c1_68 = arith.constant 1 : index
    %c0_69 = arith.constant 0 : index
    %c0_70 = arith.constant 0 : index
    %382 = vector.load %arg5[%c1_68, %c0_69, %c0_70] : memref<2x64x64xbf16, #tpu.memory_space<vmem>>, vector<1x64x64xbf16>
    %383 = vector.shape_cast %382 : vector<1x64x64xbf16> to vector<64x64xbf16>
    %cst_71 = arith.constant dense<0.000000e+00> : vector<16x64xf32>
    %384 = tpu.matmul %381, %383, %cst_71 {dimension_numbers = #tpu.dot_dimension_numbers<[1], [0], [0], [1], [0, 0, 1, 1], [], []>} : vector<16x64xbf16>, vector<64x64xbf16>, vector<16x64xf32> -> vector<16x64xf32>
    %385 = vector.broadcast %244 : vector<1x64xf32> to vector<16x64xf32>
    %386 = arith.addf %384, %385 : vector<16x64xf32>
    %387 = arith.addf %237, %386 : vector<16x64xf32>
    %cst_72 = arith.constant dense<0.000000e+00> : vector<16xf32>
    %388 = vector.multi_reduction <add>, %387, %cst_72 [1] : vector<16x64xf32> to vector<16xf32>
    %389 = vector.shape_cast %388 : vector<16xf32> to vector<16x1xf32>
    %cst_73 = arith.constant 6.400000e+01 : f32
    %390 = vector.broadcast %cst_73 : f32 to vector<16x1xf32>
    %391 = arith.divf %389, %390 : vector<16x1xf32>
    %392 = arith.mulf %387, %387 : vector<16x64xf32>
    %cst_74 = arith.constant dense<0.000000e+00> : vector<16xf32>
    %393 = vector.multi_reduction <add>, %392, %cst_74 [1] : vector<16x64xf32> to vector<16xf32>
    %394 = vector.shape_cast %393 : vector<16xf32> to vector<16x1xf32>
    %cst_75 = arith.constant 6.400000e+01 : f32
    %395 = vector.broadcast %cst_75 : f32 to vector<16x1xf32>
    %396 = arith.divf %394, %395 : vector<16x1xf32>
    %397 = arith.mulf %391, %391 : vector<16x1xf32>
    %398 = arith.subf %396, %397 : vector<16x1xf32>
    %cst_76 = arith.constant 0.000000e+00 : f32
    %399 = vector.broadcast %cst_76 : f32 to vector<16x1xf32>
    %400 = arith.maximumf %398, %399 : vector<16x1xf32>
    %401 = vector.broadcast %391 : vector<16x1xf32> to vector<16x64xf32>
    %402 = arith.subf %387, %401 : vector<16x64xf32>
    %cst_77 = arith.constant 9.99999974E-6 : f32
    %403 = vector.broadcast %cst_77 : f32 to vector<16x1xf32>
    %404 = arith.addf %400, %403 : vector<16x1xf32>
    %405 = math.rsqrt %404 : vector<16x1xf32>
    %406 = vector.broadcast %405 : vector<16x1xf32> to vector<16x64xf32>
    %407 = arith.mulf %402, %406 : vector<16x64xf32>
    %408 = vector.broadcast %245 : vector<1x64xf32> to vector<16x64xf32>
    %409 = arith.mulf %407, %408 : vector<16x64xf32>
    %410 = vector.broadcast %246 : vector<1x64xf32> to vector<16x64xf32>
    %411 = arith.addf %409, %410 : vector<16x64xf32>
    %412 = arith.truncf %411 : vector<16x64xf32> to vector<16x64xbf16>
    %c1_78 = arith.constant 1 : index
    %c0_79 = arith.constant 0 : index
    %c0_80 = arith.constant 0 : index
    %413 = vector.load %arg6[%c1_78, %c0_79, %c0_80] : memref<2x64x256xbf16, #tpu.memory_space<vmem>>, vector<1x64x256xbf16>
    %414 = vector.shape_cast %413 : vector<1x64x256xbf16> to vector<64x256xbf16>
    %cst_81 = arith.constant dense<0.000000e+00> : vector<16x256xf32>
    %415 = tpu.matmul %412, %414, %cst_81 {dimension_numbers = #tpu.dot_dimension_numbers<[1], [0], [0], [1], [0, 0, 1, 1], [], []>} : vector<16x64xbf16>, vector<64x256xbf16>, vector<16x256xf32> -> vector<16x256xf32>
    %416 = vector.broadcast %247 : vector<1x256xf32> to vector<16x256xf32>
    %417 = arith.addf %415, %416 : vector<16x256xf32>
    %cst_82 = arith.constant 0.000000e+00 : f32
    %418 = vector.broadcast %cst_82 : f32 to vector<16x256xf32>
    %419 = arith.maximumf %417, %418 : vector<16x256xf32>
    %420 = arith.truncf %419 : vector<16x256xf32> to vector<16x256xbf16>
    %c1_83 = arith.constant 1 : index
    %c0_84 = arith.constant 0 : index
    %c0_85 = arith.constant 0 : index
    %421 = vector.load %arg7[%c1_83, %c0_84, %c0_85] : memref<2x256x64xbf16, #tpu.memory_space<vmem>>, vector<1x256x64xbf16>
    %422 = vector.shape_cast %421 : vector<1x256x64xbf16> to vector<256x64xbf16>
    %cst_86 = arith.constant dense<0.000000e+00> : vector<16x64xf32>
    %423 = tpu.matmul %420, %422, %cst_86 {dimension_numbers = #tpu.dot_dimension_numbers<[1], [0], [0], [1], [0, 0, 1, 1], [], []>} : vector<16x256xbf16>, vector<256x64xbf16>, vector<16x64xf32> -> vector<16x64xf32>
    %424 = vector.broadcast %248 : vector<1x64xf32> to vector<16x64xf32>
    %425 = arith.addf %423, %424 : vector<16x64xf32>
    %426 = arith.addf %411, %425 : vector<16x64xf32>
    %cst_87 = arith.constant dense<0.000000e+00> : vector<16xf32>
    %427 = vector.multi_reduction <add>, %426, %cst_87 [1] : vector<16x64xf32> to vector<16xf32>
    %428 = vector.shape_cast %427 : vector<16xf32> to vector<16x1xf32>
    %cst_88 = arith.constant 6.400000e+01 : f32
    %429 = vector.broadcast %cst_88 : f32 to vector<16x1xf32>
    %430 = arith.divf %428, %429 : vector<16x1xf32>
    %431 = arith.mulf %426, %426 : vector<16x64xf32>
    %cst_89 = arith.constant dense<0.000000e+00> : vector<16xf32>
    %432 = vector.multi_reduction <add>, %431, %cst_89 [1] : vector<16x64xf32> to vector<16xf32>
    %433 = vector.shape_cast %432 : vector<16xf32> to vector<16x1xf32>
    %cst_90 = arith.constant 6.400000e+01 : f32
    %434 = vector.broadcast %cst_90 : f32 to vector<16x1xf32>
    %435 = arith.divf %433, %434 : vector<16x1xf32>
    %436 = arith.mulf %430, %430 : vector<16x1xf32>
    %437 = arith.subf %435, %436 : vector<16x1xf32>
    %cst_91 = arith.constant 0.000000e+00 : f32
    %438 = vector.broadcast %cst_91 : f32 to vector<16x1xf32>
    %439 = arith.maximumf %437, %438 : vector<16x1xf32>
    %440 = vector.broadcast %430 : vector<16x1xf32> to vector<16x64xf32>
    %441 = arith.subf %426, %440 : vector<16x64xf32>
    %cst_92 = arith.constant 9.99999974E-6 : f32
    %442 = vector.broadcast %cst_92 : f32 to vector<16x1xf32>
    %443 = arith.addf %439, %442 : vector<16x1xf32>
    %444 = math.rsqrt %443 : vector<16x1xf32>
    %445 = vector.broadcast %444 : vector<16x1xf32> to vector<16x64xf32>
    %446 = arith.mulf %441, %445 : vector<16x64xf32>
    %447 = vector.broadcast %249 : vector<1x64xf32> to vector<16x64xf32>
    %448 = arith.mulf %446, %447 : vector<16x64xf32>
    %449 = vector.broadcast %250 : vector<1x64xf32> to vector<16x64xf32>
    %450 = arith.addf %448, %449 : vector<16x64xf32>
    %451 = arith.truncf %450 : vector<16x64xf32> to vector<16x64xbf16>
    %c0_93 = arith.constant 0 : index
    %c0_94 = arith.constant 0 : index
    %452 = vector.load %arg9[%c0_93, %c0_94] : memref<64x8xbf16, #tpu.memory_space<vmem>>, vector<64x8xbf16>
    %cst_95 = arith.constant dense<0.000000e+00> : vector<16x8xf32>
    %453 = tpu.matmul %451, %452, %cst_95 {dimension_numbers = #tpu.dot_dimension_numbers<[1], [0], [0], [1], [0, 0, 1, 1], [], []>} : vector<16x64xbf16>, vector<64x8xbf16>, vector<16x8xf32> -> vector<16x8xf32>
    %c0_96 = arith.constant 0 : index
    %c0_97 = arith.constant 0 : index
    %454 = vector.load %arg10[%c0_96, %c0_97] : memref<1x8xf32, #tpu.memory_space<vmem>>, vector<1x8xf32>
    %455 = vector.broadcast %454 : vector<1x8xf32> to vector<16x8xf32>
    %456 = arith.addf %453, %455 : vector<16x8xf32>
    %457 = vector.shape_cast %456 : vector<16x8xf32> to vector<1x16x8xf32>
    %c0_98 = arith.constant 0 : index
    %c0_99 = arith.constant 0 : index
    %c0_100 = arith.constant 0 : index
    %458 = vector.load %arg11[%c0_98, %c0_99, %c0_100] : memref<1x16x8xf32, #tpu.memory_space<vmem>>, vector<1x16x8xf32>
    tpu.vector_store %arg11[%c0_98, %c0_99, %c0_100], %457 {strides = array<i32>} : memref<1x16x8xf32, #tpu.memory_space<vmem>>, vector<1x16x8xf32>,
    return
  }
  func.func @transform_0(%arg0: i32) -> (i32, i32, i32) {
    %c0_i32 = arith.constant 0 : i32
    %c0_i32_0 = arith.constant 0 : i32
    %c0_i32_1 = arith.constant 0 : i32
    return %arg0, %c0_i32, %c0_i32_0 : i32, i32, i32
  }
  func.func @transform_1(%arg0: i32) -> (i32, i32) {
    %c0_i32 = arith.constant 0 : i32
    %c0_i32_0 = arith.constant 0 : i32
    %c0_i32_1 = arith.constant 0 : i32
    return %c0_i32, %c0_i32_0 : i32, i32
  }
  func.func @transform_2(%arg0: i32) -> (i32, i32) {
    %c0_i32 = arith.constant 0 : i32
    %c0_i32_0 = arith.constant 0 : i32
    %c0_i32_1 = arith.constant 0 : i32
    return %c0_i32, %c0_i32_0 : i32, i32
  }
  func.func @transform_3(%arg0: i32) -> (i32, i32, i32) {
    %c0_i32 = arith.constant 0 : i32
    %c0_i32_0 = arith.constant 0 : i32
    %c0_i32_1 = arith.constant 0 : i32
    %c0_i32_2 = arith.constant 0 : i32
    return %c0_i32, %c0_i32_0, %c0_i32_1 : i32, i32, i32
  }
  func.func @transform_4(%arg0: i32) -> (i32, i32, i32) {
    %c0_i32 = arith.constant 0 : i32
    %c0_i32_0 = arith.constant 0 : i32
    %c0_i32_1 = arith.constant 0 : i32
    %c0_i32_2 = arith.constant 0 : i32
    return %c0_i32, %c0_i32_0, %c0_i32_1 : i32, i32, i32
  }
  func.func @transform_5(%arg0: i32) -> (i32, i32, i32) {
    %c0_i32 = arith.constant 0 : i32
    %c0_i32_0 = arith.constant 0 : i32
    %c0_i32_1 = arith.constant 0 : i32
    %c0_i32_2 = arith.constant 0 : i32
    return %c0_i32, %c0_i32_0, %c0_i32_1 : i32, i32, i32
  }
  func.func @transform_6(%arg0: i32) -> (i32, i32, i32) {
    %c0_i32 = arith.constant 0 : i32
    %c0_i32_0 = arith.constant 0 : i32
    %c0_i32_1 = arith.constant 0 : i32
    %c0_i32_2 = arith.constant 0 : i32
    return %c0_i32, %c0_i32_0, %c0_i32_1 : i32, i32, i32
  }
  func.func @transform_7(%arg0: i32) -> (i32, i32, i32) {
    %c0_i32 = arith.constant 0 : i32
    %c0_i32_0 = arith.constant 0 : i32
    %c0_i32_1 = arith.constant 0 : i32
    %c0_i32_2 = arith.constant 0 : i32
    return %c0_i32, %c0_i32_0, %c0_i32_1 : i32, i32, i32
  }
  func.func @transform_8(%arg0: i32) -> (i32, i32) {
    %c0_i32 = arith.constant 0 : i32
    %c0_i32_0 = arith.constant 0 : i32
    %c0_i32_1 = arith.constant 0 : i32
    return %c0_i32, %c0_i32_0 : i32, i32
  }
  func.func @transform_9(%arg0: i32) -> (i32, i32) {
    %c0_i32 = arith.constant 0 : i32
    %c0_i32_0 = arith.constant 0 : i32
    %c0_i32_1 = arith.constant 0 : i32
    return %c0_i32, %c0_i32_0 : i32, i32
  }
  func.func @transform_10(%arg0: i32) -> (i32, i32, i32) {
    %c0_i32 = arith.constant 0 : i32
    %c0_i32_0 = arith.constant 0 : i32
    %c0_i32_1 = arith.constant 0 : i32
    return %arg0, %c0_i32, %c0_i32_0 : i32, i32, i32
  }
}

</mosaic_0001>

<llo_original>
// kernel: tpu_custom_call.1
$region0: #{tpu_custom_call.1}
  #allocation0 [shape = 'u32[]', space=smem, size = 0x4, offset = 0x4, fixed_abs, tag = 'smem constant byte address 0x4 - core index']
  #allocation1 [shape = 'u32[72,128]{1,0:T(1,128)}', space=vmem, size = 0x9000, scoped, tag = 'internal scratch']
  %s0 = inlined_call_operand.vmem [shape: f32[2,16,8], index: 0, kind: input, shape index: {}]
  %s1 = inlined_call_operand.vmem [shape: f32[16,64], index: 1, kind: input, shape index: {}]
  %s2 = inlined_call_operand.vmem [shape: bf16[8,64], index: 2, kind: input, shape index: {}]
  %s3 = inlined_call_operand.vmem [shape: bf16[6,64,64], index: 3, kind: input, shape index: {}]
  %s4 = inlined_call_operand.vmem [shape: bf16[2,64,64], index: 4, kind: input, shape index: {}]
  %s5 = inlined_call_operand.vmem [shape: bf16[2,64,256], index: 5, kind: input, shape index: {}]
  %s6 = inlined_call_operand.vmem [shape: bf16[2,256,64], index: 6, kind: input, shape index: {}]
  %s7 = inlined_call_operand.vmem [shape: f32[2,8,256], index: 7, kind: input, shape index: {}]
  %s8 = inlined_call_operand.vmem [shape: bf16[64,8], index: 8, kind: input, shape index: {}]
  %s9 = inlined_call_operand.vmem [shape: f32[1,8], index: 9, kind: input, shape index: {}]
  %s10 = inlined_call_operand.vmem [shape: f32[2,16,8], index: 10, kind: output, shape index: {}]
  %s11 = sld [smem:[#allocation0]]
  $region73: #{tpu_custom_call.1} parent=0
    _
  %s13 = ssub.s32 1, %s11
  %s14 = scalar_select 0, %s13, %s11
  loop: start=0, step=1, limit=4
  $region2: #{tpu_custom_call.1} parent=0 // loop_pre_header
    _
  $region3: #{tpu_custom_call.1} parent=0 // loop_header
    %s16 = sphi 0, %s20
    %p17 = scmp.ge.s32.totalorder %s16, 4
    %s26 = sphi 0, %s28
    %s29 = sphi 0, %s26
    %s30 = sphi 0, %s29
    %s46 = sphi 0, %s30
    %s50 = sphi 0, %s50
    %s52 = sphi 0, %s50
    %s53 = sphi 0, %s52
    %s67 = sphi 0, %s53
    %s71 = sphi 0, %s71
    %s73 = sphi 0, %s71
    %s74 = sphi 0, %s73
    %s88 = sphi 0, %s74
    %s92 = sphi 0, %s92
    %s94 = sphi 0, %s92
    %s95 = sphi 0, %s94
    %s109 = sphi 0, %s95
    %s113 = sphi 0, %s113
    %s115 = sphi 0, %s113
    %s116 = sphi 0, %s115
    %s130 = sphi 0, %s116
    %s134 = sphi 0, %s134
    %s136 = sphi 0, %s134
    %s137 = sphi 0, %s136
    %s151 = sphi 0, %s137
    %s155 = sphi 0, %s155
    %s157 = sphi 0, %s155
    %s158 = sphi 0, %s157
    %s172 = sphi 0, %s158
    %s176 = sphi 0, %s176
    %s178 = sphi 0, %s176
    %s179 = sphi 0, %s178
    %s193 = sphi 0, %s179
    %s197 = sphi 0, %s197
    %s199 = sphi 0, %s197
    %s200 = sphi 0, %s199
    %s214 = sphi 0, %s200
    %s218 = sphi 0, %s218
    %s220 = sphi 0, %s218
    %s221 = sphi 0, %s220
    %s235 = sphi 0, %s221
    %s241 = sphi 0, %s243
    %s244 = sphi 0, %s241
    %s245 = sphi 0, %s244
    %s261 = sphi 0, %s245
  $region4: #{tpu_custom_call.1} parent=0 // loop_header_branch
    %19 = sbr.rel (%p17) target = $region8
  $region5: #{tpu_custom_call.1} parent=0 // loop_body
    %s21 = ssub.s32 %s16, 1
    %s22 = ssub.s32 %s16, 2
    %s23 = sadd.s32 %s16, 1
    %s24 = ssub.s32 %s16, %s23
    %p25 = scmp.eq.s32.totalorder %s24, 0
    %s27 = sadd.s32 %s26, 1
    %s28 = scalar_select %p25, %s26, %s27
    %p31 = pneg %p25
    %p32 = scmp.eq.s32.totalorder %s16, 1
    %p33 = por %p31, %p32
    %p34 = scmp.ne.s32.totalorder %s26, %s29
    %p35 = scmp.eq.s32.totalorder %s16, 0
    %p36 = por %p34, %p35
    %p37 = scmp.ne.s32.totalorder %s26, %s29
    %p38 = scmp.eq.s32.totalorder %s21, 1
    %p39 = por %p37, %p38
    %p40 = scmp.ne.s32.totalorder %s29, %s30
    %p41 = scmp.eq.s32.totalorder %s21, 0
    %p42 = por %p40, %p41
    %p43 = scmp.ne.s32.totalorder %s29, %s30
    %p44 = scmp.eq.s32.totalorder %s22, 1
    %p45 = por %p43, %p44
    %p47 = scmp.ne.s32.totalorder %s30, %s46
    %p48 = scmp.eq.s32.totalorder %s22, 0
    %p49 = por %p47, %p48
    %s51 = sadd.s32 %s50, 1
    %p54 = scmp.eq.s32.totalorder %s16, 1
    %p55 = scmp.ne.s32.totalorder %s50, %s52
    %p56 = scmp.eq.s32.totalorder %s16, 0
    %p57 = por %p55, %p56
    %p58 = scmp.ne.s32.totalorder %s50, %s52
    %p59 = scmp.eq.s32.totalorder %s21, 1
    %p60 = por %p58, %p59
    %p61 = scmp.ne.s32.totalorder %s52, %s53
    %p62 = scmp.eq.s32.totalorder %s21, 0
    %p63 = por %p61, %p62
    %p64 = scmp.ne.s32.totalorder %s52, %s53
    %p65 = scmp.eq.s32.totalorder %s22, 1
    %p66 = por %p64, %p65
    %p68 = scmp.ne.s32.totalorder %s53, %s67
    %p69 = scmp.eq.s32.totalorder %s22, 0
    %p70 = por %p68, %p69
    %s72 = sadd.s32 %s71, 1
    %p75 = scmp.eq.s32.totalorder %s16, 1
    %p76 = scmp.ne.s32.totalorder %s71, %s73
    %p77 = scmp.eq.s32.totalorder %s16, 0
    %p78 = por %p76, %p77
    %p79 = scmp.ne.s32.totalorder %s71, %s73
    %p80 = scmp.eq.s32.totalorder %s21, 1
    %p81 = por %p79, %p80
    %p82 = scmp.ne.s32.totalorder %s73, %s74
    %p83 = scmp.eq.s32.totalorder %s21, 0
    %p84 = por %p82, %p83
    %p85 = scmp.ne.s32.totalorder %s73, %s74
    %p86 = scmp.eq.s32.totalorder %s22, 1
    %p87 = por %p85, %p86
    %p89 = scmp.ne.s32.totalorder %s74, %s88
    %p90 = scmp.eq.s32.totalorder %s22, 0
    %p91 = por %p89, %p90
    %s93 = sadd.s32 %s92, 1
    %p96 = scmp.eq.s32.totalorder %s16, 1
    %p97 = scmp.ne.s32.totalorder %s92, %s94
    %p98 = scmp.eq.s32.totalorder %s16, 0
    %p99 = por %p97, %p98
    %p100 = scmp.ne.s32.totalorder %s92, %s94
    %p101 = scmp.eq.s32.totalorder %s21, 1
    %p102 = por %p100, %p101
    %p103 = scmp.ne.s32.totalorder %s94, %s95
    %p104 = scmp.eq.s32.totalorder %s21, 0
    %p105 = por %p103, %p104
    %p106 = scmp.ne.s32.totalorder %s94, %s95
    %p107 = scmp.eq.s32.totalorder %s22, 1
    %p108 = por %p106, %p107
    %p110 = scmp.ne.s32.totalorder %s95, %s109
    %p111 = scmp.eq.s32.totalorder %s22, 0
    %p112 = por %p110, %p111
    %s114 = sadd.s32 %s113, 1
    %p117 = scmp.eq.s32.totalorder %s16, 1
    %p118 = scmp.ne.s32.totalorder %s113, %s115
    %p119 = scmp.eq.s32.totalorder %s16, 0
    %p120 = por %p118, %p119
    %p121 = scmp.ne.s32.totalorder %s113, %s115
    %p122 = scmp.eq.s32.totalorder %s21, 1
    %p123 = por %p121, %p122
    %p124 = scmp.ne.s32.totalorder %s115, %s116
    %p125 = scmp.eq.s32.totalorder %s21, 0
    %p126 = por %p124, %p125
    %p127 = scmp.ne.s32.totalorder %s115, %s116
    %p128 = scmp.eq.s32.totalorder %s22, 1
    %p129 = por %p127, %p128
    %p131 = scmp.ne.s32.totalorder %s116, %s130
    %p132 = scmp.eq.s32.totalorder %s22, 0
    %p133 = por %p131, %p132
    %s135 = sadd.s32 %s134, 1
    %p138 = scmp.eq.s32.totalorder %s16, 1
    %p139 = scmp.ne.s32.totalorder %s134, %s136
    %p140 = scmp.eq.s32.totalorder %s16, 0
    %p141 = por %p139, %p140
    %p142 = scmp.ne.s32.totalorder %s134, %s136
    %p143 = scmp.eq.s32.totalorder %s21, 1
    %p144 = por %p142, %p143
    %p145 = scmp.ne.s32.totalorder %s136, %s137
    %p146 = scmp.eq.s32.totalorder %s21, 0
    %p147 = por %p145, %p146
    %p148 = scmp.ne.s32.totalorder %s136, %s137
    %p149 = scmp.eq.s32.totalorder %s22, 1
    %p150 = por %p148, %p149
    %p152 = scmp.ne.s32.totalorder %s137, %s151
    %p153 = scmp.eq.s32.totalorder %s22, 0
    %p154 = por %p152, %p153
    %s156 = sadd.s32 %s155, 1
    %p159 = scmp.eq.s32.totalorder %s16, 1
    %p160 = scmp.ne.s32.totalorder %s155, %s157
    %p161 = scmp.eq.s32.totalorder %s16, 0
    %p162 = por %p160, %p161
    %p163 = scmp.ne.s32.totalorder %s155, %s157
    %p164 = scmp.eq.s32.totalorder %s21, 1
    %p165 = por %p163, %p164
    %p166 = scmp.ne.s32.totalorder %s157, %s158
    %p167 = scmp.eq.s32.totalorder %s21, 0
    %p168 = por %p166, %p167
    %p169 = scmp.ne.s32.totalorder %s157, %s158
    %p170 = scmp.eq.s32.totalorder %s22, 1
    %p171 = por %p169, %p170
    %p173 = scmp.ne.s32.totalorder %s158, %s172
    %p174 = scmp.eq.s32.totalorder %s22, 0
    %p175 = por %p173, %p174
    %s177 = sadd.s32 %s176, 1
    %p180 = scmp.eq.s32.totalorder %s16, 1
    %p181 = scmp.ne.s32.totalorder %s176, %s178
    %p182 = scmp.eq.s32.totalorder %s16, 0
    %p183 = por %p181, %p182
    %p184 = scmp.ne.s32.totalorder %s176, %s178
    %p185 = scmp.eq.s32.totalorder %s21, 1
    %p186 = por %p184, %p185
    %p187 = scmp.ne.s32.totalorder %s178, %s179
    %p188 = scmp.eq.s32.totalorder %s21, 0
    %p189 = por %p187, %p188
    %p190 = scmp.ne.s32.totalorder %s178, %s179
    %p191 = scmp.eq.s32.totalorder %s22, 1
    %p192 = por %p190, %p191
    %p194 = scmp.ne.s32.totalorder %s179, %s193
    %p195 = scmp.eq.s32.totalorder %s22, 0
    %p196 = por %p194, %p195
    %s198 = sadd.s32 %s197, 1
    %p201 = scmp.eq.s32.totalorder %s16, 1
    %p202 = scmp.ne.s32.totalorder %s197, %s199
    %p203 = scmp.eq.s32.totalorder %s16, 0
    %p204 = por %p202, %p203
    %p205 = scmp.ne.s32.totalorder %s197, %s199
    %p206 = scmp.eq.s32.totalorder %s21, 1
    %p207 = por %p205, %p206
    %p208 = scmp.ne.s32.totalorder %s199, %s200
    %p209 = scmp.eq.s32.totalorder %s21, 0
    %p210 = por %p208, %p209
    %p211 = scmp.ne.s32.totalorder %s199, %s200
    %p212 = scmp.eq.s32.totalorder %s22, 1
    %p213 = por %p211, %p212
    %p215 = scmp.ne.s32.totalorder %s200, %s214
    %p216 = scmp.eq.s32.totalorder %s22, 0
    %p217 = por %p215, %p216
    %s219 = sadd.s32 %s218, 1
    %p222 = scmp.eq.s32.totalorder %s16, 1
    %p223 = scmp.ne.s32.totalorder %s218, %s220
    %p224 = scmp.eq.s32.totalorder %s16, 0
    %p225 = por %p223, %p224
    %p226 = scmp.ne.s32.totalorder %s218, %s220
    %p227 = scmp.eq.s32.totalorder %s21, 1
    %p228 = por %p226, %p227
    %p229 = scmp.ne.s32.totalorder %s220, %s221
    %p230 = scmp.eq.s32.totalorder %s21, 0
    %p231 = por %p229, %p230
    %p232 = scmp.ne.s32.totalorder %s220, %s221
    %p233 = scmp.eq.s32.totalorder %s22, 1
    %p234 = por %p232, %p233
    %p236 = scmp.ne.s32.totalorder %s221, %s235
    %p237 = scmp.eq.s32.totalorder %s22, 0
    %p238 = por %p236, %p237
    %s239 = ssub.s32 %s16, %s23
    %p240 = scmp.eq.s32.totalorder %s239, 0
    %s242 = sadd.s32 %s241, 1
    %s243 = scalar_select %p240, %s241, %s242
    %p246 = pneg %p240
    %p247 = scmp.eq.s32.totalorder %s16, 1
    %p248 = por %p246, %p247
    %p249 = scmp.ne.s32.totalorder %s241, %s244
    %p250 = scmp.eq.s32.totalorder %s16, 0
    %p251 = por %p249, %p250
    %p252 = scmp.ne.s32.totalorder %s241, %s244
    %p253 = scmp.eq.s32.totalorder %s21, 1
    %p254 = por %p252, %p253
    %p255 = scmp.ne.s32.totalorder %s244, %s245
    %p256 = scmp.eq.s32.totalorder %s21, 0
    %p257 = por %p255, %p256
    %p258 = scmp.ne.s32.totalorder %s244, %s245
    %p259 = scmp.eq.s32.totalorder %s22, 1
    %p260 = por %p258, %p259
    %p262 = scmp.ne.s32.totalorder %s245, %s261
    %p263 = scmp.eq.s32.totalorder %s22, 0
    %p264 = por %p262, %p263
    %p265 = scmp.le.s32.totalorder 1, %s16
    %p266 = scmp.lt.s32.totalorder %s16, 3
    %p267 = pnand %p265, %p266
    %p268 = pneg %p267
    // Predicated region
    $region9: #{tpu_custom_call.1} parent=5 // pred_check
      _
    $region10: #{tpu_custom_call.1} parent=5 // pred_check_branch
      %270 = sbr.rel (%p267) target = $region12
    $region11: #{tpu_custom_call.1} parent=5 // pred_region
      %s271 = ssub.s32 %s16, 1
      // Predicated region
      $region13: #{tpu_custom_call.1} parent=11 // pred_check
        %p272 = pneg %p63
      $region14: #{tpu_custom_call.1} parent=11 // pred_check_branch
        %274 = sbr.rel (%p272) target = $region16
      $region15: #{tpu_custom_call.1} parent=11 // pred_region
        _
      $region16: #{tpu_custom_call.1} parent=11 // pred_fallthru
        _
      // Predicated region
      $region17: #{tpu_custom_call.1} parent=11 // pred_check
        %p275 = pneg %p84
      $region18: #{tpu_custom_call.1} parent=11 // pred_check_branch
        %277 = sbr.rel (%p275) target = $region20
      $region19: #{tpu_custom_call.1} parent=11 // pred_region
        _
      $region20: #{tpu_custom_call.1} parent=11 // pred_fallthru
        _
      // Predicated region
      $region21: #{tpu_custom_call.1} parent=11 // pred_check
        %p278 = pneg %p105
      $region22: #{tpu_custom_call.1} parent=11 // pred_check_branch
        %280 = sbr.rel (%p278) target = $region24
      $region23: #{tpu_custom_call.1} parent=11 // pred_region
        _
      $region24: #{tpu_custom_call.1} parent=11 // pred_fallthru
        _
      // Predicated region
      $region25: #{tpu_custom_call.1} parent=11 // pred_check
        %p281 = pneg %p126
      $region26: #{tpu_custom_call.1} parent=11 // pred_check_branch
        %283 = sbr.rel (%p281) target = $region28
      $region27: #{tpu_custom_call.1} parent=11 // pred_region
        _
      $region28: #{tpu_custom_call.1} parent=11 // pred_fallthru
        _
      // Predicated region
      $region29: #{tpu_custom_call.1} parent=11 // pred_check
        %p284 = pneg %p147
      $region30: #{tpu_custom_call.1} parent=11 // pred_check_branch
        %286 = sbr.rel (%p284) target = $region32
      $region31: #{tpu_custom_call.1} parent=11 // pred_region
        _
      $region32: #{tpu_custom_call.1} parent=11 // pred_fallthru
        _
      // Predicated region
      $region33: #{tpu_custom_call.1} parent=11 // pred_check
        %p287 = pneg %p168
      $region34: #{tpu_custom_call.1} parent=11 // pred_check_branch
        %289 = sbr.rel (%p287) target = $region36
      $region35: #{tpu_custom_call.1} parent=11 // pred_region
        _
      $region36: #{tpu_custom_call.1} parent=11 // pred_fallthru
        _
      // Predicated region
      $region37: #{tpu_custom_call.1} parent=11 // pred_check
        %p290 = pneg %p189
      $region38: #{tpu_custom_call.1} parent=11 // pred_check_branch
        %292 = sbr.rel (%p290) target = $region40
      $region39: #{tpu_custom_call.1} parent=11 // pred_region
        _
      $region40: #{tpu_custom_call.1} parent=11 // pred_fallthru
        _
      // Predicated region
      $region41: #{tpu_custom_call.1} parent=11 // pred_check
        %p293 = pneg %p210
      $region42: #{tpu_custom_call.1} parent=11 // pred_check_branch
        %295 = sbr.rel (%p293) target = $region44
      $region43: #{tpu_custom_call.1} parent=11 // pred_region
        _
      $region44: #{tpu_custom_call.1} parent=11 // pred_fallthru
        _
      // Predicated region
      $region45: #{tpu_custom_call.1} parent=11 // pred_check
        %p296 = pneg %p231
      $region46: #{tpu_custom_call.1} parent=11 // pred_check_branch
        %298 = sbr.rel (%p296) target = $region48
      $region47: #{tpu_custom_call.1} parent=11 // pred_region
        _
      $region48: #{tpu_custom_call.1} parent=11 // pred_fallthru
        _
    $region12: #{tpu_custom_call.1} parent=5 // pred_fallthru
      _
    %p299 = scmp.lt.s32.totalorder %s16, 2
    // Predicated region
    $region49: #{tpu_custom_call.1} parent=5 // pred_check
      %p300 = pneg %p299
    $region50: #{tpu_custom_call.1} parent=5 // pred_check_branch
      %302 = sbr.rel (%p300) target = $region52
    $region51: #{tpu_custom_call.1} parent=5 // pred_region
      // Predicated region
      $region53: #{tpu_custom_call.1} parent=51 // pred_check
        %p303 = pneg %p36
      $region54: #{tpu_custom_call.1} parent=51 // pred_check_branch
        %305 = sbr.rel (%p303) target = $region56
      $region55: #{tpu_custom_call.1} parent=51 // pred_region
        %p306 = scmp.lt.s32.totalorder %s16, 1
        %s307 = scalar_select %p306, %s16, 1
        %s308 = smul.addr %s307, 2
        %s309 = smul.addr %s308, 8
        %s310 = scalar_lea.vmem %s0, %s309
      $region56: #{tpu_custom_call.1} parent=51 // pred_fallthru
        _
    $region52: #{tpu_custom_call.1} parent=5 // pred_fallthru
      _
    %p311 = scmp.le.s32.totalorder 1, %s16
    %p312 = scmp.lt.s32.totalorder %s16, 3
    %p313 = pnand %p311, %p312
    %p314 = pneg %p313
    // Predicated region
    $region57: #{tpu_custom_call.1} parent=5 // pred_check
      _
    $region58: #{tpu_custom_call.1} parent=5 // pred_check_branch
      %316 = sbr.rel (%p313) target = $region60
    $region59: #{tpu_custom_call.1} parent=5 // pred_region
      %s317 = ssub.s32 %s16, 1
      %p318 = scmp.lt.s32.totalorder %s21, 1
      %s319 = scalar_select %p318, %s21, 1
      %s320 = smul.addr %s319, 2
      %s321 = smul.addr %s320, 8
      %s322 = scalar_lea.vmem %s0, %s321
      %p323 = pneg %p42
      %p324 = pneg %p39
      %p325 = pneg %p63
      %p326 = pneg %p60
      %p327 = pneg %p84
      %p328 = pneg %p81
      %p329 = pneg %p105
      %p330 = pneg %p102
      %p331 = pneg %p126
      %p332 = pneg %p123
      %p333 = pneg %p147
      %p334 = pneg %p144
      %p335 = pneg %p168
      %p336 = pneg %p165
      %p337 = pneg %p189
      %p338 = pneg %p186
      %p339 = pneg %p210
      %p340 = pneg %p207
      %p341 = pneg %p231
      %p342 = pneg %p228
      %p343 = pneg %p257
      %p344 = pneg %p254
      %p345 = scmp.lt.s32.totalorder %s21, 1
      %s346 = scalar_select %p345, %s21, 1
      %s347 = smul.addr %s346, 2
      %s348 = smul.addr %s347, 8
      %s349 = scalar_lea.vmem %s10, %s348
      %p350 = scmp.lt.s32.totalorder %s21, 1
      %s351 = scalar_select %p350, %s21, 1
      %s352 = smul.addr %s351, 2
      %s353 = smul.addr %s352, 8
      %s354 = scalar_lea.vmem %s0, %s353
      %p355 = scmp.lt.s32.totalorder %s21, 1
      %s356 = scalar_select %p355, %s21, 1
      %s357 = smul.addr %s356, 2
      %s358 = smul.addr %s357, 8
      %s359 = scalar_lea.vmem %s10, %s358
      %v361 = vld [vmem:[%s354] sm:$0xff]
      %v362 = vld [vmem:[%s354 + $0x8] sm:$0xff]
      %v363 = vand.u32 2147483647, %v361
      %v364 = vand.u32 2147483647, %v362
      %vm365 = vcmask 64512
      %v366 = vsel %vm365, %v363, -inf
      %367 = vmax.xlane.f32.xlu0 %v366
      %v368 = vpop.xlane.xlu0 %367
      %v369 = vsel %vm365, %v364, -inf
      %370 = vmax.xlane.f32.xlu0 %v369
      %v371 = vpop.xlane.xlu0 %370
      %v372 = vlaneseq
      %v373 = vand.u32 %v372, 127
      %vm374 = vcmp.eq.f32.partialorder %v368, 0.0
      %vm375 = vcmp.eq.f32.partialorder %v371, 0.0
      %vm376 = vcmp.ne.s32.totalorder %v373, 8
      %v377 = vsel %vm376, 1, 0
      %v378 = vlaneseq
      %v379 = vshrl.u32 %v378, 7
      %381 = vset.pattern.permute.xlu0 %v379
      %382 = vperm.xlu0 %381, %v377
      %v383 = vpop.permute.xlu0 %382
      %v384 = vlaneseq
      %v385 = vshrl.u32 %v384, 7
      %v386 = vadd.s32 %v385, 8
      %387 = vset.pattern.permute.xlu0 %v386
      %388 = vperm.xlu0 %387, %v377
      %v389 = vpop.permute.xlu0 %388
      %vm390 = vcmp.ne.s32.totalorder %v383, 0
      %vm391 = vcmp.ne.s32.totalorder %v389, 0
      %vm392 = vmand %vm374, %vm390
      %vm393 = vmand %vm375, %vm391
      %v394 = vsel %vm392, -1e+30, 0.0
      %v395 = vsel %vm393, -1e+30, 0.0
      %v396 = vpack.c.bf16 %v362, %v361
      %v397 = vld [vmem:[%s2] sm:$0xf]
      %v399 = vsel %vm365, %v396, 0
      %vm401 = vcmask 1043456
      %v403 = vsel %vm401, %v397, 0
      %405 = vmatpush.bf16.msra.mxu0 0
      %406 = vmatpush.bf16.msra.mxu0 0
      %407 = vmatpush.bf16.msra.mxu0 0
      %408 = vmatpush.bf16.msra.mxu0 0
      %409 = vmatpush.bf16.msra.mxu0 0
      %410 = vmatpush.bf16.msra.mxu0 0
      %411 = vmatpush.bf16.msra.mxu0 0
      %412 = vmatpush.bf16.msra.mxu0 %v403
      %413 = vmatmul.bf16.gmra.mxu0 %v399
      %v414 = vpop.f32.mrf.mxu0
      %v415 = vadd.f32 0.0, %v414
      %v416 = vpop.f32.mrf.mxu0
      %v417 = vadd.f32 0.0, %v416
      %418 = vdwg.mxu0
      %v419 = vld [vmem:[%s1] sm:$0xff]
      %v420 = vld [vmem:[%s1 + $0x8] sm:$0xff]
      %v421 = vadd.f32 %v415, %v419
      %v422 = vadd.f32 %v417, %v420
      %v423 = vpack.c.bf16 %v422, %v421
      %v424 = vld [vmem:[%s7] sm:$0xff]
      %v425 = vld [vmem:[%s7 + $0x8] sm:$0xff]
      %v426 = vld [vmem:[%s3] sm:$0xf]
      %v427 = vld [vmem:[%s3 + $0x4] sm:$0xf]
      %v428 = vld [vmem:[%s3 + $0x8] sm:$0xf]
      %v429 = vld [vmem:[%s3 + $0xc] sm:$0xf]
      %v430 = vld [vmem:[%s3 + $0x10] sm:$0xf]
      %v431 = vld [vmem:[%s3 + $0x14] sm:$0xf]
      %v432 = vld [vmem:[%s3 + $0x18] sm:$0xf]
      %v433 = vld [vmem:[%s3 + $0x1c] sm:$0xf]
      %v434 = vperm.slane %v424, 0
      %v443 = vunpack.c.l.b16 %v426
      %v444 = vunpack.c.l.b16 %v427
      %v445 = vunpack.c.l.b16 %v428
      %v446 = vunpack.c.l.b16 %v429
      %v447 = vunpack.c.l.b16 %v430
      %v448 = vunpack.c.l.b16 %v431
      %v449 = vunpack.c.l.b16 %v432
      %v450 = vunpack.c.l.b16 %v433
      %v451 = vpack.c.b16 %v444, %v443
      %v452 = vpack.c.b16 %v446, %v445
      %v453 = vpack.c.b16 %v448, %v447
      %v454 = vpack.c.b16 %v450, %v449
      %vm459 = vcmask 523264
      %v461 = vsel %vm459, %v423, 0
      %463 = vmatpush.bf16.msra.mxu0 0
      %464 = vmatpush.bf16.msra.mxu0 0
      %465 = vmatpush.bf16.msra.mxu0 0
      %466 = vmatpush.bf16.msra.mxu0 0
      %467 = vmatpush.bf16.msra.mxu0 %v454
      %468 = vmatpush.bf16.msra.mxu0 %v453
      %469 = vmatpush.bf16.msra.mxu0 %v452
      %470 = vmatpush.bf16.msra.mxu0 %v451
      %471 = vmatmul.bf16.gmra.mxu0 %v461
      %v472 = vpop.f32.mrf.mxu0
      %v473 = vadd.f32 %v434, %v472
      %v474 = vpop.f32.mrf.mxu0
      %v475 = vadd.f32 %v434, %v474
      %476 = vdwg.mxu0
      %s477 = scalar_lea.vmem %s3, 32
      %v478 = vld [vmem:[%s477] sm:$0xf]
      %v479 = vld [vmem:[%s477 + $0x4] sm:$0xf]
      %v480 = vld [vmem:[%s477 + $0x8] sm:$0xf]
      %v481 = vld [vmem:[%s477 + $0xc] sm:$0xf]
      %v482 = vld [vmem:[%s477 + $0x10] sm:$0xf]
      %v483 = vld [vmem:[%s477 + $0x14] sm:$0xf]
      %v484 = vld [vmem:[%s477 + $0x18] sm:$0xf]
      %v485 = vld [vmem:[%s477 + $0x1c] sm:$0xf]
      %v494 = vunpack.c.l.b16 %v478
      %v495 = vunpack.c.l.b16 %v479
      %v496 = vunpack.c.l.b16 %v480
      %v497 = vunpack.c.l.b16 %v481
      %v498 = vunpack.c.l.b16 %v482
      %v499 = vunpack.c.l.b16 %v483
      %v500 = vunpack.c.l.b16 %v484
      %v501 = vunpack.c.l.b16 %v485
      %v502 = vpack.c.b16 %v495, %v494
      %v503 = vpack.c.b16 %v497, %v496
      %v504 = vpack.c.b16 %v499, %v498
      %v505 = vpack.c.b16 %v501, %v500
      %511 = vrot.lane.b32.xlu0 %v434, 64
      %v512 = vpop.permute.xlu0 %511
      %514 = vmatpush.bf16.msra.mxu0 0
      %515 = vmatpush.bf16.msra.mxu0 0
      %516 = vmatpush.bf16.msra.mxu0 0
      %517 = vmatpush.bf16.msra.mxu0 0
      %518 = vmatpush.bf16.msra.mxu0 %v505
      %519 = vmatpush.bf16.msra.mxu0 %v504
      %520 = vmatpush.bf16.msra.mxu0 %v503
      %521 = vmatpush.bf16.msra.mxu0 %v502
      %522 = vmatmul.bf16.gmra.mxu0 %v461
      %v523 = vpop.f32.mrf.mxu0
      %v524 = vadd.f32 %v512, %v523
      %v525 = vpop.f32.mrf.mxu0
      %v526 = vadd.f32 %v512, %v525
      %527 = vdwg.mxu0
      %s528 = scalar_lea.vmem %s3, 64
      %v529 = vld [vmem:[%s528] sm:$0xf]
      %v530 = vld [vmem:[%s528 + $0x4] sm:$0xf]
      %v531 = vld [vmem:[%s528 + $0x8] sm:$0xf]
      %v532 = vld [vmem:[%s528 + $0xc] sm:$0xf]
      %v533 = vld [vmem:[%s528 + $0x10] sm:$0xf]
      %v534 = vld [vmem:[%s528 + $0x14] sm:$0xf]
      %v535 = vld [vmem:[%s528 + $0x18] sm:$0xf]
      %v536 = vld [vmem:[%s528 + $0x1c] sm:$0xf]
      %v537 = vperm.slane %v425, 0
      %v546 = vunpack.c.l.b16 %v529
      %v547 = vunpack.c.l.b16 %v530
      %v548 = vunpack.c.l.b16 %v531
      %v549 = vunpack.c.l.b16 %v532
      %v550 = vunpack.c.l.b16 %v533
      %v551 = vunpack.c.l.b16 %v534
      %v552 = vunpack.c.l.b16 %v535
      %v553 = vunpack.c.l.b16 %v536
      %v554 = vpack.c.b16 %v547, %v546
      %v555 = vpack.c.b16 %v549, %v548
      %v556 = vpack.c.b16 %v551, %v550
      %v557 = vpack.c.b16 %v553, %v552
      %562 = vmatpush.bf16.msra.mxu0 0
      %563 = vmatpush.bf16.msra.mxu0 0
      %564 = vmatpush.bf16.msra.mxu0 0
      %565 = vmatpush.bf16.msra.mxu0 0
      %566 = vmatpush.bf16.msra.mxu0 %v557
      %567 = vmatpush.bf16.msra.mxu0 %v556
      %568 = vmatpush.bf16.msra.mxu0 %v555
      %569 = vmatpush.bf16.msra.mxu0 %v554
      %570 = vmatmul.bf16.gmra.mxu0 %v461
      %v571 = vpop.f32.mrf.mxu0
      %v572 = vadd.f32 %v537, %v571
      %v573 = vpop.f32.mrf.mxu0
      %v574 = vadd.f32 %v537, %v573
      %575 = vdwg.mxu0
      %v576 = vpack.c.bf16 %v473, %v473
      %v577 = vpack.c.bf16 %v475, %v475
      %580 = vrot.lane.b32.xlu0 %v576, 120
      %v581 = vpop.permute.xlu0 %580
      %582 = vrot.lane.b32.xlu0 %v577, 120
      %v583 = vpop.permute.xlu0 %582
      %584 = vrot.lane.b32.xlu0 %v576, 112
      %v585 = vpop.permute.xlu0 %584
      %586 = vrot.lane.b32.xlu0 %v577, 112
      %v587 = vpop.permute.xlu0 %586
      %588 = vrot.lane.b32.xlu0 %v576, 104
      %v589 = vpop.permute.xlu0 %588
      %590 = vrot.lane.b32.xlu0 %v577, 104
      %v591 = vpop.permute.xlu0 %590
      %592 = vrot.lane.b32.xlu0 %v576, 96
      %v593 = vpop.permute.xlu0 %592
      %594 = vrot.lane.b32.xlu0 %v577, 96
      %v595 = vpop.permute.xlu0 %594
      %596 = vrot.lane.b32.xlu0 %v576, 88
      %v597 = vpop.permute.xlu0 %596
      %598 = vrot.lane.b32.xlu0 %v577, 88
      %v599 = vpop.permute.xlu0 %598
      %600 = vrot.lane.b32.xlu0 %v576, 80
      %v601 = vpop.permute.xlu0 %600
      %602 = vrot.lane.b32.xlu0 %v577, 80
      %v603 = vpop.permute.xlu0 %602
      %604 = vrot.lane.b32.xlu0 %v576, 72
      %v605 = vpop.permute.xlu0 %604
      %606 = vrot.lane.b32.xlu0 %v577, 72
      %v607 = vpop.permute.xlu0 %606
      %v608 = vpack.c.bf16 %v524, %v524
      %v609 = vpack.c.bf16 %v526, %v526
      %612 = vrot.lane.b32.xlu0 %v608, 120
      %v613 = vpop.permute.xlu0 %612
      %614 = vrot.lane.b32.xlu0 %v609, 120
      %v615 = vpop.permute.xlu0 %614
      %616 = vrot.lane.b32.xlu0 %v608, 112
      %v617 = vpop.permute.xlu0 %616
      %618 = vrot.lane.b32.xlu0 %v609, 112
      %v619 = vpop.permute.xlu0 %618
      %620 = vrot.lane.b32.xlu0 %v608, 104
      %v621 = vpop.permute.xlu0 %620
      %622 = vrot.lane.b32.xlu0 %v609, 104
      %v623 = vpop.permute.xlu0 %622
      %624 = vrot.lane.b32.xlu0 %v608, 96
      %v625 = vpop.permute.xlu0 %624
      %626 = vrot.lane.b32.xlu0 %v609, 96
      %v627 = vpop.permute.xlu0 %626
      %628 = vrot.lane.b32.xlu0 %v608, 88
      %v629 = vpop.permute.xlu0 %628
      %630 = vrot.lane.b32.xlu0 %v609, 88
      %v631 = vpop.permute.xlu0 %630
      %632 = vrot.lane.b32.xlu0 %v608, 80
      %v633 = vpop.permute.xlu0 %632
      %634 = vrot.lane.b32.xlu0 %v609, 80
      %v635 = vpop.permute.xlu0 %634
      %636 = vrot.lane.b32.xlu0 %v608, 72
      %v637 = vpop.permute.xlu0 %636
      %638 = vrot.lane.b32.xlu0 %v609, 72
      %v639 = vpop.permute.xlu0 %638
      %v640 = vpack.c.bf16 %v572, %v572
      %v641 = vpack.c.bf16 %v574, %v574
      %644 = vrot.lane.b32.xlu0 %v640, 120
      %v645 = vpop.permute.xlu0 %644
      %646 = vrot.lane.b32.xlu0 %v641, 120
      %v647 = vpop.permute.xlu0 %646
      %648 = vrot.lane.b32.xlu0 %v640, 112
      %v649 = vpop.permute.xlu0 %648
      %650 = vrot.lane.b32.xlu0 %v641, 112
      %v651 = vpop.permute.xlu0 %650
      %652 = vrot.lane.b32.xlu0 %v640, 104
      %v653 = vpop.permute.xlu0 %652
      %654 = vrot.lane.b32.xlu0 %v641, 104
      %v655 = vpop.permute.xlu0 %654
      %656 = vrot.lane.b32.xlu0 %v640, 96
      %v657 = vpop.permute.xlu0 %656
      %658 = vrot.lane.b32.xlu0 %v641, 96
      %v659 = vpop.permute.xlu0 %658
      %660 = vrot.lane.b32.xlu0 %v640, 88
      %v661 = vpop.permute.xlu0 %660
      %662 = vrot.lane.b32.xlu0 %v641, 88
      %v663 = vpop.permute.xlu0 %662
      %664 = vrot.lane.b32.xlu0 %v640, 80
      %v665 = vpop.permute.xlu0 %664
      %666 = vrot.lane.b32.xlu0 %v641, 80
      %v667 = vpop.permute.xlu0 %666
      %668 = vrot.lane.b32.xlu0 %v640, 72
      %v669 = vpop.permute.xlu0 %668
      %670 = vrot.lane.b32.xlu0 %v641, 72
      %v671 = vpop.permute.xlu0 %670
      %v672 = vunpack.c.l.b16 %v576
      %v673 = vunpack.c.l.b16 %v577
      %v674 = vpack.c.b16 %v673, %v672
      %v675 = vunpack.c.l.b16 %v608
      %v676 = vunpack.c.l.b16 %v609
      %v677 = vpack.c.b16 %v676, %v675
      %680 = vset.pattern.permute.xlu0 0
      %681 = vperm.xlu0 %680, %v394
      %v682 = vpop.permute.xlu0 %681
      %683 = vset.pattern.permute.xlu0 0
      %684 = vperm.xlu0 %683, %v395
      %v685 = vpop.permute.xlu0 %684
      %v686 = vperm.slane %v682, %v373
      %v687 = vadd.s32 %v373, 4294967288
      %v688 = vperm.slane %v685, %v687
      %vm689 = vcmask 130112
      %v690 = vsel %vm689, %v688, %v686
      %vm691 = vcmask 1042434
      %v692 = vsel %vm691, %v690, %v690
      %vm693 = vcmask 1043459
      %v694 = vsel %vm693, %v690, %v692
      %vm695 = vcmask 1044484
      %v696 = vsel %vm695, %v690, %v694
      %vm697 = vcmask 1045509
      %v698 = vsel %vm697, %v690, %v696
      %vm699 = vcmask 1046534
      %v700 = vsel %vm699, %v690, %v698
      %vm701 = vcmask 1047559
      %v702 = vsel %vm701, %v690, %v700
      %v705 = vsel %vm365, %v674, 0
      %v708 = vsel %vm365, %v677, 0
      %710 = vmatpush.bf16.xpose.msra.mxu0 0
      %711 = vmatpush.bf16.xpose.msra.mxu0 0
      %712 = vmatpush.bf16.xpose.msra.mxu0 0
      %713 = vmatpush.bf16.xpose.msra.mxu0 0
      %714 = vmatpush.bf16.xpose.msra.mxu0 0
      %715 = vmatpush.bf16.xpose.msra.mxu0 0
      %716 = vmatpush.bf16.xpose.msra.mxu0 0
      %717 = vmatpush.bf16.xpose.msra.mxu0 %v708
      %718 = vmatmul.bf16.gmra.mxu0 %v705
      %v719 = vpop.f32.mrf.mxu0
      %v720 = vadd.f32 %v702, %v719
      %v721 = vpop.f32.mrf.mxu0
      %v722 = vadd.f32 %v702, %v721
      %723 = vdwg.mxu0
      %v724 = vunpack.c.l.b16 %v581
      %v725 = vunpack.c.l.b16 %v583
      %v726 = vpack.c.b16 %v725, %v724
      %v727 = vunpack.c.l.b16 %v613
      %v728 = vunpack.c.l.b16 %v615
      %v729 = vpack.c.b16 %v728, %v727
      %v731 = vsel %vm365, %v726, 0
      %v734 = vsel %vm365, %v729, 0
      %736 = vmatpush.bf16.xpose.msra.mxu0 0
      %737 = vmatpush.bf16.xpose.msra.mxu0 0
      %738 = vmatpush.bf16.xpose.msra.mxu0 0
      %739 = vmatpush.bf16.xpose.msra.mxu0 0
      %740 = vmatpush.bf16.xpose.msra.mxu0 0
      %741 = vmatpush.bf16.xpose.msra.mxu0 0
      %742 = vmatpush.bf16.xpose.msra.mxu0 0
      %743 = vmatpush.bf16.xpose.msra.mxu0 %v734
      %744 = vmatmul.bf16.gmra.mxu0 %v731
      %v745 = vpop.f32.mrf.mxu0
      %v746 = vadd.f32 %v702, %v745
      %v747 = vpop.f32.mrf.mxu0
      %v748 = vadd.f32 %v702, %v747
      %749 = vdwg.mxu0
      %v750 = vunpack.c.l.b16 %v585
      %v751 = vunpack.c.l.b16 %v587
      %v752 = vpack.c.b16 %v751, %v750
      %v753 = vunpack.c.l.b16 %v617
      %v754 = vunpack.c.l.b16 %v619
      %v755 = vpack.c.b16 %v754, %v753
      %v757 = vsel %vm365, %v752, 0
      %v760 = vsel %vm365, %v755, 0
      %762 = vmatpush.bf16.xpose.msra.mxu0 0
      %763 = vmatpush.bf16.xpose.msra.mxu0 0
      %764 = vmatpush.bf16.xpose.msra.mxu0 0
      %765 = vmatpush.bf16.xpose.msra.mxu0 0
      %766 = vmatpush.bf16.xpose.msra.mxu0 0
      %767 = vmatpush.bf16.xpose.msra.mxu0 0
      %768 = vmatpush.bf16.xpose.msra.mxu0 0
      %769 = vmatpush.bf16.xpose.msra.mxu0 %v760
      %770 = vmatmul.bf16.gmra.mxu0 %v757
      %v771 = vpop.f32.mrf.mxu0
      %v772 = vadd.f32 %v702, %v771
      %v773 = vpop.f32.mrf.mxu0
      %v774 = vadd.f32 %v702, %v773
      %775 = vdwg.mxu0
      %v776 = vunpack.c.l.b16 %v589
      %v777 = vunpack.c.l.b16 %v591
      %v778 = vpack.c.b16 %v777, %v776
      %v779 = vunpack.c.l.b16 %v621
      %v780 = vunpack.c.l.b16 %v623
      %v781 = vpack.c.b16 %v780, %v779
      %v783 = vsel %vm365, %v778, 0
      %v786 = vsel %vm365, %v781, 0
      %788 = vmatpush.bf16.xpose.msra.mxu0 0
      %789 = vmatpush.bf16.xpose.msra.mxu0 0
      %790 = vmatpush.bf16.xpose.msra.mxu0 0
      %791 = vmatpush.bf16.xpose.msra.mxu0 0
      %792 = vmatpush.bf16.xpose.msra.mxu0 0
      %793 = vmatpush.bf16.xpose.msra.mxu0 0
      %794 = vmatpush.bf16.xpose.msra.mxu0 0
      %795 = vmatpush.bf16.xpose.msra.mxu0 %v786
      %796 = vmatmul.bf16.gmra.mxu0 %v783
      %v797 = vpop.f32.mrf.mxu0
      %v798 = vadd.f32 %v702, %v797
      %v799 = vpop.f32.mrf.mxu0
      %v800 = vadd.f32 %v702, %v799
      %801 = vdwg.mxu0
      %v802 = vunpack.c.l.b16 %v593
      %v803 = vunpack.c.l.b16 %v595
      %v804 = vpack.c.b16 %v803, %v802
      %v805 = vunpack.c.l.b16 %v625
      %v806 = vunpack.c.l.b16 %v627
      %v807 = vpack.c.b16 %v806, %v805
      %v809 = vsel %vm365, %v804, 0
      %v812 = vsel %vm365, %v807, 0
      %814 = vmatpush.bf16.xpose.msra.mxu0 0
      %815 = vmatpush.bf16.xpose.msra.mxu0 0
      %816 = vmatpush.bf16.xpose.msra.mxu0 0
      %817 = vmatpush.bf16.xpose.msra.mxu0 0
      %818 = vmatpush.bf16.xpose.msra.mxu0 0
      %819 = vmatpush.bf16.xpose.msra.mxu0 0
      %820 = vmatpush.bf16.xpose.msra.mxu0 0
      %821 = vmatpush.bf16.xpose.msra.mxu0 %v812
      %822 = vmatmul.bf16.gmra.mxu0 %v809
      %v823 = vpop.f32.mrf.mxu0
      %v824 = vadd.f32 %v702, %v823
      %v825 = vpop.f32.mrf.mxu0
      %v826 = vadd.f32 %v702, %v825
      %827 = vdwg.mxu0
      %v828 = vunpack.c.l.b16 %v597
      %v829 = vunpack.c.l.b16 %v599
      %v830 = vpack.c.b16 %v829, %v828
      %v831 = vunpack.c.l.b16 %v629
      %v832 = vunpack.c.l.b16 %v631
      %v833 = vpack.c.b16 %v832, %v831
      %v835 = vsel %vm365, %v830, 0
      %v838 = vsel %vm365, %v833, 0
      %840 = vmatpush.bf16.xpose.msra.mxu0 0
      %841 = vmatpush.bf16.xpose.msra.mxu0 0
      %842 = vmatpush.bf16.xpose.msra.mxu0 0
      %843 = vmatpush.bf16.xpose.msra.mxu0 0
      %844 = vmatpush.bf16.xpose.msra.mxu0 0
      %845 = vmatpush.bf16.xpose.msra.mxu0 0
      %846 = vmatpush.bf16.xpose.msra.mxu0 0
      %847 = vmatpush.bf16.xpose.msra.mxu0 %v838
      %848 = vmatmul.bf16.gmra.mxu0 %v835
      %v849 = vpop.f32.mrf.mxu0
      %v850 = vadd.f32 %v702, %v849
      %v851 = vpop.f32.mrf.mxu0
      %v852 = vadd.f32 %v702, %v851
      %853 = vdwg.mxu0
      %v854 = vunpack.c.l.b16 %v601
      %v855 = vunpack.c.l.b16 %v603
      %v856 = vpack.c.b16 %v855, %v854
      %v857 = vunpack.c.l.b16 %v633
      %v858 = vunpack.c.l.b16 %v635
      %v859 = vpack.c.b16 %v858, %v857
      %v861 = vsel %vm365, %v856, 0
      %v864 = vsel %vm365, %v859, 0
      %866 = vmatpush.bf16.xpose.msra.mxu0 0
      %867 = vmatpush.bf16.xpose.msra.mxu0 0
      %868 = vmatpush.bf16.xpose.msra.mxu0 0
      %869 = vmatpush.bf16.xpose.msra.mxu0 0
      %870 = vmatpush.bf16.xpose.msra.mxu0 0
      %871 = vmatpush.bf16.xpose.msra.mxu0 0
      %872 = vmatpush.bf16.xpose.msra.mxu0 0
      %873 = vmatpush.bf16.xpose.msra.mxu0 %v864
      %874 = vmatmul.bf16.gmra.mxu0 %v861
      %v875 = vpop.f32.mrf.mxu0
      %v876 = vadd.f32 %v702, %v875
      %v877 = vpop.f32.mrf.mxu0
      %v878 = vadd.f32 %v702, %v877
      %879 = vdwg.mxu0
      %v880 = vunpack.c.l.b16 %v605
      %v881 = vunpack.c.l.b16 %v607
      %v882 = vpack.c.b16 %v881, %v880
      %v883 = vunpack.c.l.b16 %v637
      %v884 = vunpack.c.l.b16 %v639
      %v885 = vpack.c.b16 %v884, %v883
      %v887 = vsel %vm365, %v882, 0
      %v890 = vsel %vm365, %v885, 0
      %892 = vmatpush.bf16.xpose.msra.mxu0 0
      %893 = vmatpush.bf16.xpose.msra.mxu0 0
      %894 = vmatpush.bf16.xpose.msra.mxu0 0
      %895 = vmatpush.bf16.xpose.msra.mxu0 0
      %896 = vmatpush.bf16.xpose.msra.mxu0 0
      %897 = vmatpush.bf16.xpose.msra.mxu0 0
      %898 = vmatpush.bf16.xpose.msra.mxu0 0
      %899 = vmatpush.bf16.xpose.msra.mxu0 %v890
      %900 = vmatmul.bf16.gmra.mxu0 %v887
      %v901 = vpop.f32.mrf.mxu0
      %v902 = vadd.f32 %v702, %v901
      %v903 = vpop.f32.mrf.mxu0
      %v904 = vadd.f32 %v702, %v903
      %905 = vdwg.mxu0
      %vm906 = vcmask 130048
      %v907 = vsel %vm906, %v720, -inf
      %908 = vmax.xlane.f32.xlu0 %v907
      %v909 = vpop.xlane.xlu0 %908
      %v910 = vsel %vm906, %v722, -inf
      %911 = vmax.xlane.f32.xlu0 %v910
      %v912 = vpop.xlane.xlu0 %911
      %v913 = vsel %vm906, %v746, -inf
      %914 = vmax.xlane.f32.xlu0 %v913
      %v915 = vpop.xlane.xlu0 %914
      %v916 = vsel %vm906, %v748, -inf
      %917 = vmax.xlane.f32.xlu0 %v916
      %v918 = vpop.xlane.xlu0 %917
      %v919 = vsel %vm906, %v772, -inf
      %920 = vmax.xlane.f32.xlu0 %v919
      %v921 = vpop.xlane.xlu0 %920
      %v922 = vsel %vm906, %v774, -inf
      %923 = vmax.xlane.f32.xlu0 %v922
      %v924 = vpop.xlane.xlu0 %923
      %v925 = vsel %vm906, %v798, -inf
      %926 = vmax.xlane.f32.xlu0 %v925
      %v927 = vpop.xlane.xlu0 %926
      %v928 = vsel %vm906, %v800, -inf
      %929 = vmax.xlane.f32.xlu0 %v928
      %v930 = vpop.xlane.xlu0 %929
      %v931 = vsel %vm906, %v824, -inf
      %932 = vmax.xlane.f32.xlu0 %v931
      %v933 = vpop.xlane.xlu0 %932
      %v934 = vsel %vm906, %v826, -inf
      %935 = vmax.xlane.f32.xlu0 %v934
      %v936 = vpop.xlane.xlu0 %935
      %v937 = vsel %vm906, %v850, -inf
      %938 = vmax.xlane.f32.xlu0 %v937
      %v939 = vpop.xlane.xlu0 %938
      %v940 = vsel %vm906, %v852, -inf
      %941 = vmax.xlane.f32.xlu0 %v940
      %v942 = vpop.xlane.xlu0 %941
      %v943 = vsel %vm906, %v876, -inf
      %944 = vmax.xlane.f32.xlu0 %v943
      %v945 = vpop.xlane.xlu0 %944
      %v946 = vsel %vm906, %v878, -inf
      %947 = vmax.xlane.f32.xlu0 %v946
      %v948 = vpop.xlane.xlu0 %947
      %v949 = vsel %vm906, %v902, -inf
      %950 = vmax.xlane.f32.xlu0 %v949
      %v951 = vpop.xlane.xlu0 %950
      %v952 = vsel %vm906, %v904, -inf
      %953 = vmax.xlane.f32.xlu0 %v952
      %v954 = vpop.xlane.xlu0 %953
      %v955 = vsub.f32 %v720, %v909
      %v956 = vsub.f32 %v722, %v912
      %v957 = vsub.f32 %v746, %v915
      %v958 = vsub.f32 %v748, %v918
      %v959 = vsub.f32 %v772, %v921
      %v960 = vsub.f32 %v774, %v924
      %v961 = vsub.f32 %v798, %v927
      %v962 = vsub.f32 %v800, %v930
      %v963 = vsub.f32 %v824, %v933
      %v964 = vsub.f32 %v826, %v936
      %v965 = vsub.f32 %v850, %v939
      %v966 = vsub.f32 %v852, %v942
      %v967 = vsub.f32 %v876, %v945
      %v968 = vsub.f32 %v878, %v948
      %v969 = vsub.f32 %v902, %v951
      %v970 = vsub.f32 %v904, %v954
      %v971 = vmul.f32 %v955, 1.442695
      %v972 = vpow.pop %v971
      %v973 = vmul.f32 %v956, 1.442695
      %v974 = vpow.pop %v973
      %v975 = vmul.f32 %v957, 1.442695
      %v976 = vpow.pop %v975
      %v977 = vmul.f32 %v958, 1.442695
      %v978 = vpow.pop %v977
      %v979 = vmul.f32 %v959, 1.442695
      %v980 = vpow.pop %v979
      %v981 = vmul.f32 %v960, 1.442695
      %v982 = vpow.pop %v981
      %v983 = vmul.f32 %v961, 1.442695
      %v984 = vpow.pop %v983
      %v985 = vmul.f32 %v962, 1.442695
      %v986 = vpow.pop %v985
      %v987 = vmul.f32 %v963, 1.442695
      %v988 = vpow.pop %v987
      %v989 = vmul.f32 %v964, 1.442695
      %v990 = vpow.pop %v989
      %v991 = vmul.f32 %v965, 1.442695
      %v992 = vpow.pop %v991
      %v993 = vmul.f32 %v966, 1.442695
      %v994 = vpow.pop %v993
      %v995 = vmul.f32 %v967, 1.442695
      %v996 = vpow.pop %v995
      %v997 = vmul.f32 %v968, 1.442695
      %v998 = vpow.pop %v997
      %v999 = vmul.f32 %v969, 1.442695
      %v1000 = vpow.pop %v999
      %v1001 = vmul.f32 %v970, 1.442695
      %v1002 = vpow.pop %v1001
      %v1003 = vsel %vm906, %v972, 0.0
      %1004 = vadd.xlane.f32.xlu0 %v1003
      %v1005 = vpop.xlane.xlu0 %1004
      %v1006 = vsel %vm906, %v974, 0.0
      %1007 = vadd.xlane.f32.xlu0 %v1006
      %v1008 = vpop.xlane.xlu0 %1007
      %v1009 = vsel %vm906, %v976, 0.0
      %1010 = vadd.xlane.f32.xlu0 %v1009
      %v1011 = vpop.xlane.xlu0 %1010
      %v1012 = vsel %vm906, %v978, 0.0
      %1013 = vadd.xlane.f32.xlu0 %v1012
      %v1014 = vpop.xlane.xlu0 %1013
      %v1015 = vsel %vm906, %v980, 0.0
      %1016 = vadd.xlane.f32.xlu0 %v1015
      %v1017 = vpop.xlane.xlu0 %1016
      %v1018 = vsel %vm906, %v982, 0.0
      %1019 = vadd.xlane.f32.xlu0 %v1018
      %v1020 = vpop.xlane.xlu0 %1019
      %v1021 = vsel %vm906, %v984, 0.0
      %1022 = vadd.xlane.f32.xlu0 %v1021
      %v1023 = vpop.xlane.xlu0 %1022
      %v1024 = vsel %vm906, %v986, 0.0
      %1025 = vadd.xlane.f32.xlu0 %v1024
      %v1026 = vpop.xlane.xlu0 %1025
      %v1027 = vsel %vm906, %v988, 0.0
      %1028 = vadd.xlane.f32.xlu0 %v1027
      %v1029 = vpop.xlane.xlu0 %1028
      %v1030 = vsel %vm906, %v990, 0.0
      %1031 = vadd.xlane.f32.xlu0 %v1030
      %v1032 = vpop.xlane.xlu0 %1031
      %v1033 = vsel %vm906, %v992, 0.0
      %1034 = vadd.xlane.f32.xlu0 %v1033
      %v1035 = vpop.xlane.xlu0 %1034
      %v1036 = vsel %vm906, %v994, 0.0
      %1037 = vadd.xlane.f32.xlu0 %v1036
      %v1038 = vpop.xlane.xlu0 %1037
      %v1039 = vsel %vm906, %v996, 0.0
      %1040 = vadd.xlane.f32.xlu0 %v1039
      %v1041 = vpop.xlane.xlu0 %1040
      %v1042 = vsel %vm906, %v998, 0.0
      %1043 = vadd.xlane.f32.xlu0 %v1042
      %v1044 = vpop.xlane.xlu0 %1043
      %v1045 = vsel %vm906, %v1000, 0.0
      %1046 = vadd.xlane.f32.xlu0 %v1045
      %v1047 = vpop.xlane.xlu0 %1046
      %v1048 = vsel %vm906, %v1002, 0.0
      %1049 = vadd.xlane.f32.xlu0 %v1048
      %v1050 = vpop.xlane.xlu0 %1049
      %v1051 = vrcp.pop %v1005
      %v1052 = vrcp.pop %v1008
      %v1053 = vrcp.pop %v1011
      %v1054 = vrcp.pop %v1014
      %v1055 = vrcp.pop %v1017
      %v1056 = vrcp.pop %v1020
      %v1057 = vrcp.pop %v1023
      %v1058 = vrcp.pop %v1026
      %v1059 = vrcp.pop %v1029
      %v1060 = vrcp.pop %v1032
      %v1061 = vrcp.pop %v1035
      %v1062 = vrcp.pop %v1038
      %v1063 = vrcp.pop %v1041
      %v1064 = vrcp.pop %v1044
      %v1065 = vrcp.pop %v1047
      %v1066 = vrcp.pop %v1050
      %v1067 = vmul.f32 %v972, %v1051
      %v1068 = vmul.f32 %v974, %v1052
      %v1069 = vmul.f32 %v976, %v1053
      %v1070 = vmul.f32 %v978, %v1054
      %v1071 = vmul.f32 %v980, %v1055
      %v1072 = vmul.f32 %v982, %v1056
      %v1073 = vmul.f32 %v984, %v1057
      %v1074 = vmul.f32 %v986, %v1058
      %v1075 = vmul.f32 %v988, %v1059
      %v1076 = vmul.f32 %v990, %v1060
      %v1077 = vmul.f32 %v992, %v1061
      %v1078 = vmul.f32 %v994, %v1062
      %v1079 = vmul.f32 %v996, %v1063
      %v1080 = vmul.f32 %v998, %v1064
      %v1081 = vmul.f32 %v1000, %v1065
      %v1082 = vmul.f32 %v1002, %v1066
      %v1083 = vpack.c.bf16 %v1067, %v1067
      %v1084 = vpack.c.bf16 %v1068, %v1068
      %v1085 = vpack.c.bf16 %v1069, %v1069
      %v1086 = vpack.c.bf16 %v1070, %v1070
      %v1087 = vpack.c.bf16 %v1071, %v1071
      %v1088 = vpack.c.bf16 %v1072, %v1072
      %v1089 = vpack.c.bf16 %v1073, %v1073
      %v1090 = vpack.c.bf16 %v1074, %v1074
      %v1091 = vpack.c.bf16 %v1075, %v1075
      %v1092 = vpack.c.bf16 %v1076, %v1076
      %v1093 = vpack.c.bf16 %v1077, %v1077
      %v1094 = vpack.c.bf16 %v1078, %v1078
      %v1095 = vpack.c.bf16 %v1079, %v1079
      %v1096 = vpack.c.bf16 %v1080, %v1080
      %v1097 = vpack.c.bf16 %v1081, %v1081
      %v1098 = vpack.c.bf16 %v1082, %v1082
      %v1101 = vunpack.c.l.b16 %v1083
      %v1102 = vunpack.c.l.b16 %v1084
      %v1103 = vpack.c.b16 %v1102, %v1101
      %v1104 = vunpack.c.l.b16 %v640
      %v1105 = vunpack.c.l.b16 %v641
      %v1106 = vpack.c.b16 %v1105, %v1104
      %v1109 = vsel %vm906, %v1103, 0
      %1111 = vmatpush.bf16.msra.mxu0 0
      %1112 = vmatpush.bf16.msra.mxu0 0
      %1113 = vmatpush.bf16.msra.mxu0 0
      %1114 = vmatpush.bf16.msra.mxu0 0
      %1115 = vmatpush.bf16.msra.mxu0 0
      %1116 = vmatpush.bf16.msra.mxu0 0
      %1117 = vmatpush.bf16.msra.mxu0 0
      %1118 = vmatpush.bf16.msra.mxu0 %v1106
      %1119 = vmatmul.bf16.gmra.mxu0 %v1109
      %v1120 = vpop.f32.mrf.mxu0
      %v1121 = vadd.f32 0.0, %v1120
      %v1122 = vpop.f32.mrf.mxu0
      %v1123 = vadd.f32 0.0, %v1122
      %1124 = vdwg.mxu0
      %v1127 = vunpack.c.l.b16 %v1085
      %v1128 = vunpack.c.l.b16 %v1086
      %v1129 = vpack.c.b16 %v1128, %v1127
      %v1130 = vunpack.c.l.b16 %v645
      %v1131 = vunpack.c.l.b16 %v647
      %v1132 = vpack.c.b16 %v1131, %v1130
      %v1135 = vsel %vm906, %v1129, 0
      %1137 = vmatpush.bf16.msra.mxu0 0
      %1138 = vmatpush.bf16.msra.mxu0 0
      %1139 = vmatpush.bf16.msra.mxu0 0
      %1140 = vmatpush.bf16.msra.mxu0 0
      %1141 = vmatpush.bf16.msra.mxu0 0
      %1142 = vmatpush.bf16.msra.mxu0 0
      %1143 = vmatpush.bf16.msra.mxu0 0
      %1144 = vmatpush.bf16.msra.mxu0 %v1132
      %1145 = vmatmul.bf16.gmra.mxu0 %v1135
      %v1146 = vpop.f32.mrf.mxu0
      %v1147 = vadd.f32 0.0, %v1146
      %v1148 = vpop.f32.mrf.mxu0
      %v1149 = vadd.f32 0.0, %v1148
      %1150 = vdwg.mxu0
      %v1153 = vunpack.c.l.b16 %v1087
      %v1154 = vunpack.c.l.b16 %v1088
      %v1155 = vpack.c.b16 %v1154, %v1153
      %v1156 = vunpack.c.l.b16 %v649
      %v1157 = vunpack.c.l.b16 %v651
      %v1158 = vpack.c.b16 %v1157, %v1156
      %v1161 = vsel %vm906, %v1155, 0
      %1163 = vmatpush.bf16.msra.mxu0 0
      %1164 = vmatpush.bf16.msra.mxu0 0
      %1165 = vmatpush.bf16.msra.mxu0 0
      %1166 = vmatpush.bf16.msra.mxu0 0
      %1167 = vmatpush.bf16.msra.mxu0 0
      %1168 = vmatpush.bf16.msra.mxu0 0
      %1169 = vmatpush.bf16.msra.mxu0 0
      %1170 = vmatpush.bf16.msra.mxu0 %v1158
      %1171 = vmatmul.bf16.gmra.mxu0 %v1161
      %v1172 = vpop.f32.mrf.mxu0
      %v1173 = vadd.f32 0.0, %v1172
      %v1174 = vpop.f32.mrf.mxu0
      %v1175 = vadd.f32 0.0, %v1174
      %1176 = vdwg.mxu0
      %v1179 = vunpack.c.l.b16 %v1089
      %v1180 = vunpack.c.l.b16 %v1090
      %v1181 = vpack.c.b16 %v1180, %v1179
      %v1182 = vunpack.c.l.b16 %v653
      %v1183 = vunpack.c.l.b16 %v655
      %v1184 = vpack.c.b16 %v1183, %v1182
      %v1187 = vsel %vm906, %v1181, 0
      %1189 = vmatpush.bf16.msra.mxu0 0
      %1190 = vmatpush.bf16.msra.mxu0 0
      %1191 = vmatpush.bf16.msra.mxu0 0
      %1192 = vmatpush.bf16.msra.mxu0 0
      %1193 = vmatpush.bf16.msra.mxu0 0
      %1194 = vmatpush.bf16.msra.mxu0 0
      %1195 = vmatpush.bf16.msra.mxu0 0
      %1196 = vmatpush.bf16.msra.mxu0 %v1184
      %1197 = vmatmul.bf16.gmra.mxu0 %v1187
      %v1198 = vpop.f32.mrf.mxu0
      %v1199 = vadd.f32 0.0, %v1198
      %v1200 = vpop.f32.mrf.mxu0
      %v1201 = vadd.f32 0.0, %v1200
      %1202 = vdwg.mxu0
      %v1205 = vunpack.c.l.b16 %v1091
      %v1206 = vunpack.c.l.b16 %v1092
      %v1207 = vpack.c.b16 %v1206, %v1205
      %v1208 = vunpack.c.l.b16 %v657
      %v1209 = vunpack.c.l.b16 %v659
      %v1210 = vpack.c.b16 %v1209, %v1208
      %v1213 = vsel %vm906, %v1207, 0
      %1215 = vmatpush.bf16.msra.mxu0 0
      %1216 = vmatpush.bf16.msra.mxu0 0
      %1217 = vmatpush.bf16.msra.mxu0 0
      %1218 = vmatpush.bf16.msra.mxu0 0
      %1219 = vmatpush.bf16.msra.mxu0 0
      %1220 = vmatpush.bf16.msra.mxu0 0
      %1221 = vmatpush.bf16.msra.mxu0 0
      %1222 = vmatpush.bf16.msra.mxu0 %v1210
      %1223 = vmatmul.bf16.gmra.mxu0 %v1213
      %v1224 = vpop.f32.mrf.mxu0
      %v1225 = vadd.f32 0.0, %v1224
      %v1226 = vpop.f32.mrf.mxu0
      %v1227 = vadd.f32 0.0, %v1226
      %1228 = vdwg.mxu0
      %v1231 = vunpack.c.l.b16 %v1093
      %v1232 = vunpack.c.l.b16 %v1094
      %v1233 = vpack.c.b16 %v1232, %v1231
      %v1234 = vunpack.c.l.b16 %v661
      %v1235 = vunpack.c.l.b16 %v663
      %v1236 = vpack.c.b16 %v1235, %v1234
      %v1239 = vsel %vm906, %v1233, 0
      %1241 = vmatpush.bf16.msra.mxu0 0
      %1242 = vmatpush.bf16.msra.mxu0 0
      %1243 = vmatpush.bf16.msra.mxu0 0
      %1244 = vmatpush.bf16.msra.mxu0 0
      %1245 = vmatpush.bf16.msra.mxu0 0
      %1246 = vmatpush.bf16.msra.mxu0 0
      %1247 = vmatpush.bf16.msra.mxu0 0
      %1248 = vmatpush.bf16.msra.mxu0 %v1236
      %1249 = vmatmul.bf16.gmra.mxu0 %v1239
      %v1250 = vpop.f32.mrf.mxu0
      %v1251 = vadd.f32 0.0, %v1250
      %v1252 = vpop.f32.mrf.mxu0
      %v1253 = vadd.f32 0.0, %v1252
      %1254 = vdwg.mxu0
      %v1257 = vunpack.c.l.b16 %v1095
      %v1258 = vunpack.c.l.b16 %v1096
      %v1259 = vpack.c.b16 %v1258, %v1257
      %v1260 = vunpack.c.l.b16 %v665
      %v1261 = vunpack.c.l.b16 %v667
      %v1262 = vpack.c.b16 %v1261, %v1260
      %v1265 = vsel %vm906, %v1259, 0
      %1267 = vmatpush.bf16.msra.mxu0 0
      %1268 = vmatpush.bf16.msra.mxu0 0
      %1269 = vmatpush.bf16.msra.mxu0 0
      %1270 = vmatpush.bf16.msra.mxu0 0
      %1271 = vmatpush.bf16.msra.mxu0 0
      %1272 = vmatpush.bf16.msra.mxu0 0
      %1273 = vmatpush.bf16.msra.mxu0 0
      %1274 = vmatpush.bf16.msra.mxu0 %v1262
      %1275 = vmatmul.bf16.gmra.mxu0 %v1265
      %v1276 = vpop.f32.mrf.mxu0
      %v1277 = vadd.f32 0.0, %v1276
      %v1278 = vpop.f32.mrf.mxu0
      %v1279 = vadd.f32 0.0, %v1278
      %1280 = vdwg.mxu0
      %v1283 = vunpack.c.l.b16 %v1097
      %v1284 = vunpack.c.l.b16 %v1098
      %v1285 = vpack.c.b16 %v1284, %v1283
      %v1286 = vunpack.c.l.b16 %v669
      %v1287 = vunpack.c.l.b16 %v671
      %v1288 = vpack.c.b16 %v1287, %v1286
      %v1291 = vsel %vm906, %v1285, 0
      %1293 = vmatpush.bf16.msra.mxu0 0
      %1294 = vmatpush.bf16.msra.mxu0 0
      %1295 = vmatpush.bf16.msra.mxu0 0
      %1296 = vmatpush.bf16.msra.mxu0 0
      %1297 = vmatpush.bf16.msra.mxu0 0
      %1298 = vmatpush.bf16.msra.mxu0 0
      %1299 = vmatpush.bf16.msra.mxu0 0
      %1300 = vmatpush.bf16.msra.mxu0 %v1288
      %1301 = vmatmul.bf16.gmra.mxu0 %v1291
      %v1302 = vpop.f32.mrf.mxu0
      %v1303 = vadd.f32 0.0, %v1302
      %v1304 = vpop.f32.mrf.mxu0
      %v1305 = vadd.f32 0.0, %v1304
      %1306 = vdwg.mxu0
      %1309 = vrot.lane.b32.xlu0 %v1147, 8
      %v1310 = vpop.permute.xlu0 %1309
      %1311 = vrot.lane.b32.xlu0 %v1149, 8
      %v1312 = vpop.permute.xlu0 %1311
      %1317 = vrot.lane.b32.xlu0 %v1173, 16
      %v1318 = vpop.permute.xlu0 %1317
      %1319 = vrot.lane.b32.xlu0 %v1175, 16
      %v1320 = vpop.permute.xlu0 %1319
      %1325 = vrot.lane.b32.xlu0 %v1199, 24
      %v1326 = vpop.permute.xlu0 %1325
      %1327 = vrot.lane.b32.xlu0 %v1201, 24
      %v1328 = vpop.permute.xlu0 %1327
      %1333 = vrot.lane.b32.xlu0 %v1225, 32
      %v1334 = vpop.permute.xlu0 %1333
      %1335 = vrot.lane.b32.xlu0 %v1227, 32
      %v1336 = vpop.permute.xlu0 %1335
      %1341 = vrot.lane.b32.xlu0 %v1251, 40
      %v1342 = vpop.permute.xlu0 %1341
      %1343 = vrot.lane.b32.xlu0 %v1253, 40
      %v1344 = vpop.permute.xlu0 %1343
      %1349 = vrot.lane.b32.xlu0 %v1277, 48
      %v1350 = vpop.permute.xlu0 %1349
      %1351 = vrot.lane.b32.xlu0 %v1279, 48
      %v1352 = vpop.permute.xlu0 %1351
      %1357 = vrot.lane.b32.xlu0 %v1303, 56
      %v1358 = vpop.permute.xlu0 %1357
      %1359 = vrot.lane.b32.xlu0 %v1305, 56
      %v1360 = vpop.permute.xlu0 %1359
      %v1363 = vsel %vm365, %v1121, %v1310
      %v1364 = vsel %vm365, %v1123, %v1312
      %v1365 = vsel %vm906, %v1363, %v1318
      %v1366 = vsel %vm906, %v1364, %v1320
      %vm1367 = vcmask 195584
      %v1368 = vsel %vm1367, %v1365, %v1326
      %v1369 = vsel %vm1367, %v1366, %v1328
      %vm1370 = vcmask 261120
      %v1371 = vsel %vm1370, %v1368, %v1334
      %v1372 = vsel %vm1370, %v1369, %v1336
      %vm1373 = vcmask 326656
      %v1374 = vsel %vm1373, %v1371, %v1342
      %v1375 = vsel %vm1373, %v1372, %v1344
      %vm1376 = vcmask 392192
      %v1377 = vsel %vm1376, %v1374, %v1350
      %v1378 = vsel %vm1376, %v1375, %v1352
      %vm1379 = vcmask 457728
      %v1380 = vsel %vm1379, %v1377, %v1358
      %v1381 = vsel %vm1379, %v1378, %v1360
      %v1382 = vpack.c.bf16 %v1381, %v1380
      %v1383 = vld [vmem:[%s4] sm:$0xf]
      %v1384 = vld [vmem:[%s4 + $0x4] sm:$0xf]
      %v1385 = vld [vmem:[%s4 + $0x8] sm:$0xf]
      %v1386 = vld [vmem:[%s4 + $0xc] sm:$0xf]
      %v1387 = vld [vmem:[%s4 + $0x10] sm:$0xf]
      %v1388 = vld [vmem:[%s4 + $0x14] sm:$0xf]
      %v1389 = vld [vmem:[%s4 + $0x18] sm:$0xf]
      %v1390 = vld [vmem:[%s4 + $0x1c] sm:$0xf]
      %v1391 = vperm.slane %v424, 1
      %v1400 = vunpack.c.l.b16 %v1383
      %v1401 = vunpack.c.l.b16 %v1384
      %v1402 = vunpack.c.l.b16 %v1385
      %v1403 = vunpack.c.l.b16 %v1386
      %v1404 = vunpack.c.l.b16 %v1387
      %v1405 = vunpack.c.l.b16 %v1388
      %v1406 = vunpack.c.l.b16 %v1389
      %v1407 = vunpack.c.l.b16 %v1390
      %v1408 = vpack.c.b16 %v1401, %v1400
      %v1409 = vpack.c.b16 %v1403, %v1402
      %v1410 = vpack.c.b16 %v1405, %v1404
      %v1411 = vpack.c.b16 %v1407, %v1406
      %v1417 = vsel %vm459, %v1382, 0
      %1419 = vmatpush.bf16.msra.mxu0 0
      %1420 = vmatpush.bf16.msra.mxu0 0
      %1421 = vmatpush.bf16.msra.mxu0 0
      %1422 = vmatpush.bf16.msra.mxu0 0
      %1423 = vmatpush.bf16.msra.mxu0 %v1411
      %1424 = vmatpush.bf16.msra.mxu0 %v1410
      %1425 = vmatpush.bf16.msra.mxu0 %v1409
      %1426 = vmatpush.bf16.msra.mxu0 %v1408
      %1427 = vmatmul.bf16.gmra.mxu0 %v1417
      %v1428 = vpop.f32.mrf.mxu0
      %v1429 = vadd.f32 %v1391, %v1428
      %v1430 = vpop.f32.mrf.mxu0
      %v1431 = vadd.f32 %v1391, %v1430
      %1432 = vdwg.mxu0
      %v1433 = vadd.f32 %v421, %v1429
      %v1434 = vadd.f32 %v422, %v1431
      %v1435 = vsel %vm459, %v1433, 0.0
      %1436 = vadd.xlane.f32.xlu0 %v1435
      %v1437 = vpop.xlane.xlu0 %1436
      %v1438 = vsel %vm459, %v1434, 0.0
      %1439 = vadd.xlane.f32.xlu0 %v1438
      %v1440 = vpop.xlane.xlu0 %1439
      %v1441 = vrcp.pop 64.0
      %v1442 = vmul.f32 64.0, %v1441
      %v1443 = vsub.f32 1.0, %v1442
      %v1444 = vmul.f32 %v1441, %v1443
      %v1445 = vadd.f32 %v1441, %v1444
      %vm1446 = vweird.f32 %v1441
      %v1447 = vsel %vm1446, %v1441, %v1445
      %v1448 = vmul.f32 %v1437, %v1447
      %v1449 = vmul.f32 %v1440, %v1447
      %v1450 = vmul.f32 %v1433, %v1433
      %v1451 = vmul.f32 %v1434, %v1434
      %v1452 = vsel %vm459, %v1450, 0.0
      %1453 = vadd.xlane.f32.xlu0 %v1452
      %v1454 = vpop.xlane.xlu0 %1453
      %v1455 = vsel %vm459, %v1451, 0.0
      %1456 = vadd.xlane.f32.xlu0 %v1455
      %v1457 = vpop.xlane.xlu0 %1456
      %v1458 = vmul.f32 %v1454, %v1447
      %v1459 = vmul.f32 %v1457, %v1447
      %v1460 = vmul.f32 %v1448, %v1448
      %v1461 = vmul.f32 %v1449, %v1449
      %v1462 = vsub.f32 %v1458, %v1460
      %v1463 = vsub.f32 %v1459, %v1461
      %v1464 = vmax.f32 %v1462, 0.0
      %v1465 = vmax.f32 %v1463, 0.0
      %v1466 = vsub.f32 %v1433, %v1448
      %v1467 = vsub.f32 %v1434, %v1449
      %v1468 = vadd.f32 %v1464, 1e-05
      %v1469 = vadd.f32 %v1465, 1e-05
      %v1470 = vrsqrt.pop %v1468
      %v1471 = vmul.f32 %v1470, %v1468
      %v1472 = vmul.f32 %v1471, %v1470
      %v1473 = vmul.f32 0.5, %v1472
      %v1474 = vsub.f32 1.5, %v1473
      %v1475 = vmul.f32 %v1470, %v1474
      %vm1476 = vweird.f32 %v1468
      %vm1477 = vweird.f32 %v1470
      %vm1478 = vmor %vm1476, %vm1477
      %v1479 = vsel %vm1478, %v1470, %v1475
      %v1480 = vrsqrt.pop %v1469
      %v1481 = vmul.f32 %v1480, %v1469
      %v1482 = vmul.f32 %v1481, %v1480
      %v1483 = vmul.f32 0.5, %v1482
      %v1484 = vsub.f32 1.5, %v1483
      %v1485 = vmul.f32 %v1480, %v1484
      %vm1486 = vweird.f32 %v1469
      %vm1487 = vweird.f32 %v1480
      %vm1488 = vmor %vm1486, %vm1487
      %v1489 = vsel %vm1488, %v1480, %v1485
      %v1490 = vmul.f32 %v1466, %v1479
      %v1491 = vmul.f32 %v1467, %v1489
      %v1492 = vperm.slane %v424, 2
      %v1493 = vmul.f32 %v1490, %v1492
      %v1494 = vmul.f32 %v1491, %v1492
      %v1495 = vperm.slane %v424, 3
      %v1496 = vadd.f32 %v1493, %v1495
      %v1497 = vadd.f32 %v1494, %v1495
      %v1498 = vpack.c.bf16 %v1497, %v1496
      %v1499 = vld [vmem:[%s5] sm:$0xff]
      %v1500 = vld [vmem:[%s5 + $0x8] sm:$0xff]
      %v1501 = vld [vmem:[%s5 + $0x10] sm:$0xff]
      %v1502 = vld [vmem:[%s5 + $0x18] sm:$0xff]
      %v1503 = vld [vmem:[%s5 + $0x20] sm:$0xff]
      %v1504 = vld [vmem:[%s5 + $0x28] sm:$0xff]
      %v1505 = vld [vmem:[%s5 + $0x30] sm:$0xff]
      %v1506 = vld [vmem:[%s5 + $0x38] sm:$0xff]
      %v1507 = vperm.slane %v424, 4
      %v1508 = vperm.slane %v425, 4
      %v1517 = vunpack.c.l.b16 %v1499
      %v1518 = vunpack.c.h.b16 %v1499
      %v1519 = vunpack.c.l.b16 %v1500
      %v1520 = vunpack.c.h.b16 %v1500
      %v1521 = vunpack.c.l.b16 %v1501
      %v1522 = vunpack.c.h.b16 %v1501
      %v1523 = vunpack.c.l.b16 %v1502
      %v1524 = vunpack.c.h.b16 %v1502
      %v1525 = vunpack.c.l.b16 %v1503
      %v1526 = vunpack.c.h.b16 %v1503
      %v1527 = vunpack.c.l.b16 %v1504
      %v1528 = vunpack.c.h.b16 %v1504
      %v1529 = vunpack.c.l.b16 %v1505
      %v1530 = vunpack.c.h.b16 %v1505
      %v1531 = vunpack.c.l.b16 %v1506
      %v1532 = vunpack.c.h.b16 %v1506
      %v1533 = vpack.c.b16 %v1519, %v1517
      %v1534 = vpack.c.b16 %v1520, %v1518
      %v1535 = vpack.c.b16 %v1523, %v1521
      %v1536 = vpack.c.b16 %v1524, %v1522
      %v1537 = vpack.c.b16 %v1527, %v1525
      %v1538 = vpack.c.b16 %v1528, %v1526
      %v1539 = vpack.c.b16 %v1531, %v1529
      %v1540 = vpack.c.b16 %v1532, %v1530
      %v1550 = vsel %vm459, %v1498, 0
      %1552 = vmatpush.bf16.msra.mxu0 0
      %1553 = vmatpush.bf16.msra.mxu0 0
      %1554 = vmatpush.bf16.msra.mxu0 0
      %1555 = vmatpush.bf16.msra.mxu0 0
      %1556 = vmatpush.bf16.msra.mxu0 %v1539
      %1557 = vmatpush.bf16.msra.mxu0 %v1537
      %1558 = vmatpush.bf16.msra.mxu0 %v1535
      %1559 = vmatpush.bf16.msra.mxu0 %v1533
      %1560 = vmatmul.bf16.gmra.mxu0 %v1550
      %v1561 = vpop.f32.mrf.mxu0
      %v1562 = vadd.f32 %v1507, %v1561
      %v1563 = vpop.f32.mrf.mxu0
      %v1564 = vadd.f32 %v1507, %v1563
      %1565 = vdwg.mxu0
      %1566 = vmatpush.bf16.msra.mxu0 0
      %1567 = vmatpush.bf16.msra.mxu0 0
      %1568 = vmatpush.bf16.msra.mxu0 0
      %1569 = vmatpush.bf16.msra.mxu0 0
      %1570 = vmatpush.bf16.msra.mxu0 %v1540
      %1571 = vmatpush.bf16.msra.mxu0 %v1538
      %1572 = vmatpush.bf16.msra.mxu0 %v1536
      %1573 = vmatpush.bf16.msra.mxu0 %v1534
      %1574 = vmatmul.bf16.gmra.mxu0 %v1550
      %v1575 = vpop.f32.mrf.mxu0
      %v1576 = vadd.f32 %v1508, %v1575
      %v1577 = vpop.f32.mrf.mxu0
      %v1578 = vadd.f32 %v1508, %v1577
      %1579 = vdwg.mxu0
      %v1580 = vmax.f32 %v1562, 0.0
      %v1581 = vmax.f32 %v1576, 0.0
      %v1582 = vmax.f32 %v1564, 0.0
      %v1583 = vmax.f32 %v1578, 0.0
      %v1584 = vpack.c.bf16 %v1582, %v1580
      %v1585 = vpack.c.bf16 %v1583, %v1581
      %v1586 = vld [vmem:[%s6] sm:$0xf]
      %v1587 = vld [vmem:[%s6 + $0x4] sm:$0xf]
      %v1588 = vld [vmem:[%s6 + $0x8] sm:$0xf]
      %v1589 = vld [vmem:[%s6 + $0xc] sm:$0xf]
      %v1590 = vld [vmem:[%s6 + $0x10] sm:$0xf]
      %v1591 = vld [vmem:[%s6 + $0x14] sm:$0xf]
      %v1592 = vld [vmem:[%s6 + $0x18] sm:$0xf]
      %v1593 = vld [vmem:[%s6 + $0x1c] sm:$0xf]
      %v1594 = vld [vmem:[%s6 + $0x20] sm:$0xf]
      %v1595 = vld [vmem:[%s6 + $0x24] sm:$0xf]
      %v1596 = vld [vmem:[%s6 + $0x28] sm:$0xf]
      %v1597 = vld [vmem:[%s6 + $0x2c] sm:$0xf]
      %v1598 = vld [vmem:[%s6 + $0x30] sm:$0xf]
      %v1599 = vld [vmem:[%s6 + $0x34] sm:$0xf]
      %v1600 = vld [vmem:[%s6 + $0x38] sm:$0xf]
      %v1601 = vld [vmem:[%s6 + $0x3c] sm:$0xf]
      %v1602 = vld [vmem:[%s6 + $0x40] sm:$0xf]
      %v1603 = vld [vmem:[%s6 + $0x44] sm:$0xf]
      %v1604 = vld [vmem:[%s6 + $0x48] sm:$0xf]
      %v1605 = vld [vmem:[%s6 + $0x4c] sm:$0xf]
      %v1606 = vld [vmem:[%s6 + $0x50] sm:$0xf]
      %v1607 = vld [vmem:[%s6 + $0x54] sm:$0xf]
      %v1608 = vld [vmem:[%s6 + $0x58] sm:$0xf]
      %v1609 = vld [vmem:[%s6 + $0x5c] sm:$0xf]
      %v1610 = vld [vmem:[%s6 + $0x60] sm:$0xf]
      %v1611 = vld [vmem:[%s6 + $0x64] sm:$0xf]
      %v1612 = vld [vmem:[%s6 + $0x68] sm:$0xf]
      %v1613 = vld [vmem:[%s6 + $0x6c] sm:$0xf]
      %v1614 = vld [vmem:[%s6 + $0x70] sm:$0xf]
      %v1615 = vld [vmem:[%s6 + $0x74] sm:$0xf]
      %v1616 = vld [vmem:[%s6 + $0x78] sm:$0xf]
      %v1617 = vld [vmem:[%s6 + $0x7c] sm:$0xf]
      %v1618 = vperm.slane %v424, 5
      %v1651 = vunpack.c.l.b16 %v1586
      %v1652 = vunpack.c.l.b16 %v1587
      %v1653 = vunpack.c.l.b16 %v1588
      %v1654 = vunpack.c.l.b16 %v1589
      %v1655 = vunpack.c.l.b16 %v1590
      %v1656 = vunpack.c.l.b16 %v1591
      %v1657 = vunpack.c.l.b16 %v1592
      %v1658 = vunpack.c.l.b16 %v1593
      %v1659 = vunpack.c.l.b16 %v1594
      %v1660 = vunpack.c.l.b16 %v1595
      %v1661 = vunpack.c.l.b16 %v1596
      %v1662 = vunpack.c.l.b16 %v1597
      %v1663 = vunpack.c.l.b16 %v1598
      %v1664 = vunpack.c.l.b16 %v1599
      %v1665 = vunpack.c.l.b16 %v1600
      %v1666 = vunpack.c.l.b16 %v1601
      %v1667 = vunpack.c.l.b16 %v1602
      %v1668 = vunpack.c.l.b16 %v1603
      %v1669 = vunpack.c.l.b16 %v1604
      %v1670 = vunpack.c.l.b16 %v1605
      %v1671 = vunpack.c.l.b16 %v1606
      %v1672 = vunpack.c.l.b16 %v1607
      %v1673 = vunpack.c.l.b16 %v1608
      %v1674 = vunpack.c.l.b16 %v1609
      %v1675 = vunpack.c.l.b16 %v1610
      %v1676 = vunpack.c.l.b16 %v1611
      %v1677 = vunpack.c.l.b16 %v1612
      %v1678 = vunpack.c.l.b16 %v1613
      %v1679 = vunpack.c.l.b16 %v1614
      %v1680 = vunpack.c.l.b16 %v1615
      %v1681 = vunpack.c.l.b16 %v1616
      %v1682 = vunpack.c.l.b16 %v1617
      %v1683 = vpack.c.b16 %v1652, %v1651
      %v1684 = vpack.c.b16 %v1654, %v1653
      %v1685 = vpack.c.b16 %v1656, %v1655
      %v1686 = vpack.c.b16 %v1658, %v1657
      %v1687 = vpack.c.b16 %v1660, %v1659
      %v1688 = vpack.c.b16 %v1662, %v1661
      %v1689 = vpack.c.b16 %v1664, %v1663
      %v1690 = vpack.c.b16 %v1666, %v1665
      %v1691 = vpack.c.b16 %v1668, %v1667
      %v1692 = vpack.c.b16 %v1670, %v1669
      %v1693 = vpack.c.b16 %v1672, %v1671
      %v1694 = vpack.c.b16 %v1674, %v1673
      %v1695 = vpack.c.b16 %v1676, %v1675
      %v1696 = vpack.c.b16 %v1678, %v1677
      %v1697 = vpack.c.b16 %v1680, %v1679
      %v1698 = vpack.c.b16 %v1682, %v1681
      %1715 = vmatpush.bf16.msra.mxu0 %v1690
      %1716 = vmatpush.bf16.msra.mxu0 %v1689
      %1717 = vmatpush.bf16.msra.mxu0 %v1688
      %1718 = vmatpush.bf16.msra.mxu0 %v1687
      %1719 = vmatpush.bf16.msra.mxu0 %v1686
      %1720 = vmatpush.bf16.msra.mxu0 %v1685
      %1721 = vmatpush.bf16.msra.mxu0 %v1684
      %1722 = vmatpush.bf16.msra.mxu0 %v1683
      %1723 = vmatmul.bf16.gmra.mxu0 %v1584
      %v1724 = vpop.f32.mrf.mxu0
      %v1725 = vadd.f32 %v1618, %v1724
      %v1726 = vpop.f32.mrf.mxu0
      %v1727 = vadd.f32 %v1618, %v1726
      %1728 = vdwg.mxu0
      %1729 = vmatpush.bf16.msra.mxu0 %v1698
      %1730 = vmatpush.bf16.msra.mxu0 %v1697
      %1731 = vmatpush.bf16.msra.mxu0 %v1696
      %1732 = vmatpush.bf16.msra.mxu0 %v1695
      %1733 = vmatpush.bf16.msra.mxu0 %v1694
      %1734 = vmatpush.bf16.msra.mxu0 %v1693
      %1735 = vmatpush.bf16.msra.mxu0 %v1692
      %1736 = vmatpush.bf16.msra.mxu0 %v1691
      %1737 = vmatmul.bf16.gmra.mxu0 %v1585
      %v1738 = vpop.f32.mrf.mxu0
      %v1739 = vadd.f32 %v1725, %v1738
      %v1740 = vpop.f32.mrf.mxu0
      %v1741 = vadd.f32 %v1727, %v1740
      %1742 = vdwg.mxu0
      %v1743 = vadd.f32 %v1496, %v1739
      %v1744 = vadd.f32 %v1497, %v1741
      %v1745 = vsel %vm459, %v1743, 0.0
      %1746 = vadd.xlane.f32.xlu0 %v1745
      %v1747 = vpop.xlane.xlu0 %1746
      %v1748 = vsel %vm459, %v1744, 0.0
      %1749 = vadd.xlane.f32.xlu0 %v1748
      %v1750 = vpop.xlane.xlu0 %1749
      %v1751 = vmul.f32 %v1747, %v1447
      %v1752 = vmul.f32 %v1750, %v1447
      %v1753 = vmul.f32 %v1743, %v1743
      %v1754 = vmul.f32 %v1744, %v1744
      %v1755 = vsel %vm459, %v1753, 0.0
      %1756 = vadd.xlane.f32.xlu0 %v1755
      %v1757 = vpop.xlane.xlu0 %1756
      %v1758 = vsel %vm459, %v1754, 0.0
      %1759 = vadd.xlane.f32.xlu0 %v1758
      %v1760 = vpop.xlane.xlu0 %1759
      %v1761 = vmul.f32 %v1757, %v1447
      %v1762 = vmul.f32 %v1760, %v1447
      %v1763 = vmul.f32 %v1751, %v1751
      %v1764 = vmul.f32 %v1752, %v1752
      %v1765 = vsub.f32 %v1761, %v1763
      %v1766 = vsub.f32 %v1762, %v1764
      %v1767 = vmax.f32 %v1765, 0.0
      %v1768 = vmax.f32 %v1766, 0.0
      %v1769 = vsub.f32 %v1743, %v1751
      %v1770 = vsub.f32 %v1744, %v1752
      %v1771 = vadd.f32 %v1767, 1e-05
      %v1772 = vadd.f32 %v1768, 1e-05
      %v1773 = vrsqrt.pop %v1771
      %v1774 = vmul.f32 %v1773, %v1771
      %v1775 = vmul.f32 %v1774, %v1773
      %v1776 = vmul.f32 0.5, %v1775
      %v1777 = vsub.f32 1.5, %v1776
      %v1778 = vmul.f32 %v1773, %v1777
      %vm1779 = vweird.f32 %v1771
      %vm1780 = vweird.f32 %v1773
      %vm1781 = vmor %vm1779, %vm1780
      %v1782 = vsel %vm1781, %v1773, %v1778
      %v1783 = vrsqrt.pop %v1772
      %v1784 = vmul.f32 %v1783, %v1772
      %v1785 = vmul.f32 %v1784, %v1783
      %v1786 = vmul.f32 0.5, %v1785
      %v1787 = vsub.f32 1.5, %v1786
      %v1788 = vmul.f32 %v1783, %v1787
      %vm1789 = vweird.f32 %v1772
      %vm1790 = vweird.f32 %v1783
      %vm1791 = vmor %vm1789, %vm1790
      %v1792 = vsel %vm1791, %v1783, %v1788
      %v1793 = vmul.f32 %v1769, %v1782
      %v1794 = vmul.f32 %v1770, %v1792
      %v1795 = vperm.slane %v424, 6
      %v1796 = vmul.f32 %v1793, %v1795
      %v1797 = vmul.f32 %v1794, %v1795
      %v1798 = vperm.slane %v424, 7
      %v1799 = vadd.f32 %v1796, %v1798
      %v1800 = vadd.f32 %v1797, %v1798
      %v1801 = vpack.c.bf16 %v1800, %v1799
      %s1802 = scalar_lea.vmem %s7, 16
      %v1803 = vld [vmem:[%s1802] sm:$0xff]
      %v1804 = vld [vmem:[%s1802 + $0x8] sm:$0xff]
      %s1805 = scalar_lea.vmem %s3, 96
      %v1806 = vld [vmem:[%s1805] sm:$0xf]
      %v1807 = vld [vmem:[%s1805 + $0x4] sm:$0xf]
      %v1808 = vld [vmem:[%s1805 + $0x8] sm:$0xf]
      %v1809 = vld [vmem:[%s1805 + $0xc] sm:$0xf]
      %v1810 = vld [vmem:[%s1805 + $0x10] sm:$0xf]
      %v1811 = vld [vmem:[%s1805 + $0x14] sm:$0xf]
      %v1812 = vld [vmem:[%s1805 + $0x18] sm:$0xf]
      %v1813 = vld [vmem:[%s1805 + $0x1c] sm:$0xf]
      %v1814 = vperm.slane %v1803, 0
      %v1823 = vunpack.c.l.b16 %v1806
      %v1824 = vunpack.c.l.b16 %v1807
      %v1825 = vunpack.c.l.b16 %v1808
      %v1826 = vunpack.c.l.b16 %v1809
      %v1827 = vunpack.c.l.b16 %v1810
      %v1828 = vunpack.c.l.b16 %v1811
      %v1829 = vunpack.c.l.b16 %v1812
      %v1830 = vunpack.c.l.b16 %v1813
      %v1831 = vpack.c.b16 %v1824, %v1823
      %v1832 = vpack.c.b16 %v1826, %v1825
      %v1833 = vpack.c.b16 %v1828, %v1827
      %v1834 = vpack.c.b16 %v1830, %v1829
      %v1840 = vsel %vm459, %v1801, 0
      %1842 = vmatpush.bf16.msra.mxu0 0
      %1843 = vmatpush.bf16.msra.mxu0 0
      %1844 = vmatpush.bf16.msra.mxu0 0
      %1845 = vmatpush.bf16.msra.mxu0 0
      %1846 = vmatpush.bf16.msra.mxu0 %v1834
      %1847 = vmatpush.bf16.msra.mxu0 %v1833
      %1848 = vmatpush.bf16.msra.mxu0 %v1832
      %1849 = vmatpush.bf16.msra.mxu0 %v1831
      %1850 = vmatmul.bf16.gmra.mxu0 %v1840
      %v1851 = vpop.f32.mrf.mxu0
      %v1852 = vadd.f32 %v1814, %v1851
      %v1853 = vpop.f32.mrf.mxu0
      %v1854 = vadd.f32 %v1814, %v1853
      %1855 = vdwg.mxu0
      %s1856 = scalar_lea.vmem %s3, 128
      %v1857 = vld [vmem:[%s1856] sm:$0xf]
      %v1858 = vld [vmem:[%s1856 + $0x4] sm:$0xf]
      %v1859 = vld [vmem:[%s1856 + $0x8] sm:$0xf]
      %v1860 = vld [vmem:[%s1856 + $0xc] sm:$0xf]
      %v1861 = vld [vmem:[%s1856 + $0x10] sm:$0xf]
      %v1862 = vld [vmem:[%s1856 + $0x14] sm:$0xf]
      %v1863 = vld [vmem:[%s1856 + $0x18] sm:$0xf]
      %v1864 = vld [vmem:[%s1856 + $0x1c] sm:$0xf]
      %v1873 = vunpack.c.l.b16 %v1857
      %v1874 = vunpack.c.l.b16 %v1858
      %v1875 = vunpack.c.l.b16 %v1859
      %v1876 = vunpack.c.l.b16 %v1860
      %v1877 = vunpack.c.l.b16 %v1861
      %v1878 = vunpack.c.l.b16 %v1862
      %v1879 = vunpack.c.l.b16 %v1863
      %v1880 = vunpack.c.l.b16 %v1864
      %v1881 = vpack.c.b16 %v1874, %v1873
      %v1882 = vpack.c.b16 %v1876, %v1875
      %v1883 = vpack.c.b16 %v1878, %v1877
      %v1884 = vpack.c.b16 %v1880, %v1879
      %1890 = vrot.lane.b32.xlu0 %v1814, 64
      %v1891 = vpop.permute.xlu0 %1890
      %1893 = vmatpush.bf16.msra.mxu0 0
      %1894 = vmatpush.bf16.msra.mxu0 0
      %1895 = vmatpush.bf16.msra.mxu0 0
      %1896 = vmatpush.bf16.msra.mxu0 0
      %1897 = vmatpush.bf16.msra.mxu0 %v1884
      %1898 = vmatpush.bf16.msra.mxu0 %v1883
      %1899 = vmatpush.bf16.msra.mxu0 %v1882
      %1900 = vmatpush.bf16.msra.mxu0 %v1881
      %1901 = vmatmul.bf16.gmra.mxu0 %v1840
      %v1902 = vpop.f32.mrf.mxu0
      %v1903 = vadd.f32 %v1891, %v1902
      %v1904 = vpop.f32.mrf.mxu0
      %v1905 = vadd.f32 %v1891, %v1904
      %1906 = vdwg.mxu0
      %s1907 = scalar_lea.vmem %s3, 160
      %v1908 = vld [vmem:[%s1907] sm:$0xf]
      %v1909 = vld [vmem:[%s1907 + $0x4] sm:$0xf]
      %v1910 = vld [vmem:[%s1907 + $0x8] sm:$0xf]
      %v1911 = vld [vmem:[%s1907 + $0xc] sm:$0xf]
      %v1912 = vld [vmem:[%s1907 + $0x10] sm:$0xf]
      %v1913 = vld [vmem:[%s1907 + $0x14] sm:$0xf]
      %v1914 = vld [vmem:[%s1907 + $0x18] sm:$0xf]
      %v1915 = vld [vmem:[%s1907 + $0x1c] sm:$0xf]
      %v1916 = vperm.slane %v1804, 0
      %v1925 = vunpack.c.l.b16 %v1908
      %v1926 = vunpack.c.l.b16 %v1909
      %v1927 = vunpack.c.l.b16 %v1910
      %v1928 = vunpack.c.l.b16 %v1911
      %v1929 = vunpack.c.l.b16 %v1912
      %v1930 = vunpack.c.l.b16 %v1913
      %v1931 = vunpack.c.l.b16 %v1914
      %v1932 = vunpack.c.l.b16 %v1915
      %v1933 = vpack.c.b16 %v1926, %v1925
      %v1934 = vpack.c.b16 %v1928, %v1927
      %v1935 = vpack.c.b16 %v1930, %v1929
      %v1936 = vpack.c.b16 %v1932, %v1931
      %1941 = vmatpush.bf16.msra.mxu0 0
      %1942 = vmatpush.bf16.msra.mxu0 0
      %1943 = vmatpush.bf16.msra.mxu0 0
      %1944 = vmatpush.bf16.msra.mxu0 0
      %1945 = vmatpush.bf16.msra.mxu0 %v1936
      %1946 = vmatpush.bf16.msra.mxu0 %v1935
      %1947 = vmatpush.bf16.msra.mxu0 %v1934
      %1948 = vmatpush.bf16.msra.mxu0 %v1933
      %1949 = vmatmul.bf16.gmra.mxu0 %v1840
      %v1950 = vpop.f32.mrf.mxu0
      %v1951 = vadd.f32 %v1916, %v1950
      %v1952 = vpop.f32.mrf.mxu0
      %v1953 = vadd.f32 %v1916, %v1952
      %1954 = vdwg.mxu0
      %v1955 = vpack.c.bf16 %v1852, %v1852
      %v1956 = vpack.c.bf16 %v1854, %v1854
      %1959 = vrot.lane.b32.xlu0 %v1955, 120
      %v1960 = vpop.permute.xlu0 %1959
      %1961 = vrot.lane.b32.xlu0 %v1956, 120
      %v1962 = vpop.permute.xlu0 %1961
      %1963 = vrot.lane.b32.xlu0 %v1955, 112
      %v1964 = vpop.permute.xlu0 %1963
      %1965 = vrot.lane.b32.xlu0 %v1956, 112
      %v1966 = vpop.permute.xlu0 %1965
      %1967 = vrot.lane.b32.xlu0 %v1955, 104
      %v1968 = vpop.permute.xlu0 %1967
      %1969 = vrot.lane.b32.xlu0 %v1956, 104
      %v1970 = vpop.permute.xlu0 %1969
      %1971 = vrot.lane.b32.xlu0 %v1955, 96
      %v1972 = vpop.permute.xlu0 %1971
      %1973 = vrot.lane.b32.xlu0 %v1956, 96
      %v1974 = vpop.permute.xlu0 %1973
      %1975 = vrot.lane.b32.xlu0 %v1955, 88
      %v1976 = vpop.permute.xlu0 %1975
      %1977 = vrot.lane.b32.xlu0 %v1956, 88
      %v1978 = vpop.permute.xlu0 %1977
      %1979 = vrot.lane.b32.xlu0 %v1955, 80
      %v1980 = vpop.permute.xlu0 %1979
      %1981 = vrot.lane.b32.xlu0 %v1956, 80
      %v1982 = vpop.permute.xlu0 %1981
      %1983 = vrot.lane.b32.xlu0 %v1955, 72
      %v1984 = vpop.permute.xlu0 %1983
      %1985 = vrot.lane.b32.xlu0 %v1956, 72
      %v1986 = vpop.permute.xlu0 %1985
      %v1987 = vpack.c.bf16 %v1903, %v1903
      %v1988 = vpack.c.bf16 %v1905, %v1905
      %1991 = vrot.lane.b32.xlu0 %v1987, 120
      %v1992 = vpop.permute.xlu0 %1991
      %1993 = vrot.lane.b32.xlu0 %v1988, 120
      %v1994 = vpop.permute.xlu0 %1993
      %1995 = vrot.lane.b32.xlu0 %v1987, 112
      %v1996 = vpop.permute.xlu0 %1995
      %1997 = vrot.lane.b32.xlu0 %v1988, 112
      %v1998 = vpop.permute.xlu0 %1997
      %1999 = vrot.lane.b32.xlu0 %v1987, 104
      %v2000 = vpop.permute.xlu0 %1999
      %2001 = vrot.lane.b32.xlu0 %v1988, 104
      %v2002 = vpop.permute.xlu0 %2001
      %2003 = vrot.lane.b32.xlu0 %v1987, 96
      %v2004 = vpop.permute.xlu0 %2003
      %2005 = vrot.lane.b32.xlu0 %v1988, 96
      %v2006 = vpop.permute.xlu0 %2005
      %2007 = vrot.lane.b32.xlu0 %v1987, 88
      %v2008 = vpop.permute.xlu0 %2007
      %2009 = vrot.lane.b32.xlu0 %v1988, 88
      %v2010 = vpop.permute.xlu0 %2009
      %2011 = vrot.lane.b32.xlu0 %v1987, 80
      %v2012 = vpop.permute.xlu0 %2011
      %2013 = vrot.lane.b32.xlu0 %v1988, 80
      %v2014 = vpop.permute.xlu0 %2013
      %2015 = vrot.lane.b32.xlu0 %v1987, 72
      %v2016 = vpop.permute.xlu0 %2015
      %2017 = vrot.lane.b32.xlu0 %v1988, 72
      %v2018 = vpop.permute.xlu0 %2017
      %v2019 = vpack.c.bf16 %v1951, %v1951
      %v2020 = vpack.c.bf16 %v1953, %v1953
      %2023 = vrot.lane.b32.xlu0 %v2019, 120
      %v2024 = vpop.permute.xlu0 %2023
      %2025 = vrot.lane.b32.xlu0 %v2020, 120
      %v2026 = vpop.permute.xlu0 %2025
      %2027 = vrot.lane.b32.xlu0 %v2019, 112
      %v2028 = vpop.permute.xlu0 %2027
      %2029 = vrot.lane.b32.xlu0 %v2020, 112
      %v2030 = vpop.permute.xlu0 %2029
      %2031 = vrot.lane.b32.xlu0 %v2019, 104
      %v2032 = vpop.permute.xlu0 %2031
      %2033 = vrot.lane.b32.xlu0 %v2020, 104
      %v2034 = vpop.permute.xlu0 %2033
      %2035 = vrot.lane.b32.xlu0 %v2019, 96
      %v2036 = vpop.permute.xlu0 %2035
      %2037 = vrot.lane.b32.xlu0 %v2020, 96
      %v2038 = vpop.permute.xlu0 %2037
      %2039 = vrot.lane.b32.xlu0 %v2019, 88
      %v2040 = vpop.permute.xlu0 %2039
      %2041 = vrot.lane.b32.xlu0 %v2020, 88
      %v2042 = vpop.permute.xlu0 %2041
      %2043 = vrot.lane.b32.xlu0 %v2019, 80
      %v2044 = vpop.permute.xlu0 %2043
      %2045 = vrot.lane.b32.xlu0 %v2020, 80
      %v2046 = vpop.permute.xlu0 %2045
      %2047 = vrot.lane.b32.xlu0 %v2019, 72
      %v2048 = vpop.permute.xlu0 %2047
      %2049 = vrot.lane.b32.xlu0 %v2020, 72
      %v2050 = vpop.permute.xlu0 %2049
      %v2051 = vunpack.c.l.b16 %v1955
      %v2052 = vunpack.c.l.b16 %v1956
      %v2053 = vpack.c.b16 %v2052, %v2051
      %v2054 = vunpack.c.l.b16 %v1987
      %v2055 = vunpack.c.l.b16 %v1988
      %v2056 = vpack.c.b16 %v2055, %v2054
      %v2058 = vsel %vm365, %v2053, 0
      %v2061 = vsel %vm365, %v2056, 0
      %2063 = vmatpush.bf16.xpose.msra.mxu0 0
      %2064 = vmatpush.bf16.xpose.msra.mxu0 0
      %2065 = vmatpush.bf16.xpose.msra.mxu0 0
      %2066 = vmatpush.bf16.xpose.msra.mxu0 0
      %2067 = vmatpush.bf16.xpose.msra.mxu0 0
      %2068 = vmatpush.bf16.xpose.msra.mxu0 0
      %2069 = vmatpush.bf16.xpose.msra.mxu0 0
      %2070 = vmatpush.bf16.xpose.msra.mxu0 %v2061
      %2071 = vmatmul.bf16.gmra.mxu0 %v2058
      %v2072 = vpop.f32.mrf.mxu0
      %v2073 = vadd.f32 %v702, %v2072
      %v2074 = vpop.f32.mrf.mxu0
      %v2075 = vadd.f32 %v702, %v2074
      %2076 = vdwg.mxu0
      %v2077 = vunpack.c.l.b16 %v1960
      %v2078 = vunpack.c.l.b16 %v1962
      %v2079 = vpack.c.b16 %v2078, %v2077
      %v2080 = vunpack.c.l.b16 %v1992
      %v2081 = vunpack.c.l.b16 %v1994
      %v2082 = vpack.c.b16 %v2081, %v2080
      %v2084 = vsel %vm365, %v2079, 0
      %v2087 = vsel %vm365, %v2082, 0
      %2089 = vmatpush.bf16.xpose.msra.mxu0 0
      %2090 = vmatpush.bf16.xpose.msra.mxu0 0
      %2091 = vmatpush.bf16.xpose.msra.mxu0 0
      %2092 = vmatpush.bf16.xpose.msra.mxu0 0
      %2093 = vmatpush.bf16.xpose.msra.mxu0 0
      %2094 = vmatpush.bf16.xpose.msra.mxu0 0
      %2095 = vmatpush.bf16.xpose.msra.mxu0 0
      %2096 = vmatpush.bf16.xpose.msra.mxu0 %v2087
      %2097 = vmatmul.bf16.gmra.mxu0 %v2084
      %v2098 = vpop.f32.mrf.mxu0
      %v2099 = vadd.f32 %v702, %v2098
      %v2100 = vpop.f32.mrf.mxu0
      %v2101 = vadd.f32 %v702, %v2100
      %2102 = vdwg.mxu0
      %v2103 = vunpack.c.l.b16 %v1964
      %v2104 = vunpack.c.l.b16 %v1966
      %v2105 = vpack.c.b16 %v2104, %v2103
      %v2106 = vunpack.c.l.b16 %v1996
      %v2107 = vunpack.c.l.b16 %v1998
      %v2108 = vpack.c.b16 %v2107, %v2106
      %v2110 = vsel %vm365, %v2105, 0
      %v2113 = vsel %vm365, %v2108, 0
      %2115 = vmatpush.bf16.xpose.msra.mxu0 0
      %2116 = vmatpush.bf16.xpose.msra.mxu0 0
      %2117 = vmatpush.bf16.xpose.msra.mxu0 0
      %2118 = vmatpush.bf16.xpose.msra.mxu0 0
      %2119 = vmatpush.bf16.xpose.msra.mxu0 0
      %2120 = vmatpush.bf16.xpose.msra.mxu0 0
      %2121 = vmatpush.bf16.xpose.msra.mxu0 0
      %2122 = vmatpush.bf16.xpose.msra.mxu0 %v2113
      %2123 = vmatmul.bf16.gmra.mxu0 %v2110
      %v2124 = vpop.f32.mrf.mxu0
      %v2125 = vadd.f32 %v702, %v2124
      %v2126 = vpop.f32.mrf.mxu0
      %v2127 = vadd.f32 %v702, %v2126
      %2128 = vdwg.mxu0
      %v2129 = vunpack.c.l.b16 %v1968
      %v2130 = vunpack.c.l.b16 %v1970
      %v2131 = vpack.c.b16 %v2130, %v2129
      %v2132 = vunpack.c.l.b16 %v2000
      %v2133 = vunpack.c.l.b16 %v2002
      %v2134 = vpack.c.b16 %v2133, %v2132
      %v2136 = vsel %vm365, %v2131, 0
      %v2139 = vsel %vm365, %v2134, 0
      %2141 = vmatpush.bf16.xpose.msra.mxu0 0
      %2142 = vmatpush.bf16.xpose.msra.mxu0 0
      %2143 = vmatpush.bf16.xpose.msra.mxu0 0
      %2144 = vmatpush.bf16.xpose.msra.mxu0 0
      %2145 = vmatpush.bf16.xpose.msra.mxu0 0
      %2146 = vmatpush.bf16.xpose.msra.mxu0 0
      %2147 = vmatpush.bf16.xpose.msra.mxu0 0
      %2148 = vmatpush.bf16.xpose.msra.mxu0 %v2139
      %2149 = vmatmul.bf16.gmra.mxu0 %v2136
      %v2150 = vpop.f32.mrf.mxu0
      %v2151 = vadd.f32 %v702, %v2150
      %v2152 = vpop.f32.mrf.mxu0
      %v2153 = vadd.f32 %v702, %v2152
      %2154 = vdwg.mxu0
      %v2155 = vunpack.c.l.b16 %v1972
      %v2156 = vunpack.c.l.b16 %v1974
      %v2157 = vpack.c.b16 %v2156, %v2155
      %v2158 = vunpack.c.l.b16 %v2004
      %v2159 = vunpack.c.l.b16 %v2006
      %v2160 = vpack.c.b16 %v2159, %v2158
      %v2162 = vsel %vm365, %v2157, 0
      %v2165 = vsel %vm365, %v2160, 0
      %2167 = vmatpush.bf16.xpose.msra.mxu0 0
      %2168 = vmatpush.bf16.xpose.msra.mxu0 0
      %2169 = vmatpush.bf16.xpose.msra.mxu0 0
      %2170 = vmatpush.bf16.xpose.msra.mxu0 0
      %2171 = vmatpush.bf16.xpose.msra.mxu0 0
      %2172 = vmatpush.bf16.xpose.msra.mxu0 0
      %2173 = vmatpush.bf16.xpose.msra.mxu0 0
      %2174 = vmatpush.bf16.xpose.msra.mxu0 %v2165
      %2175 = vmatmul.bf16.gmra.mxu0 %v2162
      %v2176 = vpop.f32.mrf.mxu0
      %v2177 = vadd.f32 %v702, %v2176
      %v2178 = vpop.f32.mrf.mxu0
      %v2179 = vadd.f32 %v702, %v2178
      %2180 = vdwg.mxu0
      %v2181 = vunpack.c.l.b16 %v1976
      %v2182 = vunpack.c.l.b16 %v1978
      %v2183 = vpack.c.b16 %v2182, %v2181
      %v2184 = vunpack.c.l.b16 %v2008
      %v2185 = vunpack.c.l.b16 %v2010
      %v2186 = vpack.c.b16 %v2185, %v2184
      %v2188 = vsel %vm365, %v2183, 0
      %v2191 = vsel %vm365, %v2186, 0
      %2193 = vmatpush.bf16.xpose.msra.mxu0 0
      %2194 = vmatpush.bf16.xpose.msra.mxu0 0
      %2195 = vmatpush.bf16.xpose.msra.mxu0 0
      %2196 = vmatpush.bf16.xpose.msra.mxu0 0
      %2197 = vmatpush.bf16.xpose.msra.mxu0 0
      %2198 = vmatpush.bf16.xpose.msra.mxu0 0
      %2199 = vmatpush.bf16.xpose.msra.mxu0 0
      %2200 = vmatpush.bf16.xpose.msra.mxu0 %v2191
      %2201 = vmatmul.bf16.gmra.mxu0 %v2188
      %v2202 = vpop.f32.mrf.mxu0
      %v2203 = vadd.f32 %v702, %v2202
      %v2204 = vpop.f32.mrf.mxu0
      %v2205 = vadd.f32 %v702, %v2204
      %2206 = vdwg.mxu0
      %v2207 = vunpack.c.l.b16 %v1980
      %v2208 = vunpack.c.l.b16 %v1982
      %v2209 = vpack.c.b16 %v2208, %v2207
      %v2210 = vunpack.c.l.b16 %v2012
      %v2211 = vunpack.c.l.b16 %v2014
      %v2212 = vpack.c.b16 %v2211, %v2210
      %v2214 = vsel %vm365, %v2209, 0
      %v2217 = vsel %vm365, %v2212, 0
      %2219 = vmatpush.bf16.xpose.msra.mxu0 0
      %2220 = vmatpush.bf16.xpose.msra.mxu0 0
      %2221 = vmatpush.bf16.xpose.msra.mxu0 0
      %2222 = vmatpush.bf16.xpose.msra.mxu0 0
      %2223 = vmatpush.bf16.xpose.msra.mxu0 0
      %2224 = vmatpush.bf16.xpose.msra.mxu0 0
      %2225 = vmatpush.bf16.xpose.msra.mxu0 0
      %2226 = vmatpush.bf16.xpose.msra.mxu0 %v2217
      %2227 = vmatmul.bf16.gmra.mxu0 %v2214
      %v2228 = vpop.f32.mrf.mxu0
      %v2229 = vadd.f32 %v702, %v2228
      %v2230 = vpop.f32.mrf.mxu0
      %v2231 = vadd.f32 %v702, %v2230
      %2232 = vdwg.mxu0
      %v2233 = vunpack.c.l.b16 %v1984
      %v2234 = vunpack.c.l.b16 %v1986
      %v2235 = vpack.c.b16 %v2234, %v2233
      %v2236 = vunpack.c.l.b16 %v2016
      %v2237 = vunpack.c.l.b16 %v2018
      %v2238 = vpack.c.b16 %v2237, %v2236
      %v2240 = vsel %vm365, %v2235, 0
      %v2243 = vsel %vm365, %v2238, 0
      %2245 = vmatpush.bf16.xpose.msra.mxu0 0
      %2246 = vmatpush.bf16.xpose.msra.mxu0 0
      %2247 = vmatpush.bf16.xpose.msra.mxu0 0
      %2248 = vmatpush.bf16.xpose.msra.mxu0 0
      %2249 = vmatpush.bf16.xpose.msra.mxu0 0
      %2250 = vmatpush.bf16.xpose.msra.mxu0 0
      %2251 = vmatpush.bf16.xpose.msra.mxu0 0
      %2252 = vmatpush.bf16.xpose.msra.mxu0 %v2243
      %2253 = vmatmul.bf16.gmra.mxu0 %v2240
      %v2254 = vpop.f32.mrf.mxu0
      %v2255 = vadd.f32 %v702, %v2254
      %v2256 = vpop.f32.mrf.mxu0
      %v2257 = vadd.f32 %v702, %v2256
      %2258 = vdwg.mxu0
      %v2259 = vsel %vm906, %v2073, -inf
      %2260 = vmax.xlane.f32.xlu0 %v2259
      %v2261 = vpop.xlane.xlu0 %2260
      %v2262 = vsel %vm906, %v2075, -inf
      %2263 = vmax.xlane.f32.xlu0 %v2262
      %v2264 = vpop.xlane.xlu0 %2263
      %v2265 = vsel %vm906, %v2099, -inf
      %2266 = vmax.xlane.f32.xlu0 %v2265
      %v2267 = vpop.xlane.xlu0 %2266
      %v2268 = vsel %vm906, %v2101, -inf
      %2269 = vmax.xlane.f32.xlu0 %v2268
      %v2270 = vpop.xlane.xlu0 %2269
      %v2271 = vsel %vm906, %v2125, -inf
      %2272 = vmax.xlane.f32.xlu0 %v2271
      %v2273 = vpop.xlane.xlu0 %2272
      %v2274 = vsel %vm906, %v2127, -inf
      %2275 = vmax.xlane.f32.xlu0 %v2274
      %v2276 = vpop.xlane.xlu0 %2275
      %v2277 = vsel %vm906, %v2151, -inf
      %2278 = vmax.xlane.f32.xlu0 %v2277
      %v2279 = vpop.xlane.xlu0 %2278
      %v2280 = vsel %vm906, %v2153, -inf
      %2281 = vmax.xlane.f32.xlu0 %v2280
      %v2282 = vpop.xlane.xlu0 %2281
      %v2283 = vsel %vm906, %v2177, -inf
      %2284 = vmax.xlane.f32.xlu0 %v2283
      %v2285 = vpop.xlane.xlu0 %2284
      %v2286 = vsel %vm906, %v2179, -inf
      %2287 = vmax.xlane.f32.xlu0 %v2286
      %v2288 = vpop.xlane.xlu0 %2287
      %v2289 = vsel %vm906, %v2203, -inf
      %2290 = vmax.xlane.f32.xlu0 %v2289
      %v2291 = vpop.xlane.xlu0 %2290
      %v2292 = vsel %vm906, %v2205, -inf
      %2293 = vmax.xlane.f32.xlu0 %v2292
      %v2294 = vpop.xlane.xlu0 %2293
      %v2295 = vsel %vm906, %v2229, -inf
      %2296 = vmax.xlane.f32.xlu0 %v2295
      %v2297 = vpop.xlane.xlu0 %2296
      %v2298 = vsel %vm906, %v2231, -inf
      %2299 = vmax.xlane.f32.xlu0 %v2298
      %v2300 = vpop.xlane.xlu0 %2299
      %v2301 = vsel %vm906, %v2255, -inf
      %2302 = vmax.xlane.f32.xlu0 %v2301
      %v2303 = vpop.xlane.xlu0 %2302
      %v2304 = vsel %vm906, %v2257, -inf
      %2305 = vmax.xlane.f32.xlu0 %v2304
      %v2306 = vpop.xlane.xlu0 %2305
      %v2307 = vsub.f32 %v2073, %v2261
      %v2308 = vsub.f32 %v2075, %v2264
      %v2309 = vsub.f32 %v2099, %v2267
      %v2310 = vsub.f32 %v2101, %v2270
      %v2311 = vsub.f32 %v2125, %v2273
      %v2312 = vsub.f32 %v2127, %v2276
      %v2313 = vsub.f32 %v2151, %v2279
      %v2314 = vsub.f32 %v2153, %v2282
      %v2315 = vsub.f32 %v2177, %v2285
      %v2316 = vsub.f32 %v2179, %v2288
      %v2317 = vsub.f32 %v2203, %v2291
      %v2318 = vsub.f32 %v2205, %v2294
      %v2319 = vsub.f32 %v2229, %v2297
      %v2320 = vsub.f32 %v2231, %v2300
      %v2321 = vsub.f32 %v2255, %v2303
      %v2322 = vsub.f32 %v2257, %v2306
      %v2323 = vmul.f32 %v2307, 1.442695
      %v2324 = vpow.pop %v2323
      %v2325 = vmul.f32 %v2308, 1.442695
      %v2326 = vpow.pop %v2325
      %v2327 = vmul.f32 %v2309, 1.442695
      %v2328 = vpow.pop %v2327
      %v2329 = vmul.f32 %v2310, 1.442695
      %v2330 = vpow.pop %v2329
      %v2331 = vmul.f32 %v2311, 1.442695
      %v2332 = vpow.pop %v2331
      %v2333 = vmul.f32 %v2312, 1.442695
      %v2334 = vpow.pop %v2333
      %v2335 = vmul.f32 %v2313, 1.442695
      %v2336 = vpow.pop %v2335
      %v2337 = vmul.f32 %v2314, 1.442695
      %v2338 = vpow.pop %v2337
      %v2339 = vmul.f32 %v2315, 1.442695
      %v2340 = vpow.pop %v2339
      %v2341 = vmul.f32 %v2316, 1.442695
      %v2342 = vpow.pop %v2341
      %v2343 = vmul.f32 %v2317, 1.442695
      %v2344 = vpow.pop %v2343
      %v2345 = vmul.f32 %v2318, 1.442695
      %v2346 = vpow.pop %v2345
      %v2347 = vmul.f32 %v2319, 1.442695
      %v2348 = vpow.pop %v2347
      %v2349 = vmul.f32 %v2320, 1.442695
      %v2350 = vpow.pop %v2349
      %v2351 = vmul.f32 %v2321, 1.442695
      %v2352 = vpow.pop %v2351
      %v2353 = vmul.f32 %v2322, 1.442695
      %v2354 = vpow.pop %v2353
      %v2355 = vsel %vm906, %v2324, 0.0
      %2356 = vadd.xlane.f32.xlu0 %v2355
      %v2357 = vpop.xlane.xlu0 %2356
      %v2358 = vsel %vm906, %v2326, 0.0
      %2359 = vadd.xlane.f32.xlu0 %v2358
      %v2360 = vpop.xlane.xlu0 %2359
      %v2361 = vsel %vm906, %v2328, 0.0
      %2362 = vadd.xlane.f32.xlu0 %v2361
      %v2363 = vpop.xlane.xlu0 %2362
      %v2364 = vsel %vm906, %v2330, 0.0
      %2365 = vadd.xlane.f32.xlu0 %v2364
      %v2366 = vpop.xlane.xlu0 %2365
      %v2367 = vsel %vm906, %v2332, 0.0
      %2368 = vadd.xlane.f32.xlu0 %v2367
      %v2369 = vpop.xlane.xlu0 %2368
      %v2370 = vsel %vm906, %v2334, 0.0
      %2371 = vadd.xlane.f32.xlu0 %v2370
      %v2372 = vpop.xlane.xlu0 %2371
      %v2373 = vsel %vm906, %v2336, 0.0
      %2374 = vadd.xlane.f32.xlu0 %v2373
      %v2375 = vpop.xlane.xlu0 %2374
      %v2376 = vsel %vm906, %v2338, 0.0
      %2377 = vadd.xlane.f32.xlu0 %v2376
      %v2378 = vpop.xlane.xlu0 %2377
      %v2379 = vsel %vm906, %v2340, 0.0
      %2380 = vadd.xlane.f32.xlu0 %v2379
      %v2381 = vpop.xlane.xlu0 %2380
      %v2382 = vsel %vm906, %v2342, 0.0
      %2383 = vadd.xlane.f32.xlu0 %v2382
      %v2384 = vpop.xlane.xlu0 %2383
      %v2385 = vsel %vm906, %v2344, 0.0
      %2386 = vadd.xlane.f32.xlu0 %v2385
      %v2387 = vpop.xlane.xlu0 %2386
      %v2388 = vsel %vm906, %v2346, 0.0
      %2389 = vadd.xlane.f32.xlu0 %v2388
      %v2390 = vpop.xlane.xlu0 %2389
      %v2391 = vsel %vm906, %v2348, 0.0
      %2392 = vadd.xlane.f32.xlu0 %v2391
      %v2393 = vpop.xlane.xlu0 %2392
      %v2394 = vsel %vm906, %v2350, 0.0
      %2395 = vadd.xlane.f32.xlu0 %v2394
      %v2396 = vpop.xlane.xlu0 %2395
      %v2397 = vsel %vm906, %v2352, 0.0
      %2398 = vadd.xlane.f32.xlu0 %v2397
      %v2399 = vpop.xlane.xlu0 %2398
      %v2400 = vsel %vm906, %v2354, 0.0
      %2401 = vadd.xlane.f32.xlu0 %v2400
      %v2402 = vpop.xlane.xlu0 %2401
      %v2403 = vrcp.pop %v2357
      %v2404 = vrcp.pop %v2360
      %v2405 = vrcp.pop %v2363
      %v2406 = vrcp.pop %v2366
      %v2407 = vrcp.pop %v2369
      %v2408 = vrcp.pop %v2372
      %v2409 = vrcp.pop %v2375
      %v2410 = vrcp.pop %v2378
      %v2411 = vrcp.pop %v2381
      %v2412 = vrcp.pop %v2384
      %v2413 = vrcp.pop %v2387
      %v2414 = vrcp.pop %v2390
      %v2415 = vrcp.pop %v2393
      %v2416 = vrcp.pop %v2396
      %v2417 = vrcp.pop %v2399
      %v2418 = vrcp.pop %v2402
      %v2419 = vmul.f32 %v2324, %v2403
      %v2420 = vmul.f32 %v2326, %v2404
      %v2421 = vmul.f32 %v2328, %v2405
      %v2422 = vmul.f32 %v2330, %v2406
      %v2423 = vmul.f32 %v2332, %v2407
      %v2424 = vmul.f32 %v2334, %v2408
      %v2425 = vmul.f32 %v2336, %v2409
      %v2426 = vmul.f32 %v2338, %v2410
      %v2427 = vmul.f32 %v2340, %v2411
      %v2428 = vmul.f32 %v2342, %v2412
      %v2429 = vmul.f32 %v2344, %v2413
      %v2430 = vmul.f32 %v2346, %v2414
      %v2431 = vmul.f32 %v2348, %v2415
      %v2432 = vmul.f32 %v2350, %v2416
      %v2433 = vmul.f32 %v2352, %v2417
      %v2434 = vmul.f32 %v2354, %v2418
      %v2435 = vpack.c.bf16 %v2419, %v2419
      %v2436 = vpack.c.bf16 %v2420, %v2420
      %v2437 = vpack.c.bf16 %v2421, %v2421
      %v2438 = vpack.c.bf16 %v2422, %v2422
      %v2439 = vpack.c.bf16 %v2423, %v2423
      %v2440 = vpack.c.bf16 %v2424, %v2424
      %v2441 = vpack.c.bf16 %v2425, %v2425
      %v2442 = vpack.c.bf16 %v2426, %v2426
      %v2443 = vpack.c.bf16 %v2427, %v2427
      %v2444 = vpack.c.bf16 %v2428, %v2428
      %v2445 = vpack.c.bf16 %v2429, %v2429
      %v2446 = vpack.c.bf16 %v2430, %v2430
      %v2447 = vpack.c.bf16 %v2431, %v2431
      %v2448 = vpack.c.bf16 %v2432, %v2432
      %v2449 = vpack.c.bf16 %v2433, %v2433
      %v2450 = vpack.c.bf16 %v2434, %v2434
      %v2453 = vunpack.c.l.b16 %v2435
      %v2454 = vunpack.c.l.b16 %v2436
      %v2455 = vpack.c.b16 %v2454, %v2453
      %v2456 = vunpack.c.l.b16 %v2019
      %v2457 = vunpack.c.l.b16 %v2020
      %v2458 = vpack.c.b16 %v2457, %v2456
      %v2461 = vsel %vm906, %v2455, 0
      %2463 = vmatpush.bf16.msra.mxu0 0
      %2464 = vmatpush.bf16.msra.mxu0 0
      %2465 = vmatpush.bf16.msra.mxu0 0
      %2466 = vmatpush.bf16.msra.mxu0 0
      %2467 = vmatpush.bf16.msra.mxu0 0
      %2468 = vmatpush.bf16.msra.mxu0 0
      %2469 = vmatpush.bf16.msra.mxu0 0
      %2470 = vmatpush.bf16.msra.mxu0 %v2458
      %2471 = vmatmul.bf16.gmra.mxu0 %v2461
      %v2472 = vpop.f32.mrf.mxu0
      %v2473 = vadd.f32 0.0, %v2472
      %v2474 = vpop.f32.mrf.mxu0
      %v2475 = vadd.f32 0.0, %v2474
      %2476 = vdwg.mxu0
      %v2479 = vunpack.c.l.b16 %v2437
      %v2480 = vunpack.c.l.b16 %v2438
      %v2481 = vpack.c.b16 %v2480, %v2479
      %v2482 = vunpack.c.l.b16 %v2024
      %v2483 = vunpack.c.l.b16 %v2026
      %v2484 = vpack.c.b16 %v2483, %v2482
      %v2487 = vsel %vm906, %v2481, 0
      %2489 = vmatpush.bf16.msra.mxu0 0
      %2490 = vmatpush.bf16.msra.mxu0 0
      %2491 = vmatpush.bf16.msra.mxu0 0
      %2492 = vmatpush.bf16.msra.mxu0 0
      %2493 = vmatpush.bf16.msra.mxu0 0
      %2494 = vmatpush.bf16.msra.mxu0 0
      %2495 = vmatpush.bf16.msra.mxu0 0
      %2496 = vmatpush.bf16.msra.mxu0 %v2484
      %2497 = vmatmul.bf16.gmra.mxu0 %v2487
      %v2498 = vpop.f32.mrf.mxu0
      %v2499 = vadd.f32 0.0, %v2498
      %v2500 = vpop.f32.mrf.mxu0
      %v2501 = vadd.f32 0.0, %v2500
      %2502 = vdwg.mxu0
      %v2505 = vunpack.c.l.b16 %v2439
      %v2506 = vunpack.c.l.b16 %v2440
      %v2507 = vpack.c.b16 %v2506, %v2505
      %v2508 = vunpack.c.l.b16 %v2028
      %v2509 = vunpack.c.l.b16 %v2030
      %v2510 = vpack.c.b16 %v2509, %v2508
      %v2513 = vsel %vm906, %v2507, 0
      %2515 = vmatpush.bf16.msra.mxu0 0
      %2516 = vmatpush.bf16.msra.mxu0 0
      %2517 = vmatpush.bf16.msra.mxu0 0
      %2518 = vmatpush.bf16.msra.mxu0 0
      %2519 = vmatpush.bf16.msra.mxu0 0
      %2520 = vmatpush.bf16.msra.mxu0 0
      %2521 = vmatpush.bf16.msra.mxu0 0
      %2522 = vmatpush.bf16.msra.mxu0 %v2510
      %2523 = vmatmul.bf16.gmra.mxu0 %v2513
      %v2524 = vpop.f32.mrf.mxu0
      %v2525 = vadd.f32 0.0, %v2524
      %v2526 = vpop.f32.mrf.mxu0
      %v2527 = vadd.f32 0.0, %v2526
      %2528 = vdwg.mxu0
      %v2531 = vunpack.c.l.b16 %v2441
      %v2532 = vunpack.c.l.b16 %v2442
      %v2533 = vpack.c.b16 %v2532, %v2531
      %v2534 = vunpack.c.l.b16 %v2032
      %v2535 = vunpack.c.l.b16 %v2034
      %v2536 = vpack.c.b16 %v2535, %v2534
      %v2539 = vsel %vm906, %v2533, 0
      %2541 = vmatpush.bf16.msra.mxu0 0
      %2542 = vmatpush.bf16.msra.mxu0 0
      %2543 = vmatpush.bf16.msra.mxu0 0
      %2544 = vmatpush.bf16.msra.mxu0 0
      %2545 = vmatpush.bf16.msra.mxu0 0
      %2546 = vmatpush.bf16.msra.mxu0 0
      %2547 = vmatpush.bf16.msra.mxu0 0
      %2548 = vmatpush.bf16.msra.mxu0 %v2536
      %2549 = vmatmul.bf16.gmra.mxu0 %v2539
      %v2550 = vpop.f32.mrf.mxu0
      %v2551 = vadd.f32 0.0, %v2550
      %v2552 = vpop.f32.mrf.mxu0
      %v2553 = vadd.f32 0.0, %v2552
      %2554 = vdwg.mxu0
      %v2557 = vunpack.c.l.b16 %v2443
      %v2558 = vunpack.c.l.b16 %v2444
      %v2559 = vpack.c.b16 %v2558, %v2557
      %v2560 = vunpack.c.l.b16 %v2036
      %v2561 = vunpack.c.l.b16 %v2038
      %v2562 = vpack.c.b16 %v2561, %v2560
      %v2565 = vsel %vm906, %v2559, 0
      %2567 = vmatpush.bf16.msra.mxu0 0
      %2568 = vmatpush.bf16.msra.mxu0 0
      %2569 = vmatpush.bf16.msra.mxu0 0
      %2570 = vmatpush.bf16.msra.mxu0 0
      %2571 = vmatpush.bf16.msra.mxu0 0
      %2572 = vmatpush.bf16.msra.mxu0 0
      %2573 = vmatpush.bf16.msra.mxu0 0
      %2574 = vmatpush.bf16.msra.mxu0 %v2562
      %2575 = vmatmul.bf16.gmra.mxu0 %v2565
      %v2576 = vpop.f32.mrf.mxu0
      %v2577 = vadd.f32 0.0, %v2576
      %v2578 = vpop.f32.mrf.mxu0
      %v2579 = vadd.f32 0.0, %v2578
      %2580 = vdwg.mxu0
      %v2583 = vunpack.c.l.b16 %v2445
      %v2584 = vunpack.c.l.b16 %v2446
      %v2585 = vpack.c.b16 %v2584, %v2583
      %v2586 = vunpack.c.l.b16 %v2040
      %v2587 = vunpack.c.l.b16 %v2042
      %v2588 = vpack.c.b16 %v2587, %v2586
      %v2591 = vsel %vm906, %v2585, 0
      %2593 = vmatpush.bf16.msra.mxu0 0
      %2594 = vmatpush.bf16.msra.mxu0 0
      %2595 = vmatpush.bf16.msra.mxu0 0
      %2596 = vmatpush.bf16.msra.mxu0 0
      %2597 = vmatpush.bf16.msra.mxu0 0
      %2598 = vmatpush.bf16.msra.mxu0 0
      %2599 = vmatpush.bf16.msra.mxu0 0
      %2600 = vmatpush.bf16.msra.mxu0 %v2588
      %2601 = vmatmul.bf16.gmra.mxu0 %v2591
      %v2602 = vpop.f32.mrf.mxu0
      %v2603 = vadd.f32 0.0, %v2602
      %v2604 = vpop.f32.mrf.mxu0
      %v2605 = vadd.f32 0.0, %v2604
      %2606 = vdwg.mxu0
      %v2609 = vunpack.c.l.b16 %v2447
      %v2610 = vunpack.c.l.b16 %v2448
      %v2611 = vpack.c.b16 %v2610, %v2609
      %v2612 = vunpack.c.l.b16 %v2044
      %v2613 = vunpack.c.l.b16 %v2046
      %v2614 = vpack.c.b16 %v2613, %v2612
      %v2617 = vsel %vm906, %v2611, 0
      %2619 = vmatpush.bf16.msra.mxu0 0
      %2620 = vmatpush.bf16.msra.mxu0 0
      %2621 = vmatpush.bf16.msra.mxu0 0
      %2622 = vmatpush.bf16.msra.mxu0 0
      %2623 = vmatpush.bf16.msra.mxu0 0
      %2624 = vmatpush.bf16.msra.mxu0 0
      %2625 = vmatpush.bf16.msra.mxu0 0
      %2626 = vmatpush.bf16.msra.mxu0 %v2614
      %2627 = vmatmul.bf16.gmra.mxu0 %v2617
      %v2628 = vpop.f32.mrf.mxu0
      %v2629 = vadd.f32 0.0, %v2628
      %v2630 = vpop.f32.mrf.mxu0
      %v2631 = vadd.f32 0.0, %v2630
      %2632 = vdwg.mxu0
      %v2635 = vunpack.c.l.b16 %v2449
      %v2636 = vunpack.c.l.b16 %v2450
      %v2637 = vpack.c.b16 %v2636, %v2635
      %v2638 = vunpack.c.l.b16 %v2048
      %v2639 = vunpack.c.l.b16 %v2050
      %v2640 = vpack.c.b16 %v2639, %v2638
      %v2643 = vsel %vm906, %v2637, 0
      %2645 = vmatpush.bf16.msra.mxu0 0
      %2646 = vmatpush.bf16.msra.mxu0 0
      %2647 = vmatpush.bf16.msra.mxu0 0
      %2648 = vmatpush.bf16.msra.mxu0 0
      %2649 = vmatpush.bf16.msra.mxu0 0
      %2650 = vmatpush.bf16.msra.mxu0 0
      %2651 = vmatpush.bf16.msra.mxu0 0
      %2652 = vmatpush.bf16.msra.mxu0 %v2640
      %2653 = vmatmul.bf16.gmra.mxu0 %v2643
      %v2654 = vpop.f32.mrf.mxu0
      %v2655 = vadd.f32 0.0, %v2654
      %v2656 = vpop.f32.mrf.mxu0
      %v2657 = vadd.f32 0.0, %v2656
      %2658 = vdwg.mxu0
      %2661 = vrot.lane.b32.xlu0 %v2499, 8
      %v2662 = vpop.permute.xlu0 %2661
      %2663 = vrot.lane.b32.xlu0 %v2501, 8
      %v2664 = vpop.permute.xlu0 %2663
      %2669 = vrot.lane.b32.xlu0 %v2525, 16
      %v2670 = vpop.permute.xlu0 %2669
      %2671 = vrot.lane.b32.xlu0 %v2527, 16
      %v2672 = vpop.permute.xlu0 %2671
      %2677 = vrot.lane.b32.xlu0 %v2551, 24
      %v2678 = vpop.permute.xlu0 %2677
      %2679 = vrot.lane.b32.xlu0 %v2553, 24
      %v2680 = vpop.permute.xlu0 %2679
      %2685 = vrot.lane.b32.xlu0 %v2577, 32
      %v2686 = vpop.permute.xlu0 %2685
      %2687 = vrot.lane.b32.xlu0 %v2579, 32
      %v2688 = vpop.permute.xlu0 %2687
      %2693 = vrot.lane.b32.xlu0 %v2603, 40
      %v2694 = vpop.permute.xlu0 %2693
      %2695 = vrot.lane.b32.xlu0 %v2605, 40
      %v2696 = vpop.permute.xlu0 %2695
      %2701 = vrot.lane.b32.xlu0 %v2629, 48
      %v2702 = vpop.permute.xlu0 %2701
      %2703 = vrot.lane.b32.xlu0 %v2631, 48
      %v2704 = vpop.permute.xlu0 %2703
      %2709 = vrot.lane.b32.xlu0 %v2655, 56
      %v2710 = vpop.permute.xlu0 %2709
      %2711 = vrot.lane.b32.xlu0 %v2657, 56
      %v2712 = vpop.permute.xlu0 %2711
      %v2715 = vsel %vm365, %v2473, %v2662
      %v2716 = vsel %vm365, %v2475, %v2664
      %v2717 = vsel %vm906, %v2715, %v2670
      %v2718 = vsel %vm906, %v2716, %v2672
      %v2719 = vsel %vm1367, %v2717, %v2678
      %v2720 = vsel %vm1367, %v2718, %v2680
      %v2721 = vsel %vm1370, %v2719, %v2686
      %v2722 = vsel %vm1370, %v2720, %v2688
      %v2723 = vsel %vm1373, %v2721, %v2694
      %v2724 = vsel %vm1373, %v2722, %v2696
      %v2725 = vsel %vm1376, %v2723, %v2702
      %v2726 = vsel %vm1376, %v2724, %v2704
      %v2727 = vsel %vm1379, %v2725, %v2710
      %v2728 = vsel %vm1379, %v2726, %v2712
      %v2729 = vpack.c.bf16 %v2728, %v2727
      %s2730 = scalar_lea.vmem %s4, 32
      %v2731 = vld [vmem:[%s2730] sm:$0xf]
      %v2732 = vld [vmem:[%s2730 + $0x4] sm:$0xf]
      %v2733 = vld [vmem:[%s2730 + $0x8] sm:$0xf]
      %v2734 = vld [vmem:[%s2730 + $0xc] sm:$0xf]
      %v2735 = vld [vmem:[%s2730 + $0x10] sm:$0xf]
      %v2736 = vld [vmem:[%s2730 + $0x14] sm:$0xf]
      %v2737 = vld [vmem:[%s2730 + $0x18] sm:$0xf]
      %v2738 = vld [vmem:[%s2730 + $0x1c] sm:$0xf]
      %v2739 = vperm.slane %v1803, 1
      %v2748 = vunpack.c.l.b16 %v2731
      %v2749 = vunpack.c.l.b16 %v2732
      %v2750 = vunpack.c.l.b16 %v2733
      %v2751 = vunpack.c.l.b16 %v2734
      %v2752 = vunpack.c.l.b16 %v2735
      %v2753 = vunpack.c.l.b16 %v2736
      %v2754 = vunpack.c.l.b16 %v2737
      %v2755 = vunpack.c.l.b16 %v2738
      %v2756 = vpack.c.b16 %v2749, %v2748
      %v2757 = vpack.c.b16 %v2751, %v2750
      %v2758 = vpack.c.b16 %v2753, %v2752
      %v2759 = vpack.c.b16 %v2755, %v2754
      %v2765 = vsel %vm459, %v2729, 0
      %2767 = vmatpush.bf16.msra.mxu0 0
      %2768 = vmatpush.bf16.msra.mxu0 0
      %2769 = vmatpush.bf16.msra.mxu0 0
      %2770 = vmatpush.bf16.msra.mxu0 0
      %2771 = vmatpush.bf16.msra.mxu0 %v2759
      %2772 = vmatpush.bf16.msra.mxu0 %v2758
      %2773 = vmatpush.bf16.msra.mxu0 %v2757
      %2774 = vmatpush.bf16.msra.mxu0 %v2756
      %2775 = vmatmul.bf16.gmra.mxu0 %v2765
      %v2776 = vpop.f32.mrf.mxu0
      %v2777 = vadd.f32 %v2739, %v2776
      %v2778 = vpop.f32.mrf.mxu0
      %v2779 = vadd.f32 %v2739, %v2778
      %2780 = vdwg.mxu0
      %v2781 = vadd.f32 %v1799, %v2777
      %v2782 = vadd.f32 %v1800, %v2779
      %v2783 = vsel %vm459, %v2781, 0.0
      %2784 = vadd.xlane.f32.xlu0 %v2783
      %v2785 = vpop.xlane.xlu0 %2784
      %v2786 = vsel %vm459, %v2782, 0.0
      %2787 = vadd.xlane.f32.xlu0 %v2786
      %v2788 = vpop.xlane.xlu0 %2787
      %v2789 = vmul.f32 %v2785, %v1447
      %v2790 = vmul.f32 %v2788, %v1447
      %v2791 = vmul.f32 %v2781, %v2781
      %v2792 = vmul.f32 %v2782, %v2782
      %v2793 = vsel %vm459, %v2791, 0.0
      %2794 = vadd.xlane.f32.xlu0 %v2793
      %v2795 = vpop.xlane.xlu0 %2794
      %v2796 = vsel %vm459, %v2792, 0.0
      %2797 = vadd.xlane.f32.xlu0 %v2796
      %v2798 = vpop.xlane.xlu0 %2797
      %v2799 = vmul.f32 %v2795, %v1447
      %v2800 = vmul.f32 %v2798, %v1447
      %v2801 = vmul.f32 %v2789, %v2789
      %v2802 = vmul.f32 %v2790, %v2790
      %v2803 = vsub.f32 %v2799, %v2801
      %v2804 = vsub.f32 %v2800, %v2802
      %v2805 = vmax.f32 %v2803, 0.0
      %v2806 = vmax.f32 %v2804, 0.0
      %v2807 = vsub.f32 %v2781, %v2789
      %v2808 = vsub.f32 %v2782, %v2790
      %v2809 = vadd.f32 %v2805, 1e-05
      %v2810 = vadd.f32 %v2806, 1e-05
      %v2811 = vrsqrt.pop %v2809
      %v2812 = vmul.f32 %v2811, %v2809
      %v2813 = vmul.f32 %v2812, %v2811
      %v2814 = vmul.f32 0.5, %v2813
      %v2815 = vsub.f32 1.5, %v2814
      %v2816 = vmul.f32 %v2811, %v2815
      %vm2817 = vweird.f32 %v2809
      %vm2818 = vweird.f32 %v2811
      %vm2819 = vmor %vm2817, %vm2818
      %v2820 = vsel %vm2819, %v2811, %v2816
      %v2821 = vrsqrt.pop %v2810
      %v2822 = vmul.f32 %v2821, %v2810
      %v2823 = vmul.f32 %v2822, %v2821
      %v2824 = vmul.f32 0.5, %v2823
      %v2825 = vsub.f32 1.5, %v2824
      %v2826 = vmul.f32 %v2821, %v2825
      %vm2827 = vweird.f32 %v2810
      %vm2828 = vweird.f32 %v2821
      %vm2829 = vmor %vm2827, %vm2828
      %v2830 = vsel %vm2829, %v2821, %v2826
      %v2831 = vmul.f32 %v2807, %v2820
      %v2832 = vmul.f32 %v2808, %v2830
      %v2833 = vperm.slane %v1803, 2
      %v2834 = vmul.f32 %v2831, %v2833
      %v2835 = vmul.f32 %v2832, %v2833
      %v2836 = vperm.slane %v1803, 3
      %v2837 = vadd.f32 %v2834, %v2836
      %v2838 = vadd.f32 %v2835, %v2836
      %v2839 = vpack.c.bf16 %v2838, %v2837
      %s2840 = scalar_lea.vmem %s5, 64
      %v2841 = vld [vmem:[%s2840] sm:$0xff]
      %v2842 = vld [vmem:[%s2840 + $0x8] sm:$0xff]
      %v2843 = vld [vmem:[%s2840 + $0x10] sm:$0xff]
      %v2844 = vld [vmem:[%s2840 + $0x18] sm:$0xff]
      %v2845 = vld [vmem:[%s2840 + $0x20] sm:$0xff]
      %v2846 = vld [vmem:[%s2840 + $0x28] sm:$0xff]
      %v2847 = vld [vmem:[%s2840 + $0x30] sm:$0xff]
      %v2848 = vld [vmem:[%s2840 + $0x38] sm:$0xff]
      %v2849 = vperm.slane %v1803, 4
      %v2850 = vperm.slane %v1804, 4
      %v2859 = vunpack.c.l.b16 %v2841
      %v2860 = vunpack.c.h.b16 %v2841
      %v2861 = vunpack.c.l.b16 %v2842
      %v2862 = vunpack.c.h.b16 %v2842
      %v2863 = vunpack.c.l.b16 %v2843
      %v2864 = vunpack.c.h.b16 %v2843
      %v2865 = vunpack.c.l.b16 %v2844
      %v2866 = vunpack.c.h.b16 %v2844
      %v2867 = vunpack.c.l.b16 %v2845
      %v2868 = vunpack.c.h.b16 %v2845
      %v2869 = vunpack.c.l.b16 %v2846
      %v2870 = vunpack.c.h.b16 %v2846
      %v2871 = vunpack.c.l.b16 %v2847
      %v2872 = vunpack.c.h.b16 %v2847
      %v2873 = vunpack.c.l.b16 %v2848
      %v2874 = vunpack.c.h.b16 %v2848
      %v2875 = vpack.c.b16 %v2861, %v2859
      %v2876 = vpack.c.b16 %v2862, %v2860
      %v2877 = vpack.c.b16 %v2865, %v2863
      %v2878 = vpack.c.b16 %v2866, %v2864
      %v2879 = vpack.c.b16 %v2869, %v2867
      %v2880 = vpack.c.b16 %v2870, %v2868
      %v2881 = vpack.c.b16 %v2873, %v2871
      %v2882 = vpack.c.b16 %v2874, %v2872
      %v2892 = vsel %vm459, %v2839, 0
      %2894 = vmatpush.bf16.msra.mxu0 0
      %2895 = vmatpush.bf16.msra.mxu0 0
      %2896 = vmatpush.bf16.msra.mxu0 0
      %2897 = vmatpush.bf16.msra.mxu0 0
      %2898 = vmatpush.bf16.msra.mxu0 %v2881
      %2899 = vmatpush.bf16.msra.mxu0 %v2879
      %2900 = vmatpush.bf16.msra.mxu0 %v2877
      %2901 = vmatpush.bf16.msra.mxu0 %v2875
      %2902 = vmatmul.bf16.gmra.mxu0 %v2892
      %v2903 = vpop.f32.mrf.mxu0
      %v2904 = vadd.f32 %v2849, %v2903
      %v2905 = vpop.f32.mrf.mxu0
      %v2906 = vadd.f32 %v2849, %v2905
      %2907 = vdwg.mxu0
      %2908 = vmatpush.bf16.msra.mxu0 0
      %2909 = vmatpush.bf16.msra.mxu0 0
      %2910 = vmatpush.bf16.msra.mxu0 0
      %2911 = vmatpush.bf16.msra.mxu0 0
      %2912 = vmatpush.bf16.msra.mxu0 %v2882
      %2913 = vmatpush.bf16.msra.mxu0 %v2880
      %2914 = vmatpush.bf16.msra.mxu0 %v2878
      %2915 = vmatpush.bf16.msra.mxu0 %v2876
      %2916 = vmatmul.bf16.gmra.mxu0 %v2892
      %v2917 = vpop.f32.mrf.mxu0
      %v2918 = vadd.f32 %v2850, %v2917
      %v2919 = vpop.f32.mrf.mxu0
      %v2920 = vadd.f32 %v2850, %v2919
      %2921 = vdwg.mxu0
      %v2922 = vmax.f32 %v2904, 0.0
      %v2923 = vmax.f32 %v2918, 0.0
      %v2924 = vmax.f32 %v2906, 0.0
      %v2925 = vmax.f32 %v2920, 0.0
      %v2926 = vpack.c.bf16 %v2924, %v2922
      %v2927 = vpack.c.bf16 %v2925, %v2923
      %s2928 = scalar_lea.vmem %s6, 128
      %v2929 = vld [vmem:[%s2928] sm:$0xf]
      %v2930 = vld [vmem:[%s2928 + $0x4] sm:$0xf]
      %v2931 = vld [vmem:[%s2928 + $0x8] sm:$0xf]
      %v2932 = vld [vmem:[%s2928 + $0xc] sm:$0xf]
      %v2933 = vld [vmem:[%s2928 + $0x10] sm:$0xf]
      %v2934 = vld [vmem:[%s2928 + $0x14] sm:$0xf]
      %v2935 = vld [vmem:[%s2928 + $0x18] sm:$0xf]
      %v2936 = vld [vmem:[%s2928 + $0x1c] sm:$0xf]
      %v2937 = vld [vmem:[%s2928 + $0x20] sm:$0xf]
      %v2938 = vld [vmem:[%s2928 + $0x24] sm:$0xf]
      %v2939 = vld [vmem:[%s2928 + $0x28] sm:$0xf]
      %v2940 = vld [vmem:[%s2928 + $0x2c] sm:$0xf]
      %v2941 = vld [vmem:[%s2928 + $0x30] sm:$0xf]
      %v2942 = vld [vmem:[%s2928 + $0x34] sm:$0xf]
      %v2943 = vld [vmem:[%s2928 + $0x38] sm:$0xf]
      %v2944 = vld [vmem:[%s2928 + $0x3c] sm:$0xf]
      %v2945 = vld [vmem:[%s2928 + $0x40] sm:$0xf]
      %v2946 = vld [vmem:[%s2928 + $0x44] sm:$0xf]
      %v2947 = vld [vmem:[%s2928 + $0x48] sm:$0xf]
      %v2948 = vld [vmem:[%s2928 + $0x4c] sm:$0xf]
      %v2949 = vld [vmem:[%s2928 + $0x50] sm:$0xf]
      %v2950 = vld [vmem:[%s2928 + $0x54] sm:$0xf]
      %v2951 = vld [vmem:[%s2928 + $0x58] sm:$0xf]
      %v2952 = vld [vmem:[%s2928 + $0x5c] sm:$0xf]
      %v2953 = vld [vmem:[%s2928 + $0x60] sm:$0xf]
      %v2954 = vld [vmem:[%s2928 + $0x64] sm:$0xf]
      %v2955 = vld [vmem:[%s2928 + $0x68] sm:$0xf]
      %v2956 = vld [vmem:[%s2928 + $0x6c] sm:$0xf]
      %v2957 = vld [vmem:[%s2928 + $0x70] sm:$0xf]
      %v2958 = vld [vmem:[%s2928 + $0x74] sm:$0xf]
      %v2959 = vld [vmem:[%s2928 + $0x78] sm:$0xf]
      %v2960 = vld [vmem:[%s2928 + $0x7c] sm:$0xf]
      %v2961 = vperm.slane %v1803, 5
      %v2994 = vunpack.c.l.b16 %v2929
      %v2995 = vunpack.c.l.b16 %v2930
      %v2996 = vunpack.c.l.b16 %v2931
      %v2997 = vunpack.c.l.b16 %v2932
      %v2998 = vunpack.c.l.b16 %v2933
      %v2999 = vunpack.c.l.b16 %v2934
      %v3000 = vunpack.c.l.b16 %v2935
      %v3001 = vunpack.c.l.b16 %v2936
      %v3002 = vunpack.c.l.b16 %v2937
      %v3003 = vunpack.c.l.b16 %v2938
      %v3004 = vunpack.c.l.b16 %v2939
      %v3005 = vunpack.c.l.b16 %v2940
      %v3006 = vunpack.c.l.b16 %v2941
      %v3007 = vunpack.c.l.b16 %v2942
      %v3008 = vunpack.c.l.b16 %v2943
      %v3009 = vunpack.c.l.b16 %v2944
      %v3010 = vunpack.c.l.b16 %v2945
      %v3011 = vunpack.c.l.b16 %v2946
      %v3012 = vunpack.c.l.b16 %v2947
      %v3013 = vunpack.c.l.b16 %v2948
      %v3014 = vunpack.c.l.b16 %v2949
      %v3015 = vunpack.c.l.b16 %v2950
      %v3016 = vunpack.c.l.b16 %v2951
      %v3017 = vunpack.c.l.b16 %v2952
      %v3018 = vunpack.c.l.b16 %v2953
      %v3019 = vunpack.c.l.b16 %v2954
      %v3020 = vunpack.c.l.b16 %v2955
      %v3021 = vunpack.c.l.b16 %v2956
      %v3022 = vunpack.c.l.b16 %v2957
      %v3023 = vunpack.c.l.b16 %v2958
      %v3024 = vunpack.c.l.b16 %v2959
      %v3025 = vunpack.c.l.b16 %v2960
      %v3026 = vpack.c.b16 %v2995, %v2994
      %v3027 = vpack.c.b16 %v2997, %v2996
      %v3028 = vpack.c.b16 %v2999, %v2998
      %v3029 = vpack.c.b16 %v3001, %v3000
      %v3030 = vpack.c.b16 %v3003, %v3002
      %v3031 = vpack.c.b16 %v3005, %v3004
      %v3032 = vpack.c.b16 %v3007, %v3006
      %v3033 = vpack.c.b16 %v3009, %v3008
      %v3034 = vpack.c.b16 %v3011, %v3010
      %v3035 = vpack.c.b16 %v3013, %v3012
      %v3036 = vpack.c.b16 %v3015, %v3014
      %v3037 = vpack.c.b16 %v3017, %v3016
      %v3038 = vpack.c.b16 %v3019, %v3018
      %v3039 = vpack.c.b16 %v3021, %v3020
      %v3040 = vpack.c.b16 %v3023, %v3022
      %v3041 = vpack.c.b16 %v3025, %v3024
      %3058 = vmatpush.bf16.msra.mxu0 %v3033
      %3059 = vmatpush.bf16.msra.mxu0 %v3032
      %3060 = vmatpush.bf16.msra.mxu0 %v3031
      %3061 = vmatpush.bf16.msra.mxu0 %v3030
      %3062 = vmatpush.bf16.msra.mxu0 %v3029
      %3063 = vmatpush.bf16.msra.mxu0 %v3028
      %3064 = vmatpush.bf16.msra.mxu0 %v3027
      %3065 = vmatpush.bf16.msra.mxu0 %v3026
      %3066 = vmatmul.bf16.gmra.mxu0 %v2926
      %v3067 = vpop.f32.mrf.mxu0
      %v3068 = vadd.f32 %v2961, %v3067
      %v3069 = vpop.f32.mrf.mxu0
      %v3070 = vadd.f32 %v2961, %v3069
      %3071 = vdwg.mxu0
      %3072 = vmatpush.bf16.msra.mxu0 %v3041
      %3073 = vmatpush.bf16.msra.mxu0 %v3040
      %3074 = vmatpush.bf16.msra.mxu0 %v3039
      %3075 = vmatpush.bf16.msra.mxu0 %v3038
      %3076 = vmatpush.bf16.msra.mxu0 %v3037
      %3077 = vmatpush.bf16.msra.mxu0 %v3036
      %3078 = vmatpush.bf16.msra.mxu0 %v3035
      %3079 = vmatpush.bf16.msra.mxu0 %v3034
      %3080 = vmatmul.bf16.gmra.mxu0 %v2927
      %v3081 = vpop.f32.mrf.mxu0
      %v3082 = vadd.f32 %v3068, %v3081
      %v3083 = vpop.f32.mrf.mxu0
      %v3084 = vadd.f32 %v3070, %v3083
      %3085 = vdwg.mxu0
      %v3086 = vadd.f32 %v2837, %v3082
      %v3087 = vadd.f32 %v2838, %v3084
      %v3088 = vsel %vm459, %v3086, 0.0
      %3089 = vadd.xlane.f32.xlu0 %v3088
      %v3090 = vpop.xlane.xlu0 %3089
      %v3091 = vsel %vm459, %v3087, 0.0
      %3092 = vadd.xlane.f32.xlu0 %v3091
      %v3093 = vpop.xlane.xlu0 %3092
      %v3094 = vmul.f32 %v3090, %v1447
      %v3095 = vmul.f32 %v3093, %v1447
      %v3096 = vmul.f32 %v3086, %v3086
      %v3097 = vmul.f32 %v3087, %v3087
      %v3098 = vsel %vm459, %v3096, 0.0
      %3099 = vadd.xlane.f32.xlu0 %v3098
      %v3100 = vpop.xlane.xlu0 %3099
      %v3101 = vsel %vm459, %v3097, 0.0
      %3102 = vadd.xlane.f32.xlu0 %v3101
      %v3103 = vpop.xlane.xlu0 %3102
      %v3104 = vmul.f32 %v3100, %v1447
      %v3105 = vmul.f32 %v3103, %v1447
      %v3106 = vmul.f32 %v3094, %v3094
      %v3107 = vmul.f32 %v3095, %v3095
      %v3108 = vsub.f32 %v3104, %v3106
      %v3109 = vsub.f32 %v3105, %v3107
      %v3110 = vmax.f32 %v3108, 0.0
      %v3111 = vmax.f32 %v3109, 0.0
      %v3112 = vsub.f32 %v3086, %v3094
      %v3113 = vsub.f32 %v3087, %v3095
      %v3114 = vadd.f32 %v3110, 1e-05
      %v3115 = vadd.f32 %v3111, 1e-05
      %v3116 = vrsqrt.pop %v3114
      %v3117 = vmul.f32 %v3116, %v3114
      %v3118 = vmul.f32 %v3117, %v3116
      %v3119 = vmul.f32 0.5, %v3118
      %v3120 = vsub.f32 1.5, %v3119
      %v3121 = vmul.f32 %v3116, %v3120
      %vm3122 = vweird.f32 %v3114
      %vm3123 = vweird.f32 %v3116
      %vm3124 = vmor %vm3122, %vm3123
      %v3125 = vsel %vm3124, %v3116, %v3121
      %v3126 = vrsqrt.pop %v3115
      %v3127 = vmul.f32 %v3126, %v3115
      %v3128 = vmul.f32 %v3127, %v3126
      %v3129 = vmul.f32 0.5, %v3128
      %v3130 = vsub.f32 1.5, %v3129
      %v3131 = vmul.f32 %v3126, %v3130
      %vm3132 = vweird.f32 %v3115
      %vm3133 = vweird.f32 %v3126
      %vm3134 = vmor %vm3132, %vm3133
      %v3135 = vsel %vm3134, %v3126, %v3131
      %v3136 = vmul.f32 %v3112, %v3125
      %v3137 = vmul.f32 %v3113, %v3135
      %v3138 = vperm.slane %v1803, 6
      %v3139 = vmul.f32 %v3136, %v3138
      %v3140 = vmul.f32 %v3137, %v3138
      %v3141 = vperm.slane %v1803, 7
      %v3142 = vadd.f32 %v3139, %v3141
      %v3143 = vadd.f32 %v3140, %v3141
      %v3144 = vpack.c.bf16 %v3143, %v3142
      %v3145 = vld [vmem:[%s8] sm:$0xf]
      %v3146 = vld [vmem:[%s8 + $0x4] sm:$0xf]
      %v3147 = vld [vmem:[%s8 + $0x8] sm:$0xf]
      %v3148 = vld [vmem:[%s8 + $0xc] sm:$0xf]
      %v3149 = vld [vmem:[%s8 + $0x10] sm:$0xf]
      %v3150 = vld [vmem:[%s8 + $0x14] sm:$0xf]
      %v3151 = vld [vmem:[%s8 + $0x18] sm:$0xf]
      %v3152 = vld [vmem:[%s8 + $0x1c] sm:$0xf]
      %v3153 = vld [vmem:[%s9] sm:$0x1]
      %v3155 = vperm.slane %v3153, 0
      %v3165 = vunpack.c.l.b16 %v3145
      %v3166 = vunpack.c.l.b16 %v3146
      %v3167 = vunpack.c.l.b16 %v3147
      %v3168 = vunpack.c.l.b16 %v3148
      %v3169 = vunpack.c.l.b16 %v3149
      %v3170 = vunpack.c.l.b16 %v3150
      %v3171 = vunpack.c.l.b16 %v3151
      %v3172 = vunpack.c.l.b16 %v3152
      %v3173 = vpack.c.b16 %v3166, %v3165
      %v3174 = vpack.c.b16 %v3168, %v3167
      %v3175 = vpack.c.b16 %v3170, %v3169
      %v3176 = vpack.c.b16 %v3172, %v3171
      %v3182 = vsel %vm459, %v3144, 0
      %3184 = vmatpush.bf16.msra.mxu0 0
      %3185 = vmatpush.bf16.msra.mxu0 0
      %3186 = vmatpush.bf16.msra.mxu0 0
      %3187 = vmatpush.bf16.msra.mxu0 0
      %3188 = vmatpush.bf16.msra.mxu0 %v3176
      %3189 = vmatpush.bf16.msra.mxu0 %v3175
      %3190 = vmatpush.bf16.msra.mxu0 %v3174
      %3191 = vmatpush.bf16.msra.mxu0 %v3173
      %3192 = vmatmul.bf16.gmra.mxu0 %v3182
      %v3193 = vpop.f32.mrf.mxu0
      %v3194 = vadd.f32 %v3155, %v3193
      %v3195 = vpop.f32.mrf.mxu0
      %v3196 = vadd.f32 %v3155, %v3195
      %3197 = vdwg.mxu0
      %3198 = vst.msk [vmem:[%s359] sm:$0xff] %vm365, %v3194
      %3199 = vst.msk [vmem:[%s359 + $0x8] sm:$0xff] %vm365, %v3196
      %p3200 = scmp.lt.s32.totalorder %s21, 1
      %s3201 = scalar_select %p3200, %s21, 1
      %s3202 = smul.addr %s3201, 2
      %s3203 = smul.addr %s3202, 8
      %s3204 = scalar_lea.vmem %s10, %s3203
      // Predicated region
      $region61: #{tpu_custom_call.1} parent=59 // pred_check
        %p3205 = pneg %p254
      $region62: #{tpu_custom_call.1} parent=59 // pred_check_branch
        %3207 = sbr.rel (%p3205) target = $region64
      $region63: #{tpu_custom_call.1} parent=59 // pred_region
        _
      $region64: #{tpu_custom_call.1} parent=59 // pred_fallthru
        _
    $region60: #{tpu_custom_call.1} parent=5 // pred_fallthru
      _
    %p3208 = scmp.le.s32.totalorder 2, %s16
    // Predicated region
    $region65: #{tpu_custom_call.1} parent=5 // pred_check
      %p3209 = pneg %p3208
    $region66: #{tpu_custom_call.1} parent=5 // pred_check_branch
      %3211 = sbr.rel (%p3209) target = $region68
    $region67: #{tpu_custom_call.1} parent=5 // pred_region
      %s3212 = ssub.s32 %s16, 2
      // Predicated region
      $region69: #{tpu_custom_call.1} parent=67 // pred_check
        %p3213 = pneg %p260
      $region70: #{tpu_custom_call.1} parent=67 // pred_check_branch
        %3215 = sbr.rel (%p3213) target = $region72
      $region71: #{tpu_custom_call.1} parent=67 // pred_region
        %p3216 = scmp.lt.s32.totalorder %s22, 1
        %s3217 = scalar_select %p3216, %s22, 1
        %s3218 = smul.addr %s3217, 2
        %s3219 = smul.addr %s3218, 8
        %s3220 = scalar_lea.vmem %s10, %s3219
      $region72: #{tpu_custom_call.1} parent=67 // pred_fallthru
        _
    $region68: #{tpu_custom_call.1} parent=5 // pred_fallthru
      _
  $region6: #{tpu_custom_call.1} parent=0 // loop_footer
    %s20 = sadd.s32 1, %s16
  $region7: #{tpu_custom_call.1} parent=0 // loop_footer_branch
    %15 = sbr.rel target = $region3
  $region8: #{tpu_custom_call.1} parent=0 // loop_exit
    _

</llo_original>
